<compile_context>
chip_gen: v5e
topology: v5e:2x2
jax: 0.10.0
libtpu: 0.0.40
codegen_flags: <defaults>
</compile_context>

<pallas_src>
import jax
import jax.numpy as jnp
from jax.experimental import pallas as pl
from jax.experimental.pallas import tpu as pltpu

V = 24            # graph nodes (adj parameter is 24x24)
HID = 64          # hidden channels
CIN = 3           # input channels
NUM_CLASSES = 7
EPS = 1e-5


# ----------------------------------------------------------------------------
# Tiling choice
# ----------------------------------------------------------------------------
def _choose_tiling(B, T):
    """Pick (batch tile TB, padded batch, graph-mix group size G)."""
    cap = max(1, 128 // T)                     # keep tb*T (slices per step) <= ~128
    tb = max(1, min(B, cap))
    if B > 1 and tb >= B:                      # guarantee >= 2 grid steps (v7x: 2 TCs)
        tb = max(1, (B + 1) // 2)
    nb = -(-B // tb)
    tb = -(-B // nb)                           # balance tiles to minimize padding
    b_pad = nb * tb
    nslices = tb * T
    g = 1
    for cand in (4, 2):                        # G*V = 96 / 48 <= 128 -> 1 MXU K-pass
        if nslices % cand == 0:
            g = cand
            break
    return tb, b_pad, g


def _const_index_map(rank):
    zeros = (0,) * rank
    return lambda i: zeros


# ----------------------------------------------------------------------------
# Fused kernel: 6 STGCN layers + OneDCNN head, one grid step per TB batches.
# ----------------------------------------------------------------------------
def _make_kernel(tb, T, G):
    R = tb * T * V          # rows of the channels-last activation ((b,t)-major, v-minor)
    GV = G * V
    n_groups = (tb * T) // G

    def kernel(x_ref,
               w0cat_ref, b0cat_ref, a0t_ref, sc0_ref, sh0_ref, wt0_ref, bt0_ref,
               aRt_ref, wsR_ref, scR_ref, shR_ref, wtR_ref, btR_ref,
               wcv_ref, hsc_ref, hsh_ref, wfc_ref, bfc_ref,
               o_ref):
        f32 = jnp.float32
        bf16 = jnp.bfloat16

        def dot(a, b):
            # bf16 MXU operands, f32 accumulation.
            return jnp.dot(a.astype(bf16), b, preferred_element_type=f32)

        def graph_mix(z, ablk_t):
            # ablk_t = (I_G kron softmax(adj))^T.  Each (GV, GV) @ (GV, HID)
            # matmul mixes the 24 nodes of G consecutive (b,t)-slices
            # independently; results are concatenated as values (no VMEM
            # scratch round-trip).
            parts = []
            for g in range(n_groups):
                zg = z[g * GV:(g + 1) * GV, :].astype(bf16)
                parts.append(jnp.dot(ablk_t, zg, preferred_element_type=f32))
            return parts[0] if n_groups == 1 else jnp.concatenate(parts, axis=0)

        x0 = x_ref[...]                                       # (R, 3) f32

        # ---- layer 0: fused [spatial | residual] 1x1 conv (K=3, N=128) ----
        y0 = dot(x0, w0cat_ref[...]) + b0cat_ref[...]         # (R, 128)
        z = y0[:, :HID]                                       # spatial path (pre-mix)
        res = y0[:, HID:]                                     # residual 1x1-conv path
        z = graph_mix(z, a0t_ref[...])
        h = jnp.maximum(z * sc0_ref[...] + sh0_ref[...], 0.0)  # folded BN (+bias) + ReLU
        x = dot(h, wt0_ref[...]) + bt0_ref[...] + res          # temporal conv (k=1) + residual

        # ---- layers 1..5 (identity residual; mix commuted after Ws) ----
        for l in range(5):
            z = graph_mix(dot(x, wsR_ref[l]), aRt_ref[l])
            h = jnp.maximum(z * scR_ref[l] + shR_ref[l], 0.0)
            x = dot(h, wtR_ref[l]) + btR_ref[l] + x

        # ---- head: mean over V, Conv1d(k=3,pad=1) over T as ONE K=192 matmul,
        #      folded BN1d + ReLU, mean over T, fc ----
        xm = jnp.mean(x.reshape(tb * T, V, HID), axis=1)        # (tb*T, HID)
        xm3 = xm.reshape(tb, T, HID)
        zrow = jnp.zeros((tb, 1, HID), f32)
        prev = jnp.concatenate([zrow, xm3[:, :T - 1, :]], axis=1).reshape(tb * T, HID)
        nxt = jnp.concatenate([xm3[:, 1:, :], zrow], axis=1).reshape(tb * T, HID)
        cat = jnp.concatenate([prev, xm, nxt], axis=1)          # (tb*T, 3*HID) im2col slab
        s = dot(cat, wcv_ref[...])                              # stacked conv taps
        y = jnp.maximum(s * hsc_ref[...] + hsh_ref[...], 0.0)   # folded BatchNorm1d + ReLU
        pooled = jnp.mean(y.reshape(tb, T, HID), axis=1)        # AdaptiveAvgPool -> (tb, HID)
        o_ref[0] = (dot(pooled, wfc_ref[...]) + bfc_ref[...]).astype(o_ref.dtype)

    return kernel


# ----------------------------------------------------------------------------
# Wrapper-side folding: softmax(adj) hoisting, BN / bias folds, weight fusion,
# bf16 casts of every MXU operand.
# ----------------------------------------------------------------------------
def _prepare_operands(params, G):
    insc, insh = params["in_bn"]                    # (1, 3) folded BatchNorm2d(3)
    layers = params["layers"]
    eye_g = jnp.eye(G, dtype=jnp.float32)

    def ablk_t(adj):
        a = jax.nn.softmax(adj, axis=-1)            # hoisted out of the kernel
        return jnp.kron(eye_g, a.T)                 # (G*V, G*V) = (I_G kron A)^T

    adj0, ws0, bs0, sc0, sh0, wt0, bt0, wr0, br0 = layers[0]
    a0t = ablk_t(adj0)
    ws0_f = insc.reshape(-1, 1) * ws0               # fold input-BN scale into spatial conv
    ca0 = insh @ ws0                                # input-BN shift contribution (pre-mix)
    wr0_f = insc.reshape(-1, 1) * wr0               # fold input-BN into residual conv
    br0_f = insh @ wr0 + br0
    sh0_f = sh0 + bs0 * sc0                         # fold spatial bias into BN shift
    w0cat = jnp.concatenate([ws0_f, wr0_f], axis=1)  # (3, 128) fused layer-0 weight
    b0cat = jnp.concatenate([ca0, br0_f], axis=1)    # (1, 128) fused layer-0 bias

    aRt = jnp.stack([ablk_t(l[0]) for l in layers[1:]])
    wsR = jnp.stack([l[1] for l in layers[1:]])
    scR = jnp.stack([l[3] for l in layers[1:]])
    shR = jnp.stack([l[4] + l[2] * l[3] for l in layers[1:]])
    wtR = jnp.stack([l[5] for l in layers[1:]])
    btR = jnp.stack([l[6] for l in layers[1:]])

    w0, w1, w2, b1, hsc, hsh, wfc, bfc = params["head"]
    wcv = jnp.concatenate([w0, w1, w2], axis=0)     # (192, 64) stacked [prev; cur; next] taps
    hsh_f = hsh + b1 * hsc                          # fold conv1d bias into BN shift

    bf = lambda t: t.astype(jnp.bfloat16)           # MXU operands in bf16
    return (bf(w0cat), b0cat, bf(a0t), sc0, sh0_f, bf(wt0), bt0,
            bf(aRt), bf(wsR), scR, shR, bf(wtR), btR,
            bf(wcv), hsc, hsh_f, bf(wfc), bfc)


def hybrid_cnn_forward(x_nchw, params):
    B, C, T, Vn = x_nchw.shape
    assert C == CIN and Vn == V
    tb, b_pad, G = _choose_tiling(B, T)
    ops = _prepare_operands(params, G)

    # NCHW -> (B, T, V, C) channels-last, pad batch to a multiple of the tile.
    x_btvc = jnp.transpose(x_nchw, (0, 2, 3, 1)).astype(jnp.float32)
    if b_pad != B:
        x_btvc = jnp.pad(x_btvc, ((0, b_pad - B), (0, 0), (0, 0), (0, 0)))
    x2 = x_btvc.reshape(b_pad * T * V, CIN)

    R = tb * T * V
    nb = b_pad // tb
    kernel = _make_kernel(tb, T, G)

    in_specs = [pl.BlockSpec((R, CIN), lambda i: (i, 0))]
    in_specs += [pl.BlockSpec(o.shape, _const_index_map(o.ndim)) for o in ops]
    out_specs = pl.BlockSpec((1, tb, NUM_CLASSES), lambda i: (i, 0, 0))

    # VMEM working-set estimate per grid step -> explicit limit (valid on v7x too).
    weight_bytes = sum(int(o.size) * o.dtype.itemsize for o in ops)
    act_bytes = R * HID * 4
    est = (2 * R * 128 * 4            # double-buffered, lane-padded (R, 3) input block
           + 2 * weight_bytes         # constant-index weights (double-buffered)
           + 14 * act_bytes           # live f32/bf16 layer intermediates (generous)
           + 4 * tb * T * 3 * HID * 4)
    vmem_limit = int(min(64 * 1024 * 1024, max(32 * 1024 * 1024, 2 * est)))

    # Rough cost hint for the XLA scheduler.
    nsl = b_pad * T
    mix_macs = 6 * (nsl // G) * (G * V) * (G * V) * HID
    chan_macs = nsl * V * (CIN * 2 * HID + HID * HID + 5 * 2 * HID * HID)
    head_macs = nsl * 3 * HID * HID + b_pad * HID * NUM_CLASSES
    flops = 2 * (mix_macs + chan_macs + head_macs)
    bytes_accessed = int(x2.size) * 4 + weight_bytes + b_pad * NUM_CLASSES * 4

    out = pl.pallas_call(
        kernel,
        out_shape=jax.ShapeDtypeStruct((nb, tb, NUM_CLASSES), jnp.float32),
        grid_spec=pltpu.PrefetchScalarGridSpec(
            num_scalar_prefetch=0,
            grid=(nb,),
            in_specs=in_specs,
            out_specs=out_specs,
        ),
        compiler_params=pltpu.CompilerParams(
            dimension_semantics=("parallel",),
            vmem_limit_bytes=vmem_limit,
        ),
        cost_estimate=pl.CostEstimate(
            flops=int(flops), transcendentals=0, bytes_accessed=int(bytes_accessed)),
    )(x2, *ops)
    return out.reshape(b_pad, NUM_CLASSES)[:B]


# ----------------------------------------------------------------------------
# Deterministic synthetic parameters (inference-mode BN already folded to
# per-channel scale/shift).
# ----------------------------------------------------------------------------
def init_params(key):
    keys = jax.random.split(key, 128)
    kit = iter(keys)

    def nrm(shape, scale=0.05):
        return scale * jax.random.normal(next(kit), shape, dtype=jnp.float32)

    def folded_bn(c):
        gamma = 1.0 + 0.1 * jax.random.normal(next(kit), (c,), jnp.float32)
        beta = 0.1 * jax.random.normal(next(kit), (c,), jnp.float32)
        mean = 0.1 * jax.random.normal(next(kit), (c,), jnp.float32)
        var = 1.0 + 0.1 * jax.random.uniform(next(kit), (c,), jnp.float32)
        scale = gamma / jnp.sqrt(var + EPS)
        shift = beta - mean * scale
        return scale.reshape(1, c), shift.reshape(1, c)

    in_sc, in_sh = folded_bn(CIN)    # bn_input = BatchNorm2d(3), inference mode

    layers = []
    for i in range(6):
        cin = CIN if i == 0 else HID
        # nn.Parameter(torch.ones(24,24)*0.1); small noise added so softmax(adj)
        # is non-uniform and the correctness check detects transposition errors.
        adj = 0.1 * jnp.ones((V, V), jnp.float32) + nrm((V, V), 0.05)
        ws = nrm((cin, HID)); bs = nrm((1, HID))
        bnsc, bnsh = folded_bn(HID)
        wt = nrm((HID, HID)); bt = nrm((1, HID))
        if i == 0:
            wr = nrm((cin, HID)); br = nrm((1, HID))     # residual 1x1 conv (3 -> 64)
        else:
            wr = None; br = None                         # residual = Identity
        layers.append((adj, ws, bs, bnsc, bnsh, wt, bt, wr, br))

    # OneDCNN: Conv1d(64, 64, k=3, pad=1); taps stored channels-last (Cin, Cout).
    w0 = nrm((HID, HID)); w1 = nrm((HID, HID)); w2 = nrm((HID, HID)); b1 = nrm((1, HID))
    hsc, hsh = folded_bn(HID)
    # fc = nn.Linear(64*24, 7); the PyTorch forward actually feeds a 64-dim pooled
    # vector to it (shape bug in the original module), so we keep the (7, 64*24)
    # parameter but use only its first 64 input columns.
    # TODO(synk): original fc expects 64*24 input features but the pooled tensor has 64.
    wfc_full = nrm((NUM_CLASSES, HID * V))
    wfc = jnp.transpose(wfc_full[:, :HID])               # (HID, NUM_CLASSES)
    bfc = nrm((1, NUM_CLASSES))
    head = (w0, w1, w2, b1, hsc, hsh, wfc, bfc)
    return {"in_bn": (in_sc, in_sh), "layers": layers, "head": head}


# ----------------------------------------------------------------------------
# Pure-JAX reference (natural op order, no folding, f32) for a correctness check.
# ----------------------------------------------------------------------------
def reference_forward(x_nchw, params):
    B, C, T, Vn = x_nchw.shape
    insc, insh = params["in_bn"]
    x = jnp.transpose(x_nchw, (0, 2, 3, 1)).astype(jnp.float32)     # (B,T,V,3)
    x = x * insc + insh                                             # bn_input
    x = x.reshape(B * T, Vn, C)
    for (adj, ws, bs, bnsc, bnsh, wt, bt, wr, br) in params["layers"]:
        res = x if wr is None else x @ wr + br
        a = jax.nn.softmax(adj, axis=-1)
        xm = jnp.einsum('nvc,vm->nmc', x, a)
        h = jnp.maximum((xm @ ws + bs) * bnsc + bnsh, 0.0)
        x = (h @ wt + bt) + res
    w0, w1, w2, b1, hsc, hsh, wfc, bfc = params["head"]
    x4 = x.reshape(B, T, Vn, HID)
    xm = x4.mean(axis=2)                                            # (B, T, HID)
    zero = jnp.zeros_like(xm[:, :1])
    xprev = jnp.concatenate([zero, xm[:, :-1]], axis=1)
    xnext = jnp.concatenate([xm[:, 1:], zero], axis=1)
    y = xprev @ w0 + xm @ w1 + xnext @ w2 + b1
    y = jnp.maximum(y * hsc + hsh, 0.0)
    pooled = y.mean(axis=1)
    return pooled @ wfc + bfc


if __name__ == "__main__":
    key = jax.random.PRNGKey(0)
    B, C, T = 2, 3, 8
    kx, kp = jax.random.split(key)
    x = jax.random.normal(kx, (B, C, T, V), dtype=jnp.float32)
    params = init_params(kp)

    out = hybrid_cnn_forward(x, params)
    out = jax.block_until_ready(out)

    with jax.default_matmul_precision("highest"):
        ref = jax.block_until_ready(reference_forward(x, params))

    assert out.shape == (B, NUM_CLASSES)
    assert bool(jnp.all(jnp.isfinite(out)))
    # bf16 MXU operands with f32 accumulation: allow a slightly looser tolerance
    # than the pure-f32 version while still catching any structural error.
    assert bool(jnp.allclose(out, ref, atol=2e-2, rtol=2e-2)), (out, ref)
    print("KERNEL_OK")
</pallas_src>

<mosaic_0001>
module attributes {stable_mosaic.version = 11 : i64} {
  func.func @kernel(%arg0: i32, %arg1: memref<192x3xf32, #tpu.memory_space<vmem>>, %arg2: memref<3x128xbf16, #tpu.memory_space<vmem>>, %arg3: memref<1x128xf32, #tpu.memory_space<vmem>>, %arg4: memref<96x96xbf16, #tpu.memory_space<vmem>>, %arg5: memref<1x64xf32, #tpu.memory_space<vmem>>, %arg6: memref<1x64xf32, #tpu.memory_space<vmem>>, %arg7: memref<64x64xbf16, #tpu.memory_space<vmem>>, %arg8: memref<1x64xf32, #tpu.memory_space<vmem>>, %arg9: memref<5x96x96xbf16, #tpu.memory_space<vmem>>, %arg10: memref<5x64x64xbf16, #tpu.memory_space<vmem>>, %arg11: memref<5x1x64xf32, #tpu.memory_space<vmem>>, %arg12: memref<5x1x64xf32, #tpu.memory_space<vmem>>, %arg13: memref<5x64x64xbf16, #tpu.memory_space<vmem>>, %arg14: memref<5x1x64xf32, #tpu.memory_space<vmem>>, %arg15: memref<192x64xbf16, #tpu.memory_space<vmem>>, %arg16: memref<1x64xf32, #tpu.memory_space<vmem>>, %arg17: memref<1x64xf32, #tpu.memory_space<vmem>>, %arg18: memref<64x7xbf16, #tpu.memory_space<vmem>>, %arg19: memref<1x7xf32, #tpu.memory_space<vmem>>, %arg20: memref<1x1x7xf32, #tpu.memory_space<vmem>>) attributes {dimension_semantics = [#tpu.dimension_semantics<parallel>], iteration_bounds = array<i64: 2>, scalar_prefetch = 0 : i64, scratch_operands = 0 : i64, tpu.core_type = #tpu.core_type<tc>, window_params = [{transform_indices = @transform_0, window_bounds = array<i64: 192, 3>}, {pipeline_mode = #tpu.pipeline_mode<synchronous>, transform_indices = @transform_1, window_bounds = array<i64: 3, 128>}, {pipeline_mode = #tpu.pipeline_mode<synchronous>, transform_indices = @transform_2, window_bounds = array<i64: 1, 128>}, {pipeline_mode = #tpu.pipeline_mode<synchronous>, transform_indices = @transform_3, window_bounds = array<i64: 96, 96>}, {pipeline_mode = #tpu.pipeline_mode<synchronous>, transform_indices = @transform_4, window_bounds = array<i64: 1, 64>}, {pipeline_mode = #tpu.pipeline_mode<synchronous>, transform_indices = @transform_5, window_bounds = array<i64: 1, 64>}, {pipeline_mode = #tpu.pipeline_mode<synchronous>, transform_indices = @transform_6, window_bounds = array<i64: 64, 64>}, {pipeline_mode = #tpu.pipeline_mode<synchronous>, transform_indices = @transform_7, window_bounds = array<i64: 1, 64>}, {pipeline_mode = #tpu.pipeline_mode<synchronous>, transform_indices = @transform_8, window_bounds = array<i64: 5, 96, 96>}, {pipeline_mode = #tpu.pipeline_mode<synchronous>, transform_indices = @transform_9, window_bounds = array<i64: 5, 64, 64>}, {pipeline_mode = #tpu.pipeline_mode<synchronous>, transform_indices = @transform_10, window_bounds = array<i64: 5, 1, 64>}, {pipeline_mode = #tpu.pipeline_mode<synchronous>, transform_indices = @transform_11, window_bounds = array<i64: 5, 1, 64>}, {pipeline_mode = #tpu.pipeline_mode<synchronous>, transform_indices = @transform_12, window_bounds = array<i64: 5, 64, 64>}, {pipeline_mode = #tpu.pipeline_mode<synchronous>, transform_indices = @transform_13, window_bounds = array<i64: 5, 1, 64>}, {pipeline_mode = #tpu.pipeline_mode<synchronous>, transform_indices = @transform_14, window_bounds = array<i64: 192, 64>}, {pipeline_mode = #tpu.pipeline_mode<synchronous>, transform_indices = @transform_15, window_bounds = array<i64: 1, 64>}, {pipeline_mode = #tpu.pipeline_mode<synchronous>, transform_indices = @transform_16, window_bounds = array<i64: 1, 64>}, {pipeline_mode = #tpu.pipeline_mode<synchronous>, transform_indices = @transform_17, window_bounds = array<i64: 64, 7>}, {pipeline_mode = #tpu.pipeline_mode<synchronous>, transform_indices = @transform_18, window_bounds = array<i64: 1, 7>}, {transform_indices = @transform_19, window_bounds = array<i64: 1, 1, 7>}]} {
    %c0 = arith.constant 0 : index
    %c0_0 = arith.constant 0 : index
    %0 = vector.load %arg1[%c0, %c0_0] : memref<192x3xf32, #tpu.memory_space<vmem>>, vector<192x3xf32>
    %c0_1 = arith.constant 0 : index
    %c0_2 = arith.constant 0 : index
    %1 = vector.load %arg2[%c0_1, %c0_2] : memref<3x128xbf16, #tpu.memory_space<vmem>>, vector<3x128xbf16>
    %2 = arith.truncf %0 : vector<192x3xf32> to vector<192x3xbf16>
    %cst = arith.constant dense<0.000000e+00> : vector<192x128xf32>
    %3 = tpu.matmul %2, %1, %cst {dimension_numbers = #tpu.dot_dimension_numbers<[1], [0], [0], [1], [0, 0, 1, 1], [], []>} : vector<192x3xbf16>, vector<3x128xbf16>, vector<192x128xf32> -> vector<192x128xf32>
    %c0_3 = arith.constant 0 : index
    %c0_4 = arith.constant 0 : index
    %4 = vector.load %arg3[%c0_3, %c0_4] : memref<1x128xf32, #tpu.memory_space<vmem>>, vector<1x128xf32>
    %5 = vector.broadcast %4 : vector<1x128xf32> to vector<192x128xf32>
    %6 = arith.addf %3, %5 : vector<192x128xf32>
    %7 = vector.extract_strided_slice %6 {offsets = [0, 0], sizes = [192, 64], strides = [1, 1]} : vector<192x128xf32> to vector<192x64xf32>
    %8 = vector.extract_strided_slice %6 {offsets = [0, 64], sizes = [192, 64], strides = [1, 1]} : vector<192x128xf32> to vector<192x64xf32>
    %c0_5 = arith.constant 0 : index
    %c0_6 = arith.constant 0 : index
    %9 = vector.load %arg4[%c0_5, %c0_6] : memref<96x96xbf16, #tpu.memory_space<vmem>>, vector<96x96xbf16>
    %10 = vector.extract_strided_slice %7 {offsets = [0, 0], sizes = [96, 64], strides = [1, 1]} : vector<192x64xf32> to vector<96x64xf32>
    %11 = arith.truncf %10 : vector<96x64xf32> to vector<96x64xbf16>
    %cst_7 = arith.constant dense<0.000000e+00> : vector<96x64xf32>
    %12 = tpu.matmul %9, %11, %cst_7 {dimension_numbers = #tpu.dot_dimension_numbers<[1], [0], [0], [1], [0, 0, 1, 1], [], []>} : vector<96x96xbf16>, vector<96x64xbf16>, vector<96x64xf32> -> vector<96x64xf32>
    %13 = vector.extract_strided_slice %7 {offsets = [96, 0], sizes = [96, 64], strides = [1, 1]} : vector<192x64xf32> to vector<96x64xf32>
    %14 = arith.truncf %13 : vector<96x64xf32> to vector<96x64xbf16>
    %cst_8 = arith.constant dense<0.000000e+00> : vector<96x64xf32>
    %15 = tpu.matmul %9, %14, %cst_8 {dimension_numbers = #tpu.dot_dimension_numbers<[1], [0], [0], [1], [0, 0, 1, 1], [], []>} : vector<96x96xbf16>, vector<96x64xbf16>, vector<96x64xf32> -> vector<96x64xf32>
    %16 = tpu.concatenate %12, %15 in 0 : vector<96x64xf32>, vector<96x64xf32> -> vector<192x64xf32>
    %c0_9 = arith.constant 0 : index
    %c0_10 = arith.constant 0 : index
    %17 = vector.load %arg5[%c0_9, %c0_10] : memref<1x64xf32, #tpu.memory_space<vmem>>, vector<1x64xf32>
    %18 = vector.broadcast %17 : vector<1x64xf32> to vector<192x64xf32>
    %19 = arith.mulf %16, %18 : vector<192x64xf32>
    %c0_11 = arith.constant 0 : index
    %c0_12 = arith.constant 0 : index
    %20 = vector.load %arg6[%c0_11, %c0_12] : memref<1x64xf32, #tpu.memory_space<vmem>>, vector<1x64xf32>
    %21 = vector.broadcast %20 : vector<1x64xf32> to vector<192x64xf32>
    %22 = arith.addf %19, %21 : vector<192x64xf32>
    %cst_13 = arith.constant 0.000000e+00 : f32
    %23 = vector.broadcast %cst_13 : f32 to vector<192x64xf32>
    %24 = arith.maximumf %22, %23 : vector<192x64xf32>
    %c0_14 = arith.constant 0 : index
    %c0_15 = arith.constant 0 : index
    %25 = vector.load %arg7[%c0_14, %c0_15] : memref<64x64xbf16, #tpu.memory_space<vmem>>, vector<64x64xbf16>
    %26 = arith.truncf %24 : vector<192x64xf32> to vector<192x64xbf16>
    %cst_16 = arith.constant dense<0.000000e+00> : vector<192x64xf32>
    %27 = tpu.matmul %26, %25, %cst_16 {dimension_numbers = #tpu.dot_dimension_numbers<[1], [0], [0], [1], [0, 0, 1, 1], [], []>} : vector<192x64xbf16>, vector<64x64xbf16>, vector<192x64xf32> -> vector<192x64xf32>
    %c0_17 = arith.constant 0 : index
    %c0_18 = arith.constant 0 : index
    %28 = vector.load %arg8[%c0_17, %c0_18] : memref<1x64xf32, #tpu.memory_space<vmem>>, vector<1x64xf32>
    %29 = vector.broadcast %28 : vector<1x64xf32> to vector<192x64xf32>
    %30 = arith.addf %27, %29 : vector<192x64xf32>
    %31 = arith.addf %30, %8 : vector<192x64xf32>
    %c0_19 = arith.constant 0 : index
    %c0_20 = arith.constant 0 : index
    %c0_21 = arith.constant 0 : index
    %32 = vector.load %arg10[%c0_19, %c0_20, %c0_21] : memref<5x64x64xbf16, #tpu.memory_space<vmem>>, vector<1x64x64xbf16>
    %33 = vector.shape_cast %32 : vector<1x64x64xbf16> to vector<64x64xbf16>
    %34 = arith.truncf %31 : vector<192x64xf32> to vector<192x64xbf16>
    %cst_22 = arith.constant dense<0.000000e+00> : vector<192x64xf32>
    %35 = tpu.matmul %34, %33, %cst_22 {dimension_numbers = #tpu.dot_dimension_numbers<[1], [0], [0], [1], [0, 0, 1, 1], [], []>} : vector<192x64xbf16>, vector<64x64xbf16>, vector<192x64xf32> -> vector<192x64xf32>
    %c0_23 = arith.constant 0 : index
    %c0_24 = arith.constant 0 : index
    %c0_25 = arith.constant 0 : index
    %36 = vector.load %arg9[%c0_23, %c0_24, %c0_25] : memref<5x96x96xbf16, #tpu.memory_space<vmem>>, vector<1x96x96xbf16>
    %37 = vector.shape_cast %36 : vector<1x96x96xbf16> to vector<96x96xbf16>
    %38 = vector.extract_strided_slice %35 {offsets = [0, 0], sizes = [96, 64], strides = [1, 1]} : vector<192x64xf32> to vector<96x64xf32>
    %39 = arith.truncf %38 : vector<96x64xf32> to vector<96x64xbf16>
    %cst_26 = arith.constant dense<0.000000e+00> : vector<96x64xf32>
    %40 = tpu.matmul %37, %39, %cst_26 {dimension_numbers = #tpu.dot_dimension_numbers<[1], [0], [0], [1], [0, 0, 1, 1], [], []>} : vector<96x96xbf16>, vector<96x64xbf16>, vector<96x64xf32> -> vector<96x64xf32>
    %41 = vector.extract_strided_slice %35 {offsets = [96, 0], sizes = [96, 64], strides = [1, 1]} : vector<192x64xf32> to vector<96x64xf32>
    %42 = arith.truncf %41 : vector<96x64xf32> to vector<96x64xbf16>
    %cst_27 = arith.constant dense<0.000000e+00> : vector<96x64xf32>
    %43 = tpu.matmul %37, %42, %cst_27 {dimension_numbers = #tpu.dot_dimension_numbers<[1], [0], [0], [1], [0, 0, 1, 1], [], []>} : vector<96x96xbf16>, vector<96x64xbf16>, vector<96x64xf32> -> vector<96x64xf32>
    %44 = tpu.concatenate %40, %43 in 0 : vector<96x64xf32>, vector<96x64xf32> -> vector<192x64xf32>
    %c0_28 = arith.constant 0 : index
    %c0_29 = arith.constant 0 : index
    %c0_30 = arith.constant 0 : index
    %45 = vector.load %arg11[%c0_28, %c0_29, %c0_30] : memref<5x1x64xf32, #tpu.memory_space<vmem>>, vector<1x1x64xf32>
    %46 = vector.shape_cast %45 : vector<1x1x64xf32> to vector<1x64xf32>
    %47 = vector.broadcast %46 : vector<1x64xf32> to vector<192x64xf32>
    %48 = arith.mulf %44, %47 : vector<192x64xf32>
    %c0_31 = arith.constant 0 : index
    %c0_32 = arith.constant 0 : index
    %c0_33 = arith.constant 0 : index
    %49 = vector.load %arg12[%c0_31, %c0_32, %c0_33] : memref<5x1x64xf32, #tpu.memory_space<vmem>>, vector<1x1x64xf32>
    %50 = vector.shape_cast %49 : vector<1x1x64xf32> to vector<1x64xf32>
    %51 = vector.broadcast %50 : vector<1x64xf32> to vector<192x64xf32>
    %52 = arith.addf %48, %51 : vector<192x64xf32>
    %cst_34 = arith.constant 0.000000e+00 : f32
    %53 = vector.broadcast %cst_34 : f32 to vector<192x64xf32>
    %54 = arith.maximumf %52, %53 : vector<192x64xf32>
    %c0_35 = arith.constant 0 : index
    %c0_36 = arith.constant 0 : index
    %c0_37 = arith.constant 0 : index
    %55 = vector.load %arg13[%c0_35, %c0_36, %c0_37] : memref<5x64x64xbf16, #tpu.memory_space<vmem>>, vector<1x64x64xbf16>
    %56 = vector.shape_cast %55 : vector<1x64x64xbf16> to vector<64x64xbf16>
    %57 = arith.truncf %54 : vector<192x64xf32> to vector<192x64xbf16>
    %cst_38 = arith.constant dense<0.000000e+00> : vector<192x64xf32>
    %58 = tpu.matmul %57, %56, %cst_38 {dimension_numbers = #tpu.dot_dimension_numbers<[1], [0], [0], [1], [0, 0, 1, 1], [], []>} : vector<192x64xbf16>, vector<64x64xbf16>, vector<192x64xf32> -> vector<192x64xf32>
    %c0_39 = arith.constant 0 : index
    %c0_40 = arith.constant 0 : index
    %c0_41 = arith.constant 0 : index
    %59 = vector.load %arg14[%c0_39, %c0_40, %c0_41] : memref<5x1x64xf32, #tpu.memory_space<vmem>>, vector<1x1x64xf32>
    %60 = vector.shape_cast %59 : vector<1x1x64xf32> to vector<1x64xf32>
    %61 = vector.broadcast %60 : vector<1x64xf32> to vector<192x64xf32>
    %62 = arith.addf %58, %61 : vector<192x64xf32>
    %63 = arith.addf %62, %31 : vector<192x64xf32>
    %c1 = arith.constant 1 : index
    %c0_42 = arith.constant 0 : index
    %c0_43 = arith.constant 0 : index
    %64 = vector.load %arg10[%c1, %c0_42, %c0_43] : memref<5x64x64xbf16, #tpu.memory_space<vmem>>, vector<1x64x64xbf16>
    %65 = vector.shape_cast %64 : vector<1x64x64xbf16> to vector<64x64xbf16>
    %66 = arith.truncf %63 : vector<192x64xf32> to vector<192x64xbf16>
    %cst_44 = arith.constant dense<0.000000e+00> : vector<192x64xf32>
    %67 = tpu.matmul %66, %65, %cst_44 {dimension_numbers = #tpu.dot_dimension_numbers<[1], [0], [0], [1], [0, 0, 1, 1], [], []>} : vector<192x64xbf16>, vector<64x64xbf16>, vector<192x64xf32> -> vector<192x64xf32>
    %c1_45 = arith.constant 1 : index
    %c0_46 = arith.constant 0 : index
    %c0_47 = arith.constant 0 : index
    %68 = vector.load %arg9[%c1_45, %c0_46, %c0_47] : memref<5x96x96xbf16, #tpu.memory_space<vmem>>, vector<1x96x96xbf16>
    %69 = vector.shape_cast %68 : vector<1x96x96xbf16> to vector<96x96xbf16>
    %70 = vector.extract_strided_slice %67 {offsets = [0, 0], sizes = [96, 64], strides = [1, 1]} : vector<192x64xf32> to vector<96x64xf32>
    %71 = arith.truncf %70 : vector<96x64xf32> to vector<96x64xbf16>
    %cst_48 = arith.constant dense<0.000000e+00> : vector<96x64xf32>
    %72 = tpu.matmul %69, %71, %cst_48 {dimension_numbers = #tpu.dot_dimension_numbers<[1], [0], [0], [1], [0, 0, 1, 1], [], []>} : vector<96x96xbf16>, vector<96x64xbf16>, vector<96x64xf32> -> vector<96x64xf32>
    %73 = vector.extract_strided_slice %67 {offsets = [96, 0], sizes = [96, 64], strides = [1, 1]} : vector<192x64xf32> to vector<96x64xf32>
    %74 = arith.truncf %73 : vector<96x64xf32> to vector<96x64xbf16>
    %cst_49 = arith.constant dense<0.000000e+00> : vector<96x64xf32>
    %75 = tpu.matmul %69, %74, %cst_49 {dimension_numbers = #tpu.dot_dimension_numbers<[1], [0], [0], [1], [0, 0, 1, 1], [], []>} : vector<96x96xbf16>, vector<96x64xbf16>, vector<96x64xf32> -> vector<96x64xf32>
    %76 = tpu.concatenate %72, %75 in 0 : vector<96x64xf32>, vector<96x64xf32> -> vector<192x64xf32>
    %c1_50 = arith.constant 1 : index
    %c0_51 = arith.constant 0 : index
    %c0_52 = arith.constant 0 : index
    %77 = vector.load %arg11[%c1_50, %c0_51, %c0_52] : memref<5x1x64xf32, #tpu.memory_space<vmem>>, vector<1x1x64xf32>
    %78 = vector.shape_cast %77 : vector<1x1x64xf32> to vector<1x64xf32>
    %79 = vector.broadcast %78 : vector<1x64xf32> to vector<192x64xf32>
    %80 = arith.mulf %76, %79 : vector<192x64xf32>
    %c1_53 = arith.constant 1 : index
    %c0_54 = arith.constant 0 : index
    %c0_55 = arith.constant 0 : index
    %81 = vector.load %arg12[%c1_53, %c0_54, %c0_55] : memref<5x1x64xf32, #tpu.memory_space<vmem>>, vector<1x1x64xf32>
    %82 = vector.shape_cast %81 : vector<1x1x64xf32> to vector<1x64xf32>
    %83 = vector.broadcast %82 : vector<1x64xf32> to vector<192x64xf32>
    %84 = arith.addf %80, %83 : vector<192x64xf32>
    %cst_56 = arith.constant 0.000000e+00 : f32
    %85 = vector.broadcast %cst_56 : f32 to vector<192x64xf32>
    %86 = arith.maximumf %84, %85 : vector<192x64xf32>
    %c1_57 = arith.constant 1 : index
    %c0_58 = arith.constant 0 : index
    %c0_59 = arith.constant 0 : index
    %87 = vector.load %arg13[%c1_57, %c0_58, %c0_59] : memref<5x64x64xbf16, #tpu.memory_space<vmem>>, vector<1x64x64xbf16>
    %88 = vector.shape_cast %87 : vector<1x64x64xbf16> to vector<64x64xbf16>
    %89 = arith.truncf %86 : vector<192x64xf32> to vector<192x64xbf16>
    %cst_60 = arith.constant dense<0.000000e+00> : vector<192x64xf32>
    %90 = tpu.matmul %89, %88, %cst_60 {dimension_numbers = #tpu.dot_dimension_numbers<[1], [0], [0], [1], [0, 0, 1, 1], [], []>} : vector<192x64xbf16>, vector<64x64xbf16>, vector<192x64xf32> -> vector<192x64xf32>
    %c1_61 = arith.constant 1 : index
    %c0_62 = arith.constant 0 : index
    %c0_63 = arith.constant 0 : index
    %91 = vector.load %arg14[%c1_61, %c0_62, %c0_63] : memref<5x1x64xf32, #tpu.memory_space<vmem>>, vector<1x1x64xf32>
    %92 = vector.shape_cast %91 : vector<1x1x64xf32> to vector<1x64xf32>
    %93 = vector.broadcast %92 : vector<1x64xf32> to vector<192x64xf32>
    %94 = arith.addf %90, %93 : vector<192x64xf32>
    %95 = arith.addf %94, %63 : vector<192x64xf32>
    %c2 = arith.constant 2 : index
    %c0_64 = arith.constant 0 : index
    %c0_65 = arith.constant 0 : index
    %96 = vector.load %arg10[%c2, %c0_64, %c0_65] : memref<5x64x64xbf16, #tpu.memory_space<vmem>>, vector<1x64x64xbf16>
    %97 = vector.shape_cast %96 : vector<1x64x64xbf16> to vector<64x64xbf16>
    %98 = arith.truncf %95 : vector<192x64xf32> to vector<192x64xbf16>
    %cst_66 = arith.constant dense<0.000000e+00> : vector<192x64xf32>
    %99 = tpu.matmul %98, %97, %cst_66 {dimension_numbers = #tpu.dot_dimension_numbers<[1], [0], [0], [1], [0, 0, 1, 1], [], []>} : vector<192x64xbf16>, vector<64x64xbf16>, vector<192x64xf32> -> vector<192x64xf32>
    %c2_67 = arith.constant 2 : index
    %c0_68 = arith.constant 0 : index
    %c0_69 = arith.constant 0 : index
    %100 = vector.load %arg9[%c2_67, %c0_68, %c0_69] : memref<5x96x96xbf16, #tpu.memory_space<vmem>>, vector<1x96x96xbf16>
    %101 = vector.shape_cast %100 : vector<1x96x96xbf16> to vector<96x96xbf16>
    %102 = vector.extract_strided_slice %99 {offsets = [0, 0], sizes = [96, 64], strides = [1, 1]} : vector<192x64xf32> to vector<96x64xf32>
    %103 = arith.truncf %102 : vector<96x64xf32> to vector<96x64xbf16>
    %cst_70 = arith.constant dense<0.000000e+00> : vector<96x64xf32>
    %104 = tpu.matmul %101, %103, %cst_70 {dimension_numbers = #tpu.dot_dimension_numbers<[1], [0], [0], [1], [0, 0, 1, 1], [], []>} : vector<96x96xbf16>, vector<96x64xbf16>, vector<96x64xf32> -> vector<96x64xf32>
    %105 = vector.extract_strided_slice %99 {offsets = [96, 0], sizes = [96, 64], strides = [1, 1]} : vector<192x64xf32> to vector<96x64xf32>
    %106 = arith.truncf %105 : vector<96x64xf32> to vector<96x64xbf16>
    %cst_71 = arith.constant dense<0.000000e+00> : vector<96x64xf32>
    %107 = tpu.matmul %101, %106, %cst_71 {dimension_numbers = #tpu.dot_dimension_numbers<[1], [0], [0], [1], [0, 0, 1, 1], [], []>} : vector<96x96xbf16>, vector<96x64xbf16>, vector<96x64xf32> -> vector<96x64xf32>
    %108 = tpu.concatenate %104, %107 in 0 : vector<96x64xf32>, vector<96x64xf32> -> vector<192x64xf32>
    %c2_72 = arith.constant 2 : index
    %c0_73 = arith.constant 0 : index
    %c0_74 = arith.constant 0 : index
    %109 = vector.load %arg11[%c2_72, %c0_73, %c0_74] : memref<5x1x64xf32, #tpu.memory_space<vmem>>, vector<1x1x64xf32>
    %110 = vector.shape_cast %109 : vector<1x1x64xf32> to vector<1x64xf32>
    %111 = vector.broadcast %110 : vector<1x64xf32> to vector<192x64xf32>
    %112 = arith.mulf %108, %111 : vector<192x64xf32>
    %c2_75 = arith.constant 2 : index
    %c0_76 = arith.constant 0 : index
    %c0_77 = arith.constant 0 : index
    %113 = vector.load %arg12[%c2_75, %c0_76, %c0_77] : memref<5x1x64xf32, #tpu.memory_space<vmem>>, vector<1x1x64xf32>
    %114 = vector.shape_cast %113 : vector<1x1x64xf32> to vector<1x64xf32>
    %115 = vector.broadcast %114 : vector<1x64xf32> to vector<192x64xf32>
    %116 = arith.addf %112, %115 : vector<192x64xf32>
    %cst_78 = arith.constant 0.000000e+00 : f32
    %117 = vector.broadcast %cst_78 : f32 to vector<192x64xf32>
    %118 = arith.maximumf %116, %117 : vector<192x64xf32>
    %c2_79 = arith.constant 2 : index
    %c0_80 = arith.constant 0 : index
    %c0_81 = arith.constant 0 : index
    %119 = vector.load %arg13[%c2_79, %c0_80, %c0_81] : memref<5x64x64xbf16, #tpu.memory_space<vmem>>, vector<1x64x64xbf16>
    %120 = vector.shape_cast %119 : vector<1x64x64xbf16> to vector<64x64xbf16>
    %121 = arith.truncf %118 : vector<192x64xf32> to vector<192x64xbf16>
    %cst_82 = arith.constant dense<0.000000e+00> : vector<192x64xf32>
    %122 = tpu.matmul %121, %120, %cst_82 {dimension_numbers = #tpu.dot_dimension_numbers<[1], [0], [0], [1], [0, 0, 1, 1], [], []>} : vector<192x64xbf16>, vector<64x64xbf16>, vector<192x64xf32> -> vector<192x64xf32>
    %c2_83 = arith.constant 2 : index
    %c0_84 = arith.constant 0 : index
    %c0_85 = arith.constant 0 : index
    %123 = vector.load %arg14[%c2_83, %c0_84, %c0_85] : memref<5x1x64xf32, #tpu.memory_space<vmem>>, vector<1x1x64xf32>
    %124 = vector.shape_cast %123 : vector<1x1x64xf32> to vector<1x64xf32>
    %125 = vector.broadcast %124 : vector<1x64xf32> to vector<192x64xf32>
    %126 = arith.addf %122, %125 : vector<192x64xf32>
    %127 = arith.addf %126, %95 : vector<192x64xf32>
    %c3 = arith.constant 3 : index
    %c0_86 = arith.constant 0 : index
    %c0_87 = arith.constant 0 : index
    %128 = vector.load %arg10[%c3, %c0_86, %c0_87] : memref<5x64x64xbf16, #tpu.memory_space<vmem>>, vector<1x64x64xbf16>
    %129 = vector.shape_cast %128 : vector<1x64x64xbf16> to vector<64x64xbf16>
    %130 = arith.truncf %127 : vector<192x64xf32> to vector<192x64xbf16>
    %cst_88 = arith.constant dense<0.000000e+00> : vector<192x64xf32>
    %131 = tpu.matmul %130, %129, %cst_88 {dimension_numbers = #tpu.dot_dimension_numbers<[1], [0], [0], [1], [0, 0, 1, 1], [], []>} : vector<192x64xbf16>, vector<64x64xbf16>, vector<192x64xf32> -> vector<192x64xf32>
    %c3_89 = arith.constant 3 : index
    %c0_90 = arith.constant 0 : index
    %c0_91 = arith.constant 0 : index
    %132 = vector.load %arg9[%c3_89, %c0_90, %c0_91] : memref<5x96x96xbf16, #tpu.memory_space<vmem>>, vector<1x96x96xbf16>
    %133 = vector.shape_cast %132 : vector<1x96x96xbf16> to vector<96x96xbf16>
    %134 = vector.extract_strided_slice %131 {offsets = [0, 0], sizes = [96, 64], strides = [1, 1]} : vector<192x64xf32> to vector<96x64xf32>
    %135 = arith.truncf %134 : vector<96x64xf32> to vector<96x64xbf16>
    %cst_92 = arith.constant dense<0.000000e+00> : vector<96x64xf32>
    %136 = tpu.matmul %133, %135, %cst_92 {dimension_numbers = #tpu.dot_dimension_numbers<[1], [0], [0], [1], [0, 0, 1, 1], [], []>} : vector<96x96xbf16>, vector<96x64xbf16>, vector<96x64xf32> -> vector<96x64xf32>
    %137 = vector.extract_strided_slice %131 {offsets = [96, 0], sizes = [96, 64], strides = [1, 1]} : vector<192x64xf32> to vector<96x64xf32>
    %138 = arith.truncf %137 : vector<96x64xf32> to vector<96x64xbf16>
    %cst_93 = arith.constant dense<0.000000e+00> : vector<96x64xf32>
    %139 = tpu.matmul %133, %138, %cst_93 {dimension_numbers = #tpu.dot_dimension_numbers<[1], [0], [0], [1], [0, 0, 1, 1], [], []>} : vector<96x96xbf16>, vector<96x64xbf16>, vector<96x64xf32> -> vector<96x64xf32>
    %140 = tpu.concatenate %136, %139 in 0 : vector<96x64xf32>, vector<96x64xf32> -> vector<192x64xf32>
    %c3_94 = arith.constant 3 : index
    %c0_95 = arith.constant 0 : index
    %c0_96 = arith.constant 0 : index
    %141 = vector.load %arg11[%c3_94, %c0_95, %c0_96] : memref<5x1x64xf32, #tpu.memory_space<vmem>>, vector<1x1x64xf32>
    %142 = vector.shape_cast %141 : vector<1x1x64xf32> to vector<1x64xf32>
    %143 = vector.broadcast %142 : vector<1x64xf32> to vector<192x64xf32>
    %144 = arith.mulf %140, %143 : vector<192x64xf32>
    %c3_97 = arith.constant 3 : index
    %c0_98 = arith.constant 0 : index
    %c0_99 = arith.constant 0 : index
    %145 = vector.load %arg12[%c3_97, %c0_98, %c0_99] : memref<5x1x64xf32, #tpu.memory_space<vmem>>, vector<1x1x64xf32>
    %146 = vector.shape_cast %145 : vector<1x1x64xf32> to vector<1x64xf32>
    %147 = vector.broadcast %146 : vector<1x64xf32> to vector<192x64xf32>
    %148 = arith.addf %144, %147 : vector<192x64xf32>
    %cst_100 = arith.constant 0.000000e+00 : f32
    %149 = vector.broadcast %cst_100 : f32 to vector<192x64xf32>
    %150 = arith.maximumf %148, %149 : vector<192x64xf32>
    %c3_101 = arith.constant 3 : index
    %c0_102 = arith.constant 0 : index
    %c0_103 = arith.constant 0 : index
    %151 = vector.load %arg13[%c3_101, %c0_102, %c0_103] : memref<5x64x64xbf16, #tpu.memory_space<vmem>>, vector<1x64x64xbf16>
    %152 = vector.shape_cast %151 : vector<1x64x64xbf16> to vector<64x64xbf16>
    %153 = arith.truncf %150 : vector<192x64xf32> to vector<192x64xbf16>
    %cst_104 = arith.constant dense<0.000000e+00> : vector<192x64xf32>
    %154 = tpu.matmul %153, %152, %cst_104 {dimension_numbers = #tpu.dot_dimension_numbers<[1], [0], [0], [1], [0, 0, 1, 1], [], []>} : vector<192x64xbf16>, vector<64x64xbf16>, vector<192x64xf32> -> vector<192x64xf32>
    %c3_105 = arith.constant 3 : index
    %c0_106 = arith.constant 0 : index
    %c0_107 = arith.constant 0 : index
    %155 = vector.load %arg14[%c3_105, %c0_106, %c0_107] : memref<5x1x64xf32, #tpu.memory_space<vmem>>, vector<1x1x64xf32>
    %156 = vector.shape_cast %155 : vector<1x1x64xf32> to vector<1x64xf32>
    %157 = vector.broadcast %156 : vector<1x64xf32> to vector<192x64xf32>
    %158 = arith.addf %154, %157 : vector<192x64xf32>
    %159 = arith.addf %158, %127 : vector<192x64xf32>
    %c4 = arith.constant 4 : index
    %c0_108 = arith.constant 0 : index
    %c0_109 = arith.constant 0 : index
    %160 = vector.load %arg10[%c4, %c0_108, %c0_109] : memref<5x64x64xbf16, #tpu.memory_space<vmem>>, vector<1x64x64xbf16>
    %161 = vector.shape_cast %160 : vector<1x64x64xbf16> to vector<64x64xbf16>
    %162 = arith.truncf %159 : vector<192x64xf32> to vector<192x64xbf16>
    %cst_110 = arith.constant dense<0.000000e+00> : vector<192x64xf32>
    %163 = tpu.matmul %162, %161, %cst_110 {dimension_numbers = #tpu.dot_dimension_numbers<[1], [0], [0], [1], [0, 0, 1, 1], [], []>} : vector<192x64xbf16>, vector<64x64xbf16>, vector<192x64xf32> -> vector<192x64xf32>
    %c4_111 = arith.constant 4 : index
    %c0_112 = arith.constant 0 : index
    %c0_113 = arith.constant 0 : index
    %164 = vector.load %arg9[%c4_111, %c0_112, %c0_113] : memref<5x96x96xbf16, #tpu.memory_space<vmem>>, vector<1x96x96xbf16>
    %165 = vector.shape_cast %164 : vector<1x96x96xbf16> to vector<96x96xbf16>
    %166 = vector.extract_strided_slice %163 {offsets = [0, 0], sizes = [96, 64], strides = [1, 1]} : vector<192x64xf32> to vector<96x64xf32>
    %167 = arith.truncf %166 : vector<96x64xf32> to vector<96x64xbf16>
    %cst_114 = arith.constant dense<0.000000e+00> : vector<96x64xf32>
    %168 = tpu.matmul %165, %167, %cst_114 {dimension_numbers = #tpu.dot_dimension_numbers<[1], [0], [0], [1], [0, 0, 1, 1], [], []>} : vector<96x96xbf16>, vector<96x64xbf16>, vector<96x64xf32> -> vector<96x64xf32>
    %169 = vector.extract_strided_slice %163 {offsets = [96, 0], sizes = [96, 64], strides = [1, 1]} : vector<192x64xf32> to vector<96x64xf32>
    %170 = arith.truncf %169 : vector<96x64xf32> to vector<96x64xbf16>
    %cst_115 = arith.constant dense<0.000000e+00> : vector<96x64xf32>
    %171 = tpu.matmul %165, %170, %cst_115 {dimension_numbers = #tpu.dot_dimension_numbers<[1], [0], [0], [1], [0, 0, 1, 1], [], []>} : vector<96x96xbf16>, vector<96x64xbf16>, vector<96x64xf32> -> vector<96x64xf32>
    %172 = tpu.concatenate %168, %171 in 0 : vector<96x64xf32>, vector<96x64xf32> -> vector<192x64xf32>
    %c4_116 = arith.constant 4 : index
    %c0_117 = arith.constant 0 : index
    %c0_118 = arith.constant 0 : index
    %173 = vector.load %arg11[%c4_116, %c0_117, %c0_118] : memref<5x1x64xf32, #tpu.memory_space<vmem>>, vector<1x1x64xf32>
    %174 = vector.shape_cast %173 : vector<1x1x64xf32> to vector<1x64xf32>
    %175 = vector.broadcast %174 : vector<1x64xf32> to vector<192x64xf32>
    %176 = arith.mulf %172, %175 : vector<192x64xf32>
    %c4_119 = arith.constant 4 : index
    %c0_120 = arith.constant 0 : index
    %c0_121 = arith.constant 0 : index
    %177 = vector.load %arg12[%c4_119, %c0_120, %c0_121] : memref<5x1x64xf32, #tpu.memory_space<vmem>>, vector<1x1x64xf32>
    %178 = vector.shape_cast %177 : vector<1x1x64xf32> to vector<1x64xf32>
    %179 = vector.broadcast %178 : vector<1x64xf32> to vector<192x64xf32>
    %180 = arith.addf %176, %179 : vector<192x64xf32>
    %cst_122 = arith.constant 0.000000e+00 : f32
    %181 = vector.broadcast %cst_122 : f32 to vector<192x64xf32>
    %182 = arith.maximumf %180, %181 : vector<192x64xf32>
    %c4_123 = arith.constant 4 : index
    %c0_124 = arith.constant 0 : index
    %c0_125 = arith.constant 0 : index
    %183 = vector.load %arg13[%c4_123, %c0_124, %c0_125] : memref<5x64x64xbf16, #tpu.memory_space<vmem>>, vector<1x64x64xbf16>
    %184 = vector.shape_cast %183 : vector<1x64x64xbf16> to vector<64x64xbf16>
    %185 = arith.truncf %182 : vector<192x64xf32> to vector<192x64xbf16>
    %cst_126 = arith.constant dense<0.000000e+00> : vector<192x64xf32>
    %186 = tpu.matmul %185, %184, %cst_126 {dimension_numbers = #tpu.dot_dimension_numbers<[1], [0], [0], [1], [0, 0, 1, 1], [], []>} : vector<192x64xbf16>, vector<64x64xbf16>, vector<192x64xf32> -> vector<192x64xf32>
    %c4_127 = arith.constant 4 : index
    %c0_128 = arith.constant 0 : index
    %c0_129 = arith.constant 0 : index
    %187 = vector.load %arg14[%c4_127, %c0_128, %c0_129] : memref<5x1x64xf32, #tpu.memory_space<vmem>>, vector<1x1x64xf32>
    %188 = vector.shape_cast %187 : vector<1x1x64xf32> to vector<1x64xf32>
    %189 = vector.broadcast %188 : vector<1x64xf32> to vector<192x64xf32>
    %190 = arith.addf %186, %189 : vector<192x64xf32>
    %191 = arith.addf %190, %159 : vector<192x64xf32>
    %192 = vector.shape_cast %191 : vector<192x64xf32> to vector<8x24x64xf32>
    %cst_130 = arith.constant dense<0.000000e+00> : vector<8x64xf32>
    %193 = vector.multi_reduction <add>, %192, %cst_130 [1] : vector<8x24x64xf32> to vector<8x64xf32>
    %cst_131 = arith.constant 2.400000e+01 : f32
    %194 = vector.broadcast %cst_131 : f32 to vector<8x64xf32>
    %195 = arith.divf %193, %194 : vector<8x64xf32>
    %196 = vector.shape_cast %195 : vector<8x64xf32> to vector<1x8x64xf32>
    %cst_132 = arith.constant 0.000000e+00 : f32
    %197 = vector.broadcast %cst_132 : f32 to vector<1x1x64xf32>
    %198 = vector.extract_strided_slice %196 {offsets = [0, 0, 0], sizes = [1, 7, 64], strides = [1, 1, 1]} : vector<1x8x64xf32> to vector<1x7x64xf32>
    %199 = tpu.concatenate %197, %198 in 1 : vector<1x1x64xf32>, vector<1x7x64xf32> -> vector<1x8x64xf32>
    %200 = vector.shape_cast %199 : vector<1x8x64xf32> to vector<8x64xf32>
    %201 = vector.extract_strided_slice %196 {offsets = [0, 1, 0], sizes = [1, 7, 64], strides = [1, 1, 1]} : vector<1x8x64xf32> to vector<1x7x64xf32>
    %202 = tpu.concatenate %201, %197 in 1 : vector<1x7x64xf32>, vector<1x1x64xf32> -> vector<1x8x64xf32>
    %203 = vector.shape_cast %202 : vector<1x8x64xf32> to vector<8x64xf32>
    %204 = tpu.concatenate %200, %195, %203 in 1 : vector<8x64xf32>, vector<8x64xf32>, vector<8x64xf32> -> vector<8x192xf32>
    %c0_133 = arith.constant 0 : index
    %c0_134 = arith.constant 0 : index
    %205 = vector.load %arg15[%c0_133, %c0_134] : memref<192x64xbf16, #tpu.memory_space<vmem>>, vector<192x64xbf16>
    %206 = arith.truncf %204 : vector<8x192xf32> to vector<8x192xbf16>
    %cst_135 = arith.constant dense<0.000000e+00> : vector<8x64xf32>
    %207 = tpu.matmul %206, %205, %cst_135 {dimension_numbers = #tpu.dot_dimension_numbers<[1], [0], [0], [1], [0, 0, 1, 1], [], []>} : vector<8x192xbf16>, vector<192x64xbf16>, vector<8x64xf32> -> vector<8x64xf32>
    %c0_136 = arith.constant 0 : index
    %c0_137 = arith.constant 0 : index
    %208 = vector.load %arg16[%c0_136, %c0_137] : memref<1x64xf32, #tpu.memory_space<vmem>>, vector<1x64xf32>
    %209 = vector.broadcast %208 : vector<1x64xf32> to vector<8x64xf32>
    %210 = arith.mulf %207, %209 : vector<8x64xf32>
    %c0_138 = arith.constant 0 : index
    %c0_139 = arith.constant 0 : index
    %211 = vector.load %arg17[%c0_138, %c0_139] : memref<1x64xf32, #tpu.memory_space<vmem>>, vector<1x64xf32>
    %212 = vector.broadcast %211 : vector<1x64xf32> to vector<8x64xf32>
    %213 = arith.addf %210, %212 : vector<8x64xf32>
    %cst_140 = arith.constant 0.000000e+00 : f32
    %214 = vector.broadcast %cst_140 : f32 to vector<8x64xf32>
    %215 = arith.maximumf %213, %214 : vector<8x64xf32>
    %216 = vector.shape_cast %215 : vector<8x64xf32> to vector<1x8x64xf32>
    %cst_141 = arith.constant dense<0.000000e+00> : vector<1x64xf32>
    %217 = vector.multi_reduction <add>, %216, %cst_141 [1] : vector<1x8x64xf32> to vector<1x64xf32>
    %cst_142 = arith.constant 8.000000e+00 : f32
    %218 = vector.broadcast %cst_142 : f32 to vector<1x64xf32>
    %219 = arith.divf %217, %218 : vector<1x64xf32>
    %c0_143 = arith.constant 0 : index
    %c0_144 = arith.constant 0 : index
    %220 = vector.load %arg18[%c0_143, %c0_144] : memref<64x7xbf16, #tpu.memory_space<vmem>>, vector<64x7xbf16>
    %221 = arith.truncf %219 : vector<1x64xf32> to vector<1x64xbf16>
    %cst_145 = arith.constant dense<0.000000e+00> : vector<1x7xf32>
    %222 = tpu.matmul %221, %220, %cst_145 {dimension_numbers = #tpu.dot_dimension_numbers<[1], [0], [0], [1], [0, 0, 1, 1], [], []>} : vector<1x64xbf16>, vector<64x7xbf16>, vector<1x7xf32> -> vector<1x7xf32>
    %c0_146 = arith.constant 0 : index
    %c0_147 = arith.constant 0 : index
    %223 = vector.load %arg19[%c0_146, %c0_147] : memref<1x7xf32, #tpu.memory_space<vmem>>, vector<1x7xf32>
    %224 = arith.addf %222, %223 : vector<1x7xf32>
    %c0_148 = arith.constant 0 : index
    %c0_149 = arith.constant 0 : index
    %c0_150 = arith.constant 0 : index
    %225 = vector.load %arg20[%c0_148, %c0_149, %c0_150] : memref<1x1x7xf32, #tpu.memory_space<vmem>>, vector<1x1x7xf32>
    %226 = vector.shape_cast %225 : vector<1x1x7xf32> to vector<1x7xf32>
    %227 = vector.shape_cast %224 : vector<1x7xf32> to vector<1x1x7xf32>
    tpu.vector_store %arg20[%c0_148, %c0_149, %c0_150], %227 {strides = array<i32>} : memref<1x1x7xf32, #tpu.memory_space<vmem>>, vector<1x1x7xf32>,
    return
  }
  func.func @transform_0(%arg0: i32) -> (i32, i32) {
    %c0_i32 = arith.constant 0 : i32
    %c0_i32_0 = arith.constant 0 : i32
    return %arg0, %c0_i32 : i32, i32
  }
  func.func @transform_1(%arg0: i32) -> (i32, i32) {
    %c0_i32 = arith.constant 0 : i32
    %c0_i32_0 = arith.constant 0 : i32
    %c0_i32_1 = arith.constant 0 : i32
    return %c0_i32, %c0_i32_0 : i32, i32
  }
  func.func @transform_2(%arg0: i32) -> (i32, i32) {
    %c0_i32 = arith.constant 0 : i32
    %c0_i32_0 = arith.constant 0 : i32
    %c0_i32_1 = arith.constant 0 : i32
    return %c0_i32, %c0_i32_0 : i32, i32
  }
  func.func @transform_3(%arg0: i32) -> (i32, i32) {
    %c0_i32 = arith.constant 0 : i32
    %c0_i32_0 = arith.constant 0 : i32
    %c0_i32_1 = arith.constant 0 : i32
    return %c0_i32, %c0_i32_0 : i32, i32
  }
  func.func @transform_4(%arg0: i32) -> (i32, i32) {
    %c0_i32 = arith.constant 0 : i32
    %c0_i32_0 = arith.constant 0 : i32
    %c0_i32_1 = arith.constant 0 : i32
    return %c0_i32, %c0_i32_0 : i32, i32
  }
  func.func @transform_5(%arg0: i32) -> (i32, i32) {
    %c0_i32 = arith.constant 0 : i32
    %c0_i32_0 = arith.constant 0 : i32
    %c0_i32_1 = arith.constant 0 : i32
    return %c0_i32, %c0_i32_0 : i32, i32
  }
  func.func @transform_6(%arg0: i32) -> (i32, i32) {
    %c0_i32 = arith.constant 0 : i32
    %c0_i32_0 = arith.constant 0 : i32
    %c0_i32_1 = arith.constant 0 : i32
    return %c0_i32, %c0_i32_0 : i32, i32
  }
  func.func @transform_7(%arg0: i32) -> (i32, i32) {
    %c0_i32 = arith.constant 0 : i32
    %c0_i32_0 = arith.constant 0 : i32
    %c0_i32_1 = arith.constant 0 : i32
    return %c0_i32, %c0_i32_0 : i32, i32
  }
  func.func @transform_8(%arg0: i32) -> (i32, i32, i32) {
    %c0_i32 = arith.constant 0 : i32
    %c0_i32_0 = arith.constant 0 : i32
    %c0_i32_1 = arith.constant 0 : i32
    %c0_i32_2 = arith.constant 0 : i32
    return %c0_i32, %c0_i32_0, %c0_i32_1 : i32, i32, i32
  }
  func.func @transform_9(%arg0: i32) -> (i32, i32, i32) {
    %c0_i32 = arith.constant 0 : i32
    %c0_i32_0 = arith.constant 0 : i32
    %c0_i32_1 = arith.constant 0 : i32
    %c0_i32_2 = arith.constant 0 : i32
    return %c0_i32, %c0_i32_0, %c0_i32_1 : i32, i32, i32
  }
  func.func @transform_10(%arg0: i32) -> (i32, i32, i32) {
    %c0_i32 = arith.constant 0 : i32
    %c0_i32_0 = arith.constant 0 : i32
    %c0_i32_1 = arith.constant 0 : i32
    %c0_i32_2 = arith.constant 0 : i32
    return %c0_i32, %c0_i32_0, %c0_i32_1 : i32, i32, i32
  }
  func.func @transform_11(%arg0: i32) -> (i32, i32, i32) {
    %c0_i32 = arith.constant 0 : i32
    %c0_i32_0 = arith.constant 0 : i32
    %c0_i32_1 = arith.constant 0 : i32
    %c0_i32_2 = arith.constant 0 : i32
    return %c0_i32, %c0_i32_0, %c0_i32_1 : i32, i32, i32
  }
  func.func @transform_12(%arg0: i32) -> (i32, i32, i32) {
    %c0_i32 = arith.constant 0 : i32
    %c0_i32_0 = arith.constant 0 : i32
    %c0_i32_1 = arith.constant 0 : i32
    %c0_i32_2 = arith.constant 0 : i32
    return %c0_i32, %c0_i32_0, %c0_i32_1 : i32, i32, i32
  }
  func.func @transform_13(%arg0: i32) -> (i32, i32, i32) {
    %c0_i32 = arith.constant 0 : i32
    %c0_i32_0 = arith.constant 0 : i32
    %c0_i32_1 = arith.constant 0 : i32
    %c0_i32_2 = arith.constant 0 : i32
    return %c0_i32, %c0_i32_0, %c0_i32_1 : i32, i32, i32
  }
  func.func @transform_14(%arg0: i32) -> (i32, i32) {
    %c0_i32 = arith.constant 0 : i32
    %c0_i32_0 = arith.constant 0 : i32
    %c0_i32_1 = arith.constant 0 : i32
    return %c0_i32, %c0_i32_0 : i32, i32
  }
  func.func @transform_15(%arg0: i32) -> (i32, i32) {
    %c0_i32 = arith.constant 0 : i32
    %c0_i32_0 = arith.constant 0 : i32
    %c0_i32_1 = arith.constant 0 : i32
    return %c0_i32, %c0_i32_0 : i32, i32
  }
  func.func @transform_16(%arg0: i32) -> (i32, i32) {
    %c0_i32 = arith.constant 0 : i32
    %c0_i32_0 = arith.constant 0 : i32
    %c0_i32_1 = arith.constant 0 : i32
    return %c0_i32, %c0_i32_0 : i32, i32
  }
  func.func @transform_17(%arg0: i32) -> (i32, i32) {
    %c0_i32 = arith.constant 0 : i32
    %c0_i32_0 = arith.constant 0 : i32
    %c0_i32_1 = arith.constant 0 : i32
    return %c0_i32, %c0_i32_0 : i32, i32
  }
  func.func @transform_18(%arg0: i32) -> (i32, i32) {
    %c0_i32 = arith.constant 0 : i32
    %c0_i32_0 = arith.constant 0 : i32
    %c0_i32_1 = arith.constant 0 : i32
    return %c0_i32, %c0_i32_0 : i32, i32
  }
  func.func @transform_19(%arg0: i32) -> (i32, i32, i32) {
    %c0_i32 = arith.constant 0 : i32
    %c0_i32_0 = arith.constant 0 : i32
    %c0_i32_1 = arith.constant 0 : i32
    return %arg0, %c0_i32, %c0_i32_0 : i32, i32, i32
  }
}

</mosaic_0001>

<llo_original>
// kernel: tpu_custom_call.1
$region0: #{tpu_custom_call.1}
  #allocation0 [shape = 'u32[]', space=smem, size = 0x4, offset = 0x4, fixed_abs, tag = 'smem constant byte address 0x4 - core index']
  #allocation1 [shape = 'u32[72,128]{1,0:T(1,128)}', space=vmem, size = 0x9000, scoped, tag = 'internal scratch']
  %s0 = inlined_call_operand.vmem [shape: f32[384,3], index: 0, kind: input, shape index: {}]
  %s1 = inlined_call_operand.vmem [shape: bf16[3,128], index: 1, kind: input, shape index: {}]
  %s2 = inlined_call_operand.vmem [shape: f32[1,128], index: 2, kind: input, shape index: {}]
  %s3 = inlined_call_operand.hbm [shape: bf16[96,96], index: 3, kind: input, shape index: {}]
  %s4 = inlined_call_operand.vmem [shape: f32[1,64], index: 4, kind: input, shape index: {}]
  %s5 = inlined_call_operand.vmem [shape: f32[1,64], index: 5, kind: input, shape index: {}]
  %s6 = inlined_call_operand.hbm [shape: bf16[64,64], index: 6, kind: input, shape index: {}]
  %s7 = inlined_call_operand.vmem [shape: f32[1,64], index: 7, kind: input, shape index: {}]
  %s8 = inlined_call_operand.vmem [shape: bf16[5,96,96], index: 8, kind: input, shape index: {}]
  %s9 = inlined_call_operand.vmem [shape: bf16[5,64,64], index: 9, kind: input, shape index: {}]
  %s10 = inlined_call_operand.vmem [shape: f32[5,1,64], index: 10, kind: input, shape index: {}]
  %s11 = inlined_call_operand.vmem [shape: f32[5,1,64], index: 11, kind: input, shape index: {}]
  %s12 = inlined_call_operand.vmem [shape: bf16[5,64,64], index: 12, kind: input, shape index: {}]
  %s13 = inlined_call_operand.vmem [shape: f32[5,1,64], index: 13, kind: input, shape index: {}]
  %s14 = inlined_call_operand.vmem [shape: bf16[192,64], index: 14, kind: input, shape index: {}]
  %s15 = inlined_call_operand.vmem [shape: f32[1,64], index: 15, kind: input, shape index: {}]
  %s16 = inlined_call_operand.vmem [shape: f32[1,64], index: 16, kind: input, shape index: {}]
  %s17 = inlined_call_operand.vmem [shape: bf16[64,7], index: 17, kind: input, shape index: {}]
  %s18 = inlined_call_operand.vmem [shape: f32[1,7], index: 18, kind: input, shape index: {}]
  %s19 = inlined_call_operand.hbm [shape: f32[2,1,7], index: 19, kind: output, shape index: {}]
  %s20 = sld [smem:[#allocation0]]
  $region117: #{tpu_custom_call.1} parent=0
    _
  %s22 = ssub.s32 1, %s20
  %s23 = scalar_select 0, %s22, %s20
  $region1: #{tpu_custom_call.1} parent=0
    #allocation2 [shape = 'u8[24576]{0}', space=vmem, size = 0x6000, scoped, tag = 'input window, operand 3, single buffered']
    #allocation3 [shape = 's32[2]{0}', space=sflag, size = 0x8, scoped, tag = 'scoped memory for tpu_custom_call.1']
    #allocation4 [shape = 's32[2]{0}', space=sflag, size = 0x8, scoped, tag = 'scoped memory for tpu_custom_call.1']
    #allocation5 [shape = 'u8[16384]{0}', space=vmem, size = 0x4000, scoped, tag = 'input window, operand 6, single buffered']
    #allocation6 [shape = 's32[1]{0}', space=sflag, size = 0x4, scoped, tag = 'scoped memory for tpu_custom_call.1']
    #allocation7 [shape = 'u8[1024]{0}', space=vmem, size = 0x400, scoped, tag = 'output window, operand 0']
    %24 = vsyncpa [#allocation3], 0
    %25 = vsyncpa [#allocation6], 0
    %26 = vsyncpa [#allocation4], 0
    %s27 = scalar_lea.sflag [#allocation4], 1
    %28 = vsyncpa %s27, 0
    loop: start=0, step=1, limit=4
    $region2: #{tpu_custom_call.1} parent=1 // loop_pre_header
      _
    $region3: #{tpu_custom_call.1} parent=1 // loop_header
      %s30 = sphi 0, %s34
      %p31 = scmp.ge.s32.totalorder %s30, 4
      %s40 = sphi 0, %s42
      %s43 = sphi 0, %s40
      %s44 = sphi 0, %s43
      %s60 = sphi 0, %s44
      %s64 = sphi 0, %s64
      %s66 = sphi 0, %s64
      %s67 = sphi 0, %s66
      %s81 = sphi 0, %s67
      %s85 = sphi 0, %s85
      %s87 = sphi 0, %s85
      %s88 = sphi 0, %s87
      %s102 = sphi 0, %s88
      %s106 = sphi 0, %s106
      %s108 = sphi 0, %s106
      %s109 = sphi 0, %s108
      %s123 = sphi 0, %s109
      %s127 = sphi 0, %s127
      %s129 = sphi 0, %s127
      %s130 = sphi 0, %s129
      %s144 = sphi 0, %s130
      %s148 = sphi 0, %s148
      %s150 = sphi 0, %s148
      %s151 = sphi 0, %s150
      %s165 = sphi 0, %s151
      %s169 = sphi 0, %s169
      %s171 = sphi 0, %s169
      %s172 = sphi 0, %s171
      %s186 = sphi 0, %s172
      %s190 = sphi 0, %s190
      %s192 = sphi 0, %s190
      %s193 = sphi 0, %s192
      %s207 = sphi 0, %s193
      %s211 = sphi 0, %s211
      %s213 = sphi 0, %s211
      %s214 = sphi 0, %s213
      %s228 = sphi 0, %s214
      %s232 = sphi 0, %s232
      %s234 = sphi 0, %s232
      %s235 = sphi 0, %s234
      %s249 = sphi 0, %s235
      %s253 = sphi 0, %s253
      %s255 = sphi 0, %s253
      %s256 = sphi 0, %s255
      %s270 = sphi 0, %s256
      %s274 = sphi 0, %s274
      %s276 = sphi 0, %s274
      %s277 = sphi 0, %s276
      %s291 = sphi 0, %s277
      %s295 = sphi 0, %s295
      %s297 = sphi 0, %s295
      %s298 = sphi 0, %s297
      %s312 = sphi 0, %s298
      %s316 = sphi 0, %s316
      %s318 = sphi 0, %s316
      %s319 = sphi 0, %s318
      %s333 = sphi 0, %s319
      %s337 = sphi 0, %s337
      %s339 = sphi 0, %s337
      %s340 = sphi 0, %s339
      %s354 = sphi 0, %s340
      %s358 = sphi 0, %s358
      %s360 = sphi 0, %s358
      %s361 = sphi 0, %s360
      %s375 = sphi 0, %s361
      %s379 = sphi 0, %s379
      %s381 = sphi 0, %s379
      %s382 = sphi 0, %s381
      %s396 = sphi 0, %s382
      %s400 = sphi 0, %s400
      %s402 = sphi 0, %s400
      %s403 = sphi 0, %s402
      %s417 = sphi 0, %s403
      %s421 = sphi 0, %s421
      %s423 = sphi 0, %s421
      %s424 = sphi 0, %s423
      %s438 = sphi 0, %s424
      %s444 = sphi 0, %s446
      %s447 = sphi 0, %s444
      %s448 = sphi 0, %s447
      %s464 = sphi 0, %s448
    $region4: #{tpu_custom_call.1} parent=1 // loop_header_branch
      %33 = sbr.rel (%p31) target = $region8
    $region5: #{tpu_custom_call.1} parent=1 // loop_body
      %s35 = ssub.s32 %s30, 1
      %s36 = ssub.s32 %s30, 2
      %s37 = sadd.s32 %s30, 1
      %s38 = ssub.s32 %s30, %s37
      %p39 = scmp.eq.s32.totalorder %s38, 0
      %s41 = sadd.s32 %s40, 1
      %s42 = scalar_select %p39, %s40, %s41
      %p45 = pneg %p39
      %p46 = scmp.eq.s32.totalorder %s30, 1
      %p47 = por %p45, %p46
      %p48 = scmp.ne.s32.totalorder %s40, %s43
      %p49 = scmp.eq.s32.totalorder %s30, 0
      %p50 = por %p48, %p49
      %p51 = scmp.ne.s32.totalorder %s40, %s43
      %p52 = scmp.eq.s32.totalorder %s35, 1
      %p53 = por %p51, %p52
      %p54 = scmp.ne.s32.totalorder %s43, %s44
      %p55 = scmp.eq.s32.totalorder %s35, 0
      %p56 = por %p54, %p55
      %p57 = scmp.ne.s32.totalorder %s43, %s44
      %p58 = scmp.eq.s32.totalorder %s36, 1
      %p59 = por %p57, %p58
      %p61 = scmp.ne.s32.totalorder %s44, %s60
      %p62 = scmp.eq.s32.totalorder %s36, 0
      %p63 = por %p61, %p62
      %s65 = sadd.s32 %s64, 1
      %p68 = scmp.eq.s32.totalorder %s30, 1
      %p69 = scmp.ne.s32.totalorder %s64, %s66
      %p70 = scmp.eq.s32.totalorder %s30, 0
      %p71 = por %p69, %p70
      %p72 = scmp.ne.s32.totalorder %s64, %s66
      %p73 = scmp.eq.s32.totalorder %s35, 1
      %p74 = por %p72, %p73
      %p75 = scmp.ne.s32.totalorder %s66, %s67
      %p76 = scmp.eq.s32.totalorder %s35, 0
      %p77 = por %p75, %p76
      %p78 = scmp.ne.s32.totalorder %s66, %s67
      %p79 = scmp.eq.s32.totalorder %s36, 1
      %p80 = por %p78, %p79
      %p82 = scmp.ne.s32.totalorder %s67, %s81
      %p83 = scmp.eq.s32.totalorder %s36, 0
      %p84 = por %p82, %p83
      %s86 = sadd.s32 %s85, 1
      %p89 = scmp.eq.s32.totalorder %s30, 1
      %p90 = scmp.ne.s32.totalorder %s85, %s87
      %p91 = scmp.eq.s32.totalorder %s30, 0
      %p92 = por %p90, %p91
      %p93 = scmp.ne.s32.totalorder %s85, %s87
      %p94 = scmp.eq.s32.totalorder %s35, 1
      %p95 = por %p93, %p94
      %p96 = scmp.ne.s32.totalorder %s87, %s88
      %p97 = scmp.eq.s32.totalorder %s35, 0
      %p98 = por %p96, %p97
      %p99 = scmp.ne.s32.totalorder %s87, %s88
      %p100 = scmp.eq.s32.totalorder %s36, 1
      %p101 = por %p99, %p100
      %p103 = scmp.ne.s32.totalorder %s88, %s102
      %p104 = scmp.eq.s32.totalorder %s36, 0
      %p105 = por %p103, %p104
      %s107 = sadd.s32 %s106, 1
      %p110 = scmp.eq.s32.totalorder %s30, 1
      %p111 = scmp.ne.s32.totalorder %s106, %s108
      %p112 = scmp.eq.s32.totalorder %s30, 0
      %p113 = por %p111, %p112
      %p114 = scmp.ne.s32.totalorder %s106, %s108
      %p115 = scmp.eq.s32.totalorder %s35, 1
      %p116 = por %p114, %p115
      %p117 = scmp.ne.s32.totalorder %s108, %s109
      %p118 = scmp.eq.s32.totalorder %s35, 0
      %p119 = por %p117, %p118
      %p120 = scmp.ne.s32.totalorder %s108, %s109
      %p121 = scmp.eq.s32.totalorder %s36, 1
      %p122 = por %p120, %p121
      %p124 = scmp.ne.s32.totalorder %s109, %s123
      %p125 = scmp.eq.s32.totalorder %s36, 0
      %p126 = por %p124, %p125
      %s128 = sadd.s32 %s127, 1
      %p131 = scmp.eq.s32.totalorder %s30, 1
      %p132 = scmp.ne.s32.totalorder %s127, %s129
      %p133 = scmp.eq.s32.totalorder %s30, 0
      %p134 = por %p132, %p133
      %p135 = scmp.ne.s32.totalorder %s127, %s129
      %p136 = scmp.eq.s32.totalorder %s35, 1
      %p137 = por %p135, %p136
      %p138 = scmp.ne.s32.totalorder %s129, %s130
      %p139 = scmp.eq.s32.totalorder %s35, 0
      %p140 = por %p138, %p139
      %p141 = scmp.ne.s32.totalorder %s129, %s130
      %p142 = scmp.eq.s32.totalorder %s36, 1
      %p143 = por %p141, %p142
      %p145 = scmp.ne.s32.totalorder %s130, %s144
      %p146 = scmp.eq.s32.totalorder %s36, 0
      %p147 = por %p145, %p146
      %s149 = sadd.s32 %s148, 1
      %p152 = scmp.eq.s32.totalorder %s30, 1
      %p153 = scmp.ne.s32.totalorder %s148, %s150
      %p154 = scmp.eq.s32.totalorder %s30, 0
      %p155 = por %p153, %p154
      %p156 = scmp.ne.s32.totalorder %s148, %s150
      %p157 = scmp.eq.s32.totalorder %s35, 1
      %p158 = por %p156, %p157
      %p159 = scmp.ne.s32.totalorder %s150, %s151
      %p160 = scmp.eq.s32.totalorder %s35, 0
      %p161 = por %p159, %p160
      %p162 = scmp.ne.s32.totalorder %s150, %s151
      %p163 = scmp.eq.s32.totalorder %s36, 1
      %p164 = por %p162, %p163
      %p166 = scmp.ne.s32.totalorder %s151, %s165
      %p167 = scmp.eq.s32.totalorder %s36, 0
      %p168 = por %p166, %p167
      %s170 = sadd.s32 %s169, 1
      %p173 = scmp.eq.s32.totalorder %s30, 1
      %p174 = scmp.ne.s32.totalorder %s169, %s171
      %p175 = scmp.eq.s32.totalorder %s30, 0
      %p176 = por %p174, %p175
      %p177 = scmp.ne.s32.totalorder %s169, %s171
      %p178 = scmp.eq.s32.totalorder %s35, 1
      %p179 = por %p177, %p178
      %p180 = scmp.ne.s32.totalorder %s171, %s172
      %p181 = scmp.eq.s32.totalorder %s35, 0
      %p182 = por %p180, %p181
      %p183 = scmp.ne.s32.totalorder %s171, %s172
      %p184 = scmp.eq.s32.totalorder %s36, 1
      %p185 = por %p183, %p184
      %p187 = scmp.ne.s32.totalorder %s172, %s186
      %p188 = scmp.eq.s32.totalorder %s36, 0
      %p189 = por %p187, %p188
      %s191 = sadd.s32 %s190, 1
      %p194 = scmp.eq.s32.totalorder %s30, 1
      %p195 = scmp.ne.s32.totalorder %s190, %s192
      %p196 = scmp.eq.s32.totalorder %s30, 0
      %p197 = por %p195, %p196
      %p198 = scmp.ne.s32.totalorder %s190, %s192
      %p199 = scmp.eq.s32.totalorder %s35, 1
      %p200 = por %p198, %p199
      %p201 = scmp.ne.s32.totalorder %s192, %s193
      %p202 = scmp.eq.s32.totalorder %s35, 0
      %p203 = por %p201, %p202
      %p204 = scmp.ne.s32.totalorder %s192, %s193
      %p205 = scmp.eq.s32.totalorder %s36, 1
      %p206 = por %p204, %p205
      %p208 = scmp.ne.s32.totalorder %s193, %s207
      %p209 = scmp.eq.s32.totalorder %s36, 0
      %p210 = por %p208, %p209
      %s212 = sadd.s32 %s211, 1
      %p215 = scmp.eq.s32.totalorder %s30, 1
      %p216 = scmp.ne.s32.totalorder %s211, %s213
      %p217 = scmp.eq.s32.totalorder %s30, 0
      %p218 = por %p216, %p217
      %p219 = scmp.ne.s32.totalorder %s211, %s213
      %p220 = scmp.eq.s32.totalorder %s35, 1
      %p221 = por %p219, %p220
      %p222 = scmp.ne.s32.totalorder %s213, %s214
      %p223 = scmp.eq.s32.totalorder %s35, 0
      %p224 = por %p222, %p223
      %p225 = scmp.ne.s32.totalorder %s213, %s214
      %p226 = scmp.eq.s32.totalorder %s36, 1
      %p227 = por %p225, %p226
      %p229 = scmp.ne.s32.totalorder %s214, %s228
      %p230 = scmp.eq.s32.totalorder %s36, 0
      %p231 = por %p229, %p230
      %s233 = sadd.s32 %s232, 1
      %p236 = scmp.eq.s32.totalorder %s30, 1
      %p237 = scmp.ne.s32.totalorder %s232, %s234
      %p238 = scmp.eq.s32.totalorder %s30, 0
      %p239 = por %p237, %p238
      %p240 = scmp.ne.s32.totalorder %s232, %s234
      %p241 = scmp.eq.s32.totalorder %s35, 1
      %p242 = por %p240, %p241
      %p243 = scmp.ne.s32.totalorder %s234, %s235
      %p244 = scmp.eq.s32.totalorder %s35, 0
      %p245 = por %p243, %p244
      %p246 = scmp.ne.s32.totalorder %s234, %s235
      %p247 = scmp.eq.s32.totalorder %s36, 1
      %p248 = por %p246, %p247
      %p250 = scmp.ne.s32.totalorder %s235, %s249
      %p251 = scmp.eq.s32.totalorder %s36, 0
      %p252 = por %p250, %p251
      %s254 = sadd.s32 %s253, 1
      %p257 = scmp.eq.s32.totalorder %s30, 1
      %p258 = scmp.ne.s32.totalorder %s253, %s255
      %p259 = scmp.eq.s32.totalorder %s30, 0
      %p260 = por %p258, %p259
      %p261 = scmp.ne.s32.totalorder %s253, %s255
      %p262 = scmp.eq.s32.totalorder %s35, 1
      %p263 = por %p261, %p262
      %p264 = scmp.ne.s32.totalorder %s255, %s256
      %p265 = scmp.eq.s32.totalorder %s35, 0
      %p266 = por %p264, %p265
      %p267 = scmp.ne.s32.totalorder %s255, %s256
      %p268 = scmp.eq.s32.totalorder %s36, 1
      %p269 = por %p267, %p268
      %p271 = scmp.ne.s32.totalorder %s256, %s270
      %p272 = scmp.eq.s32.totalorder %s36, 0
      %p273 = por %p271, %p272
      %s275 = sadd.s32 %s274, 1
      %p278 = scmp.eq.s32.totalorder %s30, 1
      %p279 = scmp.ne.s32.totalorder %s274, %s276
      %p280 = scmp.eq.s32.totalorder %s30, 0
      %p281 = por %p279, %p280
      %p282 = scmp.ne.s32.totalorder %s274, %s276
      %p283 = scmp.eq.s32.totalorder %s35, 1
      %p284 = por %p282, %p283
      %p285 = scmp.ne.s32.totalorder %s276, %s277
      %p286 = scmp.eq.s32.totalorder %s35, 0
      %p287 = por %p285, %p286
      %p288 = scmp.ne.s32.totalorder %s276, %s277
      %p289 = scmp.eq.s32.totalorder %s36, 1
      %p290 = por %p288, %p289
      %p292 = scmp.ne.s32.totalorder %s277, %s291
      %p293 = scmp.eq.s32.totalorder %s36, 0
      %p294 = por %p292, %p293
      %s296 = sadd.s32 %s295, 1
      %p299 = scmp.eq.s32.totalorder %s30, 1
      %p300 = scmp.ne.s32.totalorder %s295, %s297
      %p301 = scmp.eq.s32.totalorder %s30, 0
      %p302 = por %p300, %p301
      %p303 = scmp.ne.s32.totalorder %s295, %s297
      %p304 = scmp.eq.s32.totalorder %s35, 1
      %p305 = por %p303, %p304
      %p306 = scmp.ne.s32.totalorder %s297, %s298
      %p307 = scmp.eq.s32.totalorder %s35, 0
      %p308 = por %p306, %p307
      %p309 = scmp.ne.s32.totalorder %s297, %s298
      %p310 = scmp.eq.s32.totalorder %s36, 1
      %p311 = por %p309, %p310
      %p313 = scmp.ne.s32.totalorder %s298, %s312
      %p314 = scmp.eq.s32.totalorder %s36, 0
      %p315 = por %p313, %p314
      %s317 = sadd.s32 %s316, 1
      %p320 = scmp.eq.s32.totalorder %s30, 1
      %p321 = scmp.ne.s32.totalorder %s316, %s318
      %p322 = scmp.eq.s32.totalorder %s30, 0
      %p323 = por %p321, %p322
      %p324 = scmp.ne.s32.totalorder %s316, %s318
      %p325 = scmp.eq.s32.totalorder %s35, 1
      %p326 = por %p324, %p325
      %p327 = scmp.ne.s32.totalorder %s318, %s319
      %p328 = scmp.eq.s32.totalorder %s35, 0
      %p329 = por %p327, %p328
      %p330 = scmp.ne.s32.totalorder %s318, %s319
      %p331 = scmp.eq.s32.totalorder %s36, 1
      %p332 = por %p330, %p331
      %p334 = scmp.ne.s32.totalorder %s319, %s333
      %p335 = scmp.eq.s32.totalorder %s36, 0
      %p336 = por %p334, %p335
      %s338 = sadd.s32 %s337, 1
      %p341 = scmp.eq.s32.totalorder %s30, 1
      %p342 = scmp.ne.s32.totalorder %s337, %s339
      %p343 = scmp.eq.s32.totalorder %s30, 0
      %p344 = por %p342, %p343
      %p345 = scmp.ne.s32.totalorder %s337, %s339
      %p346 = scmp.eq.s32.totalorder %s35, 1
      %p347 = por %p345, %p346
      %p348 = scmp.ne.s32.totalorder %s339, %s340
      %p349 = scmp.eq.s32.totalorder %s35, 0
      %p350 = por %p348, %p349
      %p351 = scmp.ne.s32.totalorder %s339, %s340
      %p352 = scmp.eq.s32.totalorder %s36, 1
      %p353 = por %p351, %p352
      %p355 = scmp.ne.s32.totalorder %s340, %s354
      %p356 = scmp.eq.s32.totalorder %s36, 0
      %p357 = por %p355, %p356
      %s359 = sadd.s32 %s358, 1
      %p362 = scmp.eq.s32.totalorder %s30, 1
      %p363 = scmp.ne.s32.totalorder %s358, %s360
      %p364 = scmp.eq.s32.totalorder %s30, 0
      %p365 = por %p363, %p364
      %p366 = scmp.ne.s32.totalorder %s358, %s360
      %p367 = scmp.eq.s32.totalorder %s35, 1
      %p368 = por %p366, %p367
      %p369 = scmp.ne.s32.totalorder %s360, %s361
      %p370 = scmp.eq.s32.totalorder %s35, 0
      %p371 = por %p369, %p370
      %p372 = scmp.ne.s32.totalorder %s360, %s361
      %p373 = scmp.eq.s32.totalorder %s36, 1
      %p374 = por %p372, %p373
      %p376 = scmp.ne.s32.totalorder %s361, %s375
      %p377 = scmp.eq.s32.totalorder %s36, 0
      %p378 = por %p376, %p377
      %s380 = sadd.s32 %s379, 1
      %p383 = scmp.eq.s32.totalorder %s30, 1
      %p384 = scmp.ne.s32.totalorder %s379, %s381
      %p385 = scmp.eq.s32.totalorder %s30, 0
      %p386 = por %p384, %p385
      %p387 = scmp.ne.s32.totalorder %s379, %s381
      %p388 = scmp.eq.s32.totalorder %s35, 1
      %p389 = por %p387, %p388
      %p390 = scmp.ne.s32.totalorder %s381, %s382
      %p391 = scmp.eq.s32.totalorder %s35, 0
      %p392 = por %p390, %p391
      %p393 = scmp.ne.s32.totalorder %s381, %s382
      %p394 = scmp.eq.s32.totalorder %s36, 1
      %p395 = por %p393, %p394
      %p397 = scmp.ne.s32.totalorder %s382, %s396
      %p398 = scmp.eq.s32.totalorder %s36, 0
      %p399 = por %p397, %p398
      %s401 = sadd.s32 %s400, 1
      %p404 = scmp.eq.s32.totalorder %s30, 1
      %p405 = scmp.ne.s32.totalorder %s400, %s402
      %p406 = scmp.eq.s32.totalorder %s30, 0
      %p407 = por %p405, %p406
      %p408 = scmp.ne.s32.totalorder %s400, %s402
      %p409 = scmp.eq.s32.totalorder %s35, 1
      %p410 = por %p408, %p409
      %p411 = scmp.ne.s32.totalorder %s402, %s403
      %p412 = scmp.eq.s32.totalorder %s35, 0
      %p413 = por %p411, %p412
      %p414 = scmp.ne.s32.totalorder %s402, %s403
      %p415 = scmp.eq.s32.totalorder %s36, 1
      %p416 = por %p414, %p415
      %p418 = scmp.ne.s32.totalorder %s403, %s417
      %p419 = scmp.eq.s32.totalorder %s36, 0
      %p420 = por %p418, %p419
      %s422 = sadd.s32 %s421, 1
      %p425 = scmp.eq.s32.totalorder %s30, 1
      %p426 = scmp.ne.s32.totalorder %s421, %s423
      %p427 = scmp.eq.s32.totalorder %s30, 0
      %p428 = por %p426, %p427
      %p429 = scmp.ne.s32.totalorder %s421, %s423
      %p430 = scmp.eq.s32.totalorder %s35, 1
      %p431 = por %p429, %p430
      %p432 = scmp.ne.s32.totalorder %s423, %s424
      %p433 = scmp.eq.s32.totalorder %s35, 0
      %p434 = por %p432, %p433
      %p435 = scmp.ne.s32.totalorder %s423, %s424
      %p436 = scmp.eq.s32.totalorder %s36, 1
      %p437 = por %p435, %p436
      %p439 = scmp.ne.s32.totalorder %s424, %s438
      %p440 = scmp.eq.s32.totalorder %s36, 0
      %p441 = por %p439, %p440
      %s442 = ssub.s32 %s30, %s37
      %p443 = scmp.eq.s32.totalorder %s442, 0
      %s445 = sadd.s32 %s444, 1
      %s446 = scalar_select %p443, %s444, %s445
      %p449 = pneg %p443
      %p450 = scmp.eq.s32.totalorder %s30, 1
      %p451 = por %p449, %p450
      %p452 = scmp.ne.s32.totalorder %s444, %s447
      %p453 = scmp.eq.s32.totalorder %s30, 0
      %p454 = por %p452, %p453
      %p455 = scmp.ne.s32.totalorder %s444, %s447
      %p456 = scmp.eq.s32.totalorder %s35, 1
      %p457 = por %p455, %p456
      %p458 = scmp.ne.s32.totalorder %s447, %s448
      %p459 = scmp.eq.s32.totalorder %s35, 0
      %p460 = por %p458, %p459
      %p461 = scmp.ne.s32.totalorder %s447, %s448
      %p462 = scmp.eq.s32.totalorder %s36, 1
      %p463 = por %p461, %p462
      %p465 = scmp.ne.s32.totalorder %s448, %s464
      %p466 = scmp.eq.s32.totalorder %s36, 0
      %p467 = por %p465, %p466
      %p468 = scmp.le.s32.totalorder 1, %s30
      %p469 = scmp.lt.s32.totalorder %s30, 3
      %p470 = pnand %p468, %p469
      %p471 = pneg %p470
      // Predicated region
      $region9: #{tpu_custom_call.1} parent=5 // pred_check
        _
      $region10: #{tpu_custom_call.1} parent=5 // pred_check_branch
        %473 = sbr.rel (%p470) target = $region12
      $region11: #{tpu_custom_call.1} parent=5 // pred_region
        %s474 = ssub.s32 %s30, 1
        // Predicated region
        $region13: #{tpu_custom_call.1} parent=11 // pred_check
          %p475 = pneg %p77
        $region14: #{tpu_custom_call.1} parent=11 // pred_check_branch
          %477 = sbr.rel (%p475) target = $region16
        $region15: #{tpu_custom_call.1} parent=11 // pred_region
          _
        $region16: #{tpu_custom_call.1} parent=11 // pred_fallthru
          _
        // Predicated region
        $region17: #{tpu_custom_call.1} parent=11 // pred_check
          %p478 = pneg %p98
        $region18: #{tpu_custom_call.1} parent=11 // pred_check_branch
          %480 = sbr.rel (%p478) target = $region20
        $region19: #{tpu_custom_call.1} parent=11 // pred_region
          _
        $region20: #{tpu_custom_call.1} parent=11 // pred_fallthru
          _
        // Predicated region
        $region21: #{tpu_custom_call.1} parent=11 // pred_check
          %p481 = pneg %p119
        $region22: #{tpu_custom_call.1} parent=11 // pred_check_branch
          %483 = sbr.rel (%p481) target = $region24
        $region23: #{tpu_custom_call.1} parent=11 // pred_region
          %485 = vsyncadd [#allocation3], 0
          %s486 = sshll.u32 %s3, 4
          %s487 = int_to_ptr.hbm [resolvable:$true] %s486
          %s488 = sshll.u32 [#allocation2], 4
          %s489 = int_to_ptr.vmem [resolvable:$true] %s488
          %494 = dma.hbm_to_vmem [thread:$0]  %s487, 768, %s489, [#allocation3], 64, 64, 4
        $region24: #{tpu_custom_call.1} parent=11 // pred_fallthru
          _
        // Predicated region
        $region25: #{tpu_custom_call.1} parent=11 // pred_check
          %p495 = pneg %p140
        $region26: #{tpu_custom_call.1} parent=11 // pred_check_branch
          %497 = sbr.rel (%p495) target = $region28
        $region27: #{tpu_custom_call.1} parent=11 // pred_region
          _
        $region28: #{tpu_custom_call.1} parent=11 // pred_fallthru
          _
        // Predicated region
        $region29: #{tpu_custom_call.1} parent=11 // pred_check
          %p498 = pneg %p161
        $region30: #{tpu_custom_call.1} parent=11 // pred_check_branch
          %500 = sbr.rel (%p498) target = $region32
        $region31: #{tpu_custom_call.1} parent=11 // pred_region
          _
        $region32: #{tpu_custom_call.1} parent=11 // pred_fallthru
          _
        // Predicated region
        $region33: #{tpu_custom_call.1} parent=11 // pred_check
          %p501 = pneg %p182
        $region34: #{tpu_custom_call.1} parent=11 // pred_check_branch
          %503 = sbr.rel (%p501) target = $region36
        $region35: #{tpu_custom_call.1} parent=11 // pred_region
          %505 = vsyncadd [#allocation6], 0
          %s506 = sshll.u32 %s6, 4
          %s507 = int_to_ptr.hbm [resolvable:$true] %s506
          %s508 = sshll.u32 [#allocation5], 4
          %s509 = int_to_ptr.vmem [resolvable:$true] %s508
          %514 = dma.hbm_to_vmem [thread:$0]  %s507, 512, %s509, [#allocation6], 64, 64, 4
        $region36: #{tpu_custom_call.1} parent=11 // pred_fallthru
          _
        // Predicated region
        $region37: #{tpu_custom_call.1} parent=11 // pred_check
          %p515 = pneg %p203
        $region38: #{tpu_custom_call.1} parent=11 // pred_check_branch
          %517 = sbr.rel (%p515) target = $region40
        $region39: #{tpu_custom_call.1} parent=11 // pred_region
          _
        $region40: #{tpu_custom_call.1} parent=11 // pred_fallthru
          _
        // Predicated region
        $region41: #{tpu_custom_call.1} parent=11 // pred_check
          %p518 = pneg %p224
        $region42: #{tpu_custom_call.1} parent=11 // pred_check_branch
          %520 = sbr.rel (%p518) target = $region44
        $region43: #{tpu_custom_call.1} parent=11 // pred_region
          _
        $region44: #{tpu_custom_call.1} parent=11 // pred_fallthru
          _
        // Predicated region
        $region45: #{tpu_custom_call.1} parent=11 // pred_check
          %p521 = pneg %p245
        $region46: #{tpu_custom_call.1} parent=11 // pred_check_branch
          %523 = sbr.rel (%p521) target = $region48
        $region47: #{tpu_custom_call.1} parent=11 // pred_region
          _
        $region48: #{tpu_custom_call.1} parent=11 // pred_fallthru
          _
        // Predicated region
        $region49: #{tpu_custom_call.1} parent=11 // pred_check
          %p524 = pneg %p266
        $region50: #{tpu_custom_call.1} parent=11 // pred_check_branch
          %526 = sbr.rel (%p524) target = $region52
        $region51: #{tpu_custom_call.1} parent=11 // pred_region
          _
        $region52: #{tpu_custom_call.1} parent=11 // pred_fallthru
          _
        // Predicated region
        $region53: #{tpu_custom_call.1} parent=11 // pred_check
          %p527 = pneg %p287
        $region54: #{tpu_custom_call.1} parent=11 // pred_check_branch
          %529 = sbr.rel (%p527) target = $region56
        $region55: #{tpu_custom_call.1} parent=11 // pred_region
          _
        $region56: #{tpu_custom_call.1} parent=11 // pred_fallthru
          _
        // Predicated region
        $region57: #{tpu_custom_call.1} parent=11 // pred_check
          %p530 = pneg %p308
        $region58: #{tpu_custom_call.1} parent=11 // pred_check_branch
          %532 = sbr.rel (%p530) target = $region60
        $region59: #{tpu_custom_call.1} parent=11 // pred_region
          _
        $region60: #{tpu_custom_call.1} parent=11 // pred_fallthru
          _
        // Predicated region
        $region61: #{tpu_custom_call.1} parent=11 // pred_check
          %p533 = pneg %p329
        $region62: #{tpu_custom_call.1} parent=11 // pred_check_branch
          %535 = sbr.rel (%p533) target = $region64
        $region63: #{tpu_custom_call.1} parent=11 // pred_region
          _
        $region64: #{tpu_custom_call.1} parent=11 // pred_fallthru
          _
        // Predicated region
        $region65: #{tpu_custom_call.1} parent=11 // pred_check
          %p536 = pneg %p350
        $region66: #{tpu_custom_call.1} parent=11 // pred_check_branch
          %538 = sbr.rel (%p536) target = $region68
        $region67: #{tpu_custom_call.1} parent=11 // pred_region
          _
        $region68: #{tpu_custom_call.1} parent=11 // pred_fallthru
          _
        // Predicated region
        $region69: #{tpu_custom_call.1} parent=11 // pred_check
          %p539 = pneg %p371
        $region70: #{tpu_custom_call.1} parent=11 // pred_check_branch
          %541 = sbr.rel (%p539) target = $region72
        $region71: #{tpu_custom_call.1} parent=11 // pred_region
          _
        $region72: #{tpu_custom_call.1} parent=11 // pred_fallthru
          _
        // Predicated region
        $region73: #{tpu_custom_call.1} parent=11 // pred_check
          %p542 = pneg %p392
        $region74: #{tpu_custom_call.1} parent=11 // pred_check_branch
          %544 = sbr.rel (%p542) target = $region76
        $region75: #{tpu_custom_call.1} parent=11 // pred_region
          _
        $region76: #{tpu_custom_call.1} parent=11 // pred_fallthru
          _
        // Predicated region
        $region77: #{tpu_custom_call.1} parent=11 // pred_check
          %p545 = pneg %p413
        $region78: #{tpu_custom_call.1} parent=11 // pred_check_branch
          %547 = sbr.rel (%p545) target = $region80
        $region79: #{tpu_custom_call.1} parent=11 // pred_region
          _
        $region80: #{tpu_custom_call.1} parent=11 // pred_fallthru
          _
        // Predicated region
        $region81: #{tpu_custom_call.1} parent=11 // pred_check
          %p548 = pneg %p434
        $region82: #{tpu_custom_call.1} parent=11 // pred_check_branch
          %550 = sbr.rel (%p548) target = $region84
        $region83: #{tpu_custom_call.1} parent=11 // pred_region
          _
        $region84: #{tpu_custom_call.1} parent=11 // pred_fallthru
          _
      $region12: #{tpu_custom_call.1} parent=5 // pred_fallthru
        _
      %p551 = scmp.lt.s32.totalorder %s30, 2
      // Predicated region
      $region85: #{tpu_custom_call.1} parent=5 // pred_check
        %p552 = pneg %p551
      $region86: #{tpu_custom_call.1} parent=5 // pred_check_branch
        %554 = sbr.rel (%p552) target = $region88
      $region87: #{tpu_custom_call.1} parent=5 // pred_region
        // Predicated region
        $region89: #{tpu_custom_call.1} parent=87 // pred_check
          %p555 = pneg %p50
        $region90: #{tpu_custom_call.1} parent=87 // pred_check_branch
          %557 = sbr.rel (%p555) target = $region92
        $region91: #{tpu_custom_call.1} parent=87 // pred_region
          %s558 = smul.u32 24, %s30
          %p559 = scmp.lt.s32.totalorder %s558, 47
          %s560 = scalar_select %p559, %s558, 47
          %s561 = smul.addr %s560, 8
          %s562 = scalar_lea.vmem %s0, %s561
          %s563 = smul.u32 24, %s30
        $region92: #{tpu_custom_call.1} parent=87 // pred_fallthru
          _
      $region88: #{tpu_custom_call.1} parent=5 // pred_fallthru
        _
      %p564 = scmp.le.s32.totalorder 1, %s30
      %p565 = scmp.lt.s32.totalorder %s30, 3
      %p566 = pnand %p564, %p565
      %p567 = pneg %p566
      // Predicated region
      $region93: #{tpu_custom_call.1} parent=5 // pred_check
        _
      $region94: #{tpu_custom_call.1} parent=5 // pred_check_branch
        %569 = sbr.rel (%p566) target = $region96
      $region95: #{tpu_custom_call.1} parent=5 // pred_region
        %s570 = ssub.s32 %s30, 1
        // Predicated region
        $region97: #{tpu_custom_call.1} parent=95 // pred_check
          %p571 = pneg %p119
        $region98: #{tpu_custom_call.1} parent=95 // pred_check_branch
          %573 = sbr.rel (%p571) target = $region100
        $region99: #{tpu_custom_call.1} parent=95 // pred_region
          %575 = dma.done [#allocation3], 768
        $region100: #{tpu_custom_call.1} parent=95 // pred_fallthru
          _
        // Predicated region
        $region101: #{tpu_custom_call.1} parent=95 // pred_check
          %p576 = pneg %p182
        $region102: #{tpu_custom_call.1} parent=95 // pred_check_branch
          %578 = sbr.rel (%p576) target = $region104
        $region103: #{tpu_custom_call.1} parent=95 // pred_region
          %580 = dma.done [#allocation6], 512
        $region104: #{tpu_custom_call.1} parent=95 // pred_fallthru
          _
        %s581 = smul.u32 24, %s35
        %p582 = scmp.lt.s32.totalorder %s581, 47
        %s583 = scalar_select %p582, %s581, 47
        %s584 = smul.addr %s583, 8
        %s585 = scalar_lea.vmem %s0, %s584
        %p586 = pneg %p56
        %p587 = pneg %p53
        %p588 = pneg %p77
        %p589 = pneg %p74
        %p590 = pneg %p98
        %p591 = pneg %p95
        %p592 = pneg %p119
        %p593 = pneg %p116
        %p594 = pneg %p140
        %p595 = pneg %p137
        %p596 = pneg %p161
        %p597 = pneg %p158
        %p598 = pneg %p182
        %p599 = pneg %p179
        %p600 = pneg %p203
        %p601 = pneg %p200
        %p602 = pneg %p224
        %p603 = pneg %p221
        %p604 = pneg %p245
        %p605 = pneg %p242
        %p606 = pneg %p266
        %p607 = pneg %p263
        %p608 = pneg %p287
        %p609 = pneg %p284
        %p610 = pneg %p308
        %p611 = pneg %p305
        %p612 = pneg %p329
        %p613 = pneg %p326
        %p614 = pneg %p350
        %p615 = pneg %p347
        %p616 = pneg %p371
        %p617 = pneg %p368
        %p618 = pneg %p392
        %p619 = pneg %p389
        %p620 = pneg %p413
        %p621 = pneg %p410
        %p622 = pneg %p434
        %p623 = pneg %p431
        %p624 = pneg %p460
        %p625 = pneg %p457
        %s626 = sand.u32 %s447, 1
        %s627 = scalar_lea.sflag [#allocation4], %s626
        %s628 = sand.u32 %s447, 1
        %s629 = scalar_lea.vmem [#allocation7], %s628
        %s630 = smul.u32 24, %s35
        %p631 = scmp.lt.s32.totalorder %s630, 47
        %s632 = scalar_select %p631, %s630, 47
        %s633 = smul.addr %s632, 8
        %s634 = scalar_lea.vmem %s0, %s633
        %s635 = smul.u32 24, %s35
        %v637 = vld [vmem:[%s634] sm:$0xff]
        %v638 = vld [vmem:[%s634 + $0x8] sm:$0xff]
        %v639 = vld [vmem:[%s634 + $0x10] sm:$0xff]
        %v640 = vld [vmem:[%s634 + $0x18] sm:$0xff]
        %v641 = vld [vmem:[%s634 + $0x20] sm:$0xff]
        %v642 = vld [vmem:[%s634 + $0x28] sm:$0xff]
        %v643 = vld [vmem:[%s634 + $0x30] sm:$0xff]
        %v644 = vld [vmem:[%s634 + $0x38] sm:$0xff]
        %v645 = vld [vmem:[%s634 + $0x40] sm:$0xff]
        %v646 = vld [vmem:[%s634 + $0x48] sm:$0xff]
        %v647 = vld [vmem:[%s634 + $0x50] sm:$0xff]
        %v648 = vld [vmem:[%s634 + $0x58] sm:$0xff]
        %v649 = vld [vmem:[%s634 + $0x60] sm:$0xff]
        %v650 = vld [vmem:[%s634 + $0x68] sm:$0xff]
        %v651 = vld [vmem:[%s634 + $0x70] sm:$0xff]
        %v652 = vld [vmem:[%s634 + $0x78] sm:$0xff]
        %v653 = vld [vmem:[%s634 + $0x80] sm:$0xff]
        %v654 = vld [vmem:[%s634 + $0x88] sm:$0xff]
        %v655 = vld [vmem:[%s634 + $0x90] sm:$0xff]
        %v656 = vld [vmem:[%s634 + $0x98] sm:$0xff]
        %v657 = vld [vmem:[%s634 + $0xa0] sm:$0xff]
        %v658 = vld [vmem:[%s634 + $0xa8] sm:$0xff]
        %v659 = vld [vmem:[%s634 + $0xb0] sm:$0xff]
        %v660 = vld [vmem:[%s634 + $0xb8] sm:$0xff]
        %v661 = vld [vmem:[%s1] sm:$0x3]
        %v662 = vpack.c.bf16 %v638, %v637
        %v663 = vpack.c.bf16 %v640, %v639
        %v664 = vpack.c.bf16 %v642, %v641
        %v665 = vpack.c.bf16 %v644, %v643
        %v666 = vpack.c.bf16 %v646, %v645
        %v667 = vpack.c.bf16 %v648, %v647
        %v668 = vpack.c.bf16 %v650, %v649
        %v669 = vpack.c.bf16 %v652, %v651
        %v670 = vpack.c.bf16 %v654, %v653
        %v671 = vpack.c.bf16 %v656, %v655
        %v672 = vpack.c.bf16 %v658, %v657
        %v673 = vpack.c.bf16 %v660, %v659
        %v674 = vld [vmem:[%s2] sm:$0x1]
        %v676 = vperm.slane %v674, 0
        %vm678 = vcmask 23552
        %v680 = vsel %vm678, %v662, 0
        %v683 = vsel %vm678, %v663, 0
        %v686 = vsel %vm678, %v664, 0
        %v689 = vsel %vm678, %v665, 0
        %v692 = vsel %vm678, %v666, 0
        %v695 = vsel %vm678, %v667, 0
        %v698 = vsel %vm678, %v668, 0
        %v701 = vsel %vm678, %v669, 0
        %v704 = vsel %vm678, %v670, 0
        %v707 = vsel %vm678, %v671, 0
        %v710 = vsel %vm678, %v672, 0
        %v713 = vsel %vm678, %v673, 0
        %vm715 = vcmask 1040384
        %vm716 = vcmask 1041408
        %v717 = vsel %vm715, 4294967295, 65535
        %v718 = vsel %vm716, %v717, 0
        %v720 = vand.u32 %v661, %v718
        %722 = vmatpush.bf16.msra.mxu0 0
        %723 = vmatpush.bf16.msra.mxu0 0
        %724 = vmatpush.bf16.msra.mxu0 0
        %725 = vmatpush.bf16.msra.mxu0 0
        %726 = vmatpush.bf16.msra.mxu0 0
        %727 = vmatpush.bf16.msra.mxu0 0
        %728 = vmatpush.bf16.msra.mxu0 0
        %729 = vmatpush.bf16.msra.mxu0 %v720
        %730 = vmatmul.bf16.gmra.mxu0 %v680
        %v731 = vpop.f32.mrf.mxu0
        %v732 = vadd.f32 %v676, %v731
        %v733 = vpop.f32.mrf.mxu0
        %v734 = vadd.f32 %v676, %v733
        %735 = vmatmul.bf16.gmra.mxu0 %v683
        %v736 = vpop.f32.mrf.mxu0
        %v737 = vadd.f32 %v676, %v736
        %v738 = vpop.f32.mrf.mxu0
        %v739 = vadd.f32 %v676, %v738
        %740 = vmatmul.bf16.gmra.mxu0 %v686
        %v741 = vpop.f32.mrf.mxu0
        %v742 = vadd.f32 %v676, %v741
        %v743 = vpop.f32.mrf.mxu0
        %v744 = vadd.f32 %v676, %v743
        %745 = vmatmul.bf16.gmra.mxu0 %v689
        %v746 = vpop.f32.mrf.mxu0
        %v747 = vadd.f32 %v676, %v746
        %v748 = vpop.f32.mrf.mxu0
        %v749 = vadd.f32 %v676, %v748
        %750 = vmatmul.bf16.gmra.mxu0 %v692
        %v751 = vpop.f32.mrf.mxu0
        %v752 = vadd.f32 %v676, %v751
        %v753 = vpop.f32.mrf.mxu0
        %v754 = vadd.f32 %v676, %v753
        %755 = vmatmul.bf16.gmra.mxu0 %v695
        %v756 = vpop.f32.mrf.mxu0
        %v757 = vadd.f32 %v676, %v756
        %v758 = vpop.f32.mrf.mxu0
        %v759 = vadd.f32 %v676, %v758
        %760 = vmatmul.bf16.gmra.mxu0 %v698
        %v761 = vpop.f32.mrf.mxu0
        %v762 = vadd.f32 %v676, %v761
        %v763 = vpop.f32.mrf.mxu0
        %v764 = vadd.f32 %v676, %v763
        %765 = vmatmul.bf16.gmra.mxu0 %v701
        %v766 = vpop.f32.mrf.mxu0
        %v767 = vadd.f32 %v676, %v766
        %v768 = vpop.f32.mrf.mxu0
        %v769 = vadd.f32 %v676, %v768
        %770 = vmatmul.bf16.gmra.mxu0 %v704
        %v771 = vpop.f32.mrf.mxu0
        %v772 = vadd.f32 %v676, %v771
        %v773 = vpop.f32.mrf.mxu0
        %v774 = vadd.f32 %v676, %v773
        %775 = vmatmul.bf16.gmra.mxu0 %v707
        %v776 = vpop.f32.mrf.mxu0
        %v777 = vadd.f32 %v676, %v776
        %v778 = vpop.f32.mrf.mxu0
        %v779 = vadd.f32 %v676, %v778
        %780 = vmatmul.bf16.gmra.mxu0 %v710
        %v781 = vpop.f32.mrf.mxu0
        %v782 = vadd.f32 %v676, %v781
        %v783 = vpop.f32.mrf.mxu0
        %v784 = vadd.f32 %v676, %v783
        %785 = vmatmul.bf16.gmra.mxu0 %v713
        %v786 = vpop.f32.mrf.mxu0
        %v787 = vadd.f32 %v676, %v786
        %v788 = vpop.f32.mrf.mxu0
        %v789 = vadd.f32 %v676, %v788
        %790 = vdwg.mxu0
        %v791 = vld [vmem:[#allocation2] sm:$0xf]
        %v792 = vld [vmem:[#allocation2 + $0x4] sm:$0xf]
        %v793 = vld [vmem:[#allocation2 + $0x8] sm:$0xf]
        %v794 = vld [vmem:[#allocation2 + $0xc] sm:$0xf]
        %v795 = vld [vmem:[#allocation2 + $0x10] sm:$0xf]
        %v796 = vld [vmem:[#allocation2 + $0x14] sm:$0xf]
        %v797 = vld [vmem:[#allocation2 + $0x18] sm:$0xf]
        %v798 = vld [vmem:[#allocation2 + $0x1c] sm:$0xf]
        %v799 = vld [vmem:[#allocation2 + $0x20] sm:$0xf]
        %v800 = vld [vmem:[#allocation2 + $0x24] sm:$0xf]
        %v801 = vld [vmem:[#allocation2 + $0x28] sm:$0xf]
        %v802 = vld [vmem:[#allocation2 + $0x2c] sm:$0xf]
        %v803 = vpack.c.bf16 %v734, %v732
        %v804 = vpack.c.bf16 %v739, %v737
        %v805 = vpack.c.bf16 %v744, %v742
        %v806 = vpack.c.bf16 %v749, %v747
        %v807 = vpack.c.bf16 %v754, %v752
        %v808 = vpack.c.bf16 %v759, %v757
        %v821 = vunpack.c.l.b16 %v791
        %v822 = vunpack.c.l.b16 %v792
        %v823 = vunpack.c.l.b16 %v793
        %v824 = vunpack.c.l.b16 %v794
        %v825 = vunpack.c.l.b16 %v795
        %v826 = vunpack.c.l.b16 %v796
        %v827 = vunpack.c.l.b16 %v797
        %v828 = vunpack.c.l.b16 %v798
        %v829 = vunpack.c.l.b16 %v799
        %v830 = vunpack.c.l.b16 %v800
        %v831 = vunpack.c.l.b16 %v801
        %v832 = vunpack.c.l.b16 %v802
        %v833 = vpack.c.b16 %v822, %v821
        %v834 = vpack.c.b16 %v824, %v823
        %v835 = vpack.c.b16 %v826, %v825
        %v836 = vpack.c.b16 %v828, %v827
        %v837 = vpack.c.b16 %v830, %v829
        %v838 = vpack.c.b16 %v832, %v831
        %vm839 = vcmask 785408
        %v841 = vsel %vm839, %v833, 0
        %v844 = vsel %vm839, %v834, 0
        %v847 = vsel %vm839, %v835, 0
        %v850 = vsel %vm839, %v836, 0
        %v853 = vsel %vm839, %v837, 0
        %v856 = vsel %vm839, %v838, 0
        %858 = vmatpush.bf16.msra.mxu0 0
        %859 = vmatpush.bf16.msra.mxu0 0
        %860 = vmatpush.bf16.msra.mxu0 %v808
        %861 = vmatpush.bf16.msra.mxu0 %v807
        %862 = vmatpush.bf16.msra.mxu0 %v806
        %863 = vmatpush.bf16.msra.mxu0 %v805
        %864 = vmatpush.bf16.msra.mxu0 %v804
        %865 = vmatpush.bf16.msra.mxu0 %v803
        %866 = vmatmul.bf16.gmra.mxu0 %v841
        %v867 = vpop.f32.mrf.mxu0
        %v868 = vadd.f32 0.0, %v867
        %v869 = vpop.f32.mrf.mxu0
        %v870 = vadd.f32 0.0, %v869
        %871 = vmatmul.bf16.gmra.mxu0 %v844
        %v872 = vpop.f32.mrf.mxu0
        %v873 = vadd.f32 0.0, %v872
        %v874 = vpop.f32.mrf.mxu0
        %v875 = vadd.f32 0.0, %v874
        %876 = vmatmul.bf16.gmra.mxu0 %v847
        %v877 = vpop.f32.mrf.mxu0
        %v878 = vadd.f32 0.0, %v877
        %v879 = vpop.f32.mrf.mxu0
        %v880 = vadd.f32 0.0, %v879
        %881 = vmatmul.bf16.gmra.mxu0 %v850
        %v882 = vpop.f32.mrf.mxu0
        %v883 = vadd.f32 0.0, %v882
        %v884 = vpop.f32.mrf.mxu0
        %v885 = vadd.f32 0.0, %v884
        %886 = vmatmul.bf16.gmra.mxu0 %v853
        %v887 = vpop.f32.mrf.mxu0
        %v888 = vadd.f32 0.0, %v887
        %v889 = vpop.f32.mrf.mxu0
        %v890 = vadd.f32 0.0, %v889
        %891 = vmatmul.bf16.gmra.mxu0 %v856
        %v892 = vpop.f32.mrf.mxu0
        %v893 = vadd.f32 0.0, %v892
        %v894 = vpop.f32.mrf.mxu0
        %v895 = vadd.f32 0.0, %v894
        %896 = vdwg.mxu0
        %v897 = vpack.c.bf16 %v764, %v762
        %v898 = vpack.c.bf16 %v769, %v767
        %v899 = vpack.c.bf16 %v774, %v772
        %v900 = vpack.c.bf16 %v779, %v777
        %v901 = vpack.c.bf16 %v784, %v782
        %v902 = vpack.c.bf16 %v789, %v787
        %903 = vmatpush.bf16.msra.mxu0 0
        %904 = vmatpush.bf16.msra.mxu0 0
        %905 = vmatpush.bf16.msra.mxu0 %v902
        %906 = vmatpush.bf16.msra.mxu0 %v901
        %907 = vmatpush.bf16.msra.mxu0 %v900
        %908 = vmatpush.bf16.msra.mxu0 %v899
        %909 = vmatpush.bf16.msra.mxu0 %v898
        %910 = vmatpush.bf16.msra.mxu0 %v897
        %911 = vmatmul.bf16.gmra.mxu0 %v841
        %v912 = vpop.f32.mrf.mxu0
        %v913 = vadd.f32 0.0, %v912
        %v914 = vpop.f32.mrf.mxu0
        %v915 = vadd.f32 0.0, %v914
        %916 = vmatmul.bf16.gmra.mxu0 %v844
        %v917 = vpop.f32.mrf.mxu0
        %v918 = vadd.f32 0.0, %v917
        %v919 = vpop.f32.mrf.mxu0
        %v920 = vadd.f32 0.0, %v919
        %921 = vmatmul.bf16.gmra.mxu0 %v847
        %v922 = vpop.f32.mrf.mxu0
        %v923 = vadd.f32 0.0, %v922
        %v924 = vpop.f32.mrf.mxu0
        %v925 = vadd.f32 0.0, %v924
        %926 = vmatmul.bf16.gmra.mxu0 %v850
        %v927 = vpop.f32.mrf.mxu0
        %v928 = vadd.f32 0.0, %v927
        %v929 = vpop.f32.mrf.mxu0
        %v930 = vadd.f32 0.0, %v929
        %931 = vmatmul.bf16.gmra.mxu0 %v853
        %v932 = vpop.f32.mrf.mxu0
        %v933 = vadd.f32 0.0, %v932
        %v934 = vpop.f32.mrf.mxu0
        %v935 = vadd.f32 0.0, %v934
        %936 = vmatmul.bf16.gmra.mxu0 %v856
        %v937 = vpop.f32.mrf.mxu0
        %v938 = vadd.f32 0.0, %v937
        %v939 = vpop.f32.mrf.mxu0
        %v940 = vadd.f32 0.0, %v939
        %941 = vdwg.mxu0
        %v942 = vld [vmem:[%s4] sm:$0x1]
        %v944 = vperm.slane %v942, 0
        %v946 = vmul.f32 %v868, %v944
        %v947 = vmul.f32 %v870, %v944
        %v948 = vmul.f32 %v873, %v944
        %v949 = vmul.f32 %v875, %v944
        %v950 = vmul.f32 %v878, %v944
        %v951 = vmul.f32 %v880, %v944
        %v952 = vmul.f32 %v883, %v944
        %v953 = vmul.f32 %v885, %v944
        %v954 = vmul.f32 %v888, %v944
        %v955 = vmul.f32 %v890, %v944
        %v956 = vmul.f32 %v893, %v944
        %v957 = vmul.f32 %v895, %v944
        %v958 = vmul.f32 %v913, %v944
        %v959 = vmul.f32 %v915, %v944
        %v960 = vmul.f32 %v918, %v944
        %v961 = vmul.f32 %v920, %v944
        %v962 = vmul.f32 %v923, %v944
        %v963 = vmul.f32 %v925, %v944
        %v964 = vmul.f32 %v928, %v944
        %v965 = vmul.f32 %v930, %v944
        %v966 = vmul.f32 %v933, %v944
        %v967 = vmul.f32 %v935, %v944
        %v968 = vmul.f32 %v938, %v944
        %v969 = vmul.f32 %v940, %v944
        %v970 = vld [vmem:[%s5] sm:$0x1]
        %v972 = vperm.slane %v970, 0
        %v974 = vadd.f32 %v946, %v972
        %v975 = vadd.f32 %v947, %v972
        %v976 = vadd.f32 %v948, %v972
        %v977 = vadd.f32 %v949, %v972
        %v978 = vadd.f32 %v950, %v972
        %v979 = vadd.f32 %v951, %v972
        %v980 = vadd.f32 %v952, %v972
        %v981 = vadd.f32 %v953, %v972
        %v982 = vadd.f32 %v954, %v972
        %v983 = vadd.f32 %v955, %v972
        %v984 = vadd.f32 %v956, %v972
        %v985 = vadd.f32 %v957, %v972
        %v986 = vadd.f32 %v958, %v972
        %v987 = vadd.f32 %v959, %v972
        %v988 = vadd.f32 %v960, %v972
        %v989 = vadd.f32 %v961, %v972
        %v990 = vadd.f32 %v962, %v972
        %v991 = vadd.f32 %v963, %v972
        %v992 = vadd.f32 %v964, %v972
        %v993 = vadd.f32 %v965, %v972
        %v994 = vadd.f32 %v966, %v972
        %v995 = vadd.f32 %v967, %v972
        %v996 = vadd.f32 %v968, %v972
        %v997 = vadd.f32 %v969, %v972
        %v998 = vmax.f32 %v974, 0.0
        %v999 = vmax.f32 %v975, 0.0
        %v1000 = vmax.f32 %v976, 0.0
        %v1001 = vmax.f32 %v977, 0.0
        %v1002 = vmax.f32 %v978, 0.0
        %v1003 = vmax.f32 %v979, 0.0
        %v1004 = vmax.f32 %v980, 0.0
        %v1005 = vmax.f32 %v981, 0.0
        %v1006 = vmax.f32 %v982, 0.0
        %v1007 = vmax.f32 %v983, 0.0
        %v1008 = vmax.f32 %v984, 0.0
        %v1009 = vmax.f32 %v985, 0.0
        %v1010 = vmax.f32 %v986, 0.0
        %v1011 = vmax.f32 %v987, 0.0
        %v1012 = vmax.f32 %v988, 0.0
        %v1013 = vmax.f32 %v989, 0.0
        %v1014 = vmax.f32 %v990, 0.0
        %v1015 = vmax.f32 %v991, 0.0
        %v1016 = vmax.f32 %v992, 0.0
        %v1017 = vmax.f32 %v993, 0.0
        %v1018 = vmax.f32 %v994, 0.0
        %v1019 = vmax.f32 %v995, 0.0
        %v1020 = vmax.f32 %v996, 0.0
        %v1021 = vmax.f32 %v997, 0.0
        %v1022 = vld [vmem:[#allocation5] sm:$0xf]
        %v1023 = vld [vmem:[#allocation5 + $0x4] sm:$0xf]
        %v1024 = vld [vmem:[#allocation5 + $0x8] sm:$0xf]
        %v1025 = vld [vmem:[#allocation5 + $0xc] sm:$0xf]
        %v1026 = vld [vmem:[#allocation5 + $0x10] sm:$0xf]
        %v1027 = vld [vmem:[#allocation5 + $0x14] sm:$0xf]
        %v1028 = vld [vmem:[#allocation5 + $0x18] sm:$0xf]
        %v1029 = vld [vmem:[#allocation5 + $0x1c] sm:$0xf]
        %v1030 = vpack.c.bf16 %v999, %v998
        %v1031 = vpack.c.bf16 %v1001, %v1000
        %v1032 = vpack.c.bf16 %v1003, %v1002
        %v1033 = vpack.c.bf16 %v1005, %v1004
        %v1034 = vpack.c.bf16 %v1007, %v1006
        %v1035 = vpack.c.bf16 %v1009, %v1008
        %v1036 = vpack.c.bf16 %v1011, %v1010
        %v1037 = vpack.c.bf16 %v1013, %v1012
        %v1038 = vpack.c.bf16 %v1015, %v1014
        %v1039 = vpack.c.bf16 %v1017, %v1016
        %v1040 = vpack.c.bf16 %v1019, %v1018
        %v1041 = vpack.c.bf16 %v1021, %v1020
        %v1042 = vld [vmem:[%s7] sm:$0x1]
        %v1044 = vperm.slane %v1042, 0
        %v1054 = vunpack.c.l.b16 %v1022
        %v1055 = vunpack.c.l.b16 %v1023
        %v1056 = vunpack.c.l.b16 %v1024
        %v1057 = vunpack.c.l.b16 %v1025
        %v1058 = vunpack.c.l.b16 %v1026
        %v1059 = vunpack.c.l.b16 %v1027
        %v1060 = vunpack.c.l.b16 %v1028
        %v1061 = vunpack.c.l.b16 %v1029
        %v1062 = vpack.c.b16 %v1055, %v1054
        %v1063 = vpack.c.b16 %v1057, %v1056
        %v1064 = vpack.c.b16 %v1059, %v1058
        %v1065 = vpack.c.b16 %v1061, %v1060
        %vm1070 = vcmask 523264
        %v1072 = vsel %vm1070, %v1030, 0
        %v1075 = vsel %vm1070, %v1031, 0
        %v1078 = vsel %vm1070, %v1032, 0
        %v1081 = vsel %vm1070, %v1033, 0
        %v1084 = vsel %vm1070, %v1034, 0
        %v1087 = vsel %vm1070, %v1035, 0
        %v1090 = vsel %vm1070, %v1036, 0
        %v1093 = vsel %vm1070, %v1037, 0
        %v1096 = vsel %vm1070, %v1038, 0
        %v1099 = vsel %vm1070, %v1039, 0
        %v1102 = vsel %vm1070, %v1040, 0
        %v1105 = vsel %vm1070, %v1041, 0
        %1107 = vmatpush.bf16.msra.mxu0 0
        %1108 = vmatpush.bf16.msra.mxu0 0
        %1109 = vmatpush.bf16.msra.mxu0 0
        %1110 = vmatpush.bf16.msra.mxu0 0
        %1111 = vmatpush.bf16.msra.mxu0 %v1065
        %1112 = vmatpush.bf16.msra.mxu0 %v1064
        %1113 = vmatpush.bf16.msra.mxu0 %v1063
        %1114 = vmatpush.bf16.msra.mxu0 %v1062
        %1115 = vmatmul.bf16.gmra.mxu0 %v1072
        %v1116 = vpop.f32.mrf.mxu0
        %v1117 = vadd.f32 %v1044, %v1116
        %v1118 = vpop.f32.mrf.mxu0
        %v1119 = vadd.f32 %v1044, %v1118
        %1120 = vmatmul.bf16.gmra.mxu0 %v1075
        %v1121 = vpop.f32.mrf.mxu0
        %v1122 = vadd.f32 %v1044, %v1121
        %v1123 = vpop.f32.mrf.mxu0
        %v1124 = vadd.f32 %v1044, %v1123
        %1125 = vmatmul.bf16.gmra.mxu0 %v1078
        %v1126 = vpop.f32.mrf.mxu0
        %v1127 = vadd.f32 %v1044, %v1126
        %v1128 = vpop.f32.mrf.mxu0
        %v1129 = vadd.f32 %v1044, %v1128
        %1130 = vmatmul.bf16.gmra.mxu0 %v1081
        %v1131 = vpop.f32.mrf.mxu0
        %v1132 = vadd.f32 %v1044, %v1131
        %v1133 = vpop.f32.mrf.mxu0
        %v1134 = vadd.f32 %v1044, %v1133
        %1135 = vmatmul.bf16.gmra.mxu0 %v1084
        %v1136 = vpop.f32.mrf.mxu0
        %v1137 = vadd.f32 %v1044, %v1136
        %v1138 = vpop.f32.mrf.mxu0
        %v1139 = vadd.f32 %v1044, %v1138
        %1140 = vmatmul.bf16.gmra.mxu0 %v1087
        %v1141 = vpop.f32.mrf.mxu0
        %v1142 = vadd.f32 %v1044, %v1141
        %v1143 = vpop.f32.mrf.mxu0
        %v1144 = vadd.f32 %v1044, %v1143
        %1145 = vmatmul.bf16.gmra.mxu0 %v1090
        %v1146 = vpop.f32.mrf.mxu0
        %v1147 = vadd.f32 %v1044, %v1146
        %v1148 = vpop.f32.mrf.mxu0
        %v1149 = vadd.f32 %v1044, %v1148
        %1150 = vmatmul.bf16.gmra.mxu0 %v1093
        %v1151 = vpop.f32.mrf.mxu0
        %v1152 = vadd.f32 %v1044, %v1151
        %v1153 = vpop.f32.mrf.mxu0
        %v1154 = vadd.f32 %v1044, %v1153
        %1155 = vmatmul.bf16.gmra.mxu0 %v1096
        %v1156 = vpop.f32.mrf.mxu0
        %v1157 = vadd.f32 %v1044, %v1156
        %v1158 = vpop.f32.mrf.mxu0
        %v1159 = vadd.f32 %v1044, %v1158
        %1160 = vmatmul.bf16.gmra.mxu0 %v1099
        %v1161 = vpop.f32.mrf.mxu0
        %v1162 = vadd.f32 %v1044, %v1161
        %v1163 = vpop.f32.mrf.mxu0
        %v1164 = vadd.f32 %v1044, %v1163
        %1165 = vmatmul.bf16.gmra.mxu0 %v1102
        %v1166 = vpop.f32.mrf.mxu0
        %v1167 = vadd.f32 %v1044, %v1166
        %v1168 = vpop.f32.mrf.mxu0
        %v1169 = vadd.f32 %v1044, %v1168
        %1170 = vmatmul.bf16.gmra.mxu0 %v1105
        %v1171 = vpop.f32.mrf.mxu0
        %v1172 = vadd.f32 %v1044, %v1171
        %v1173 = vpop.f32.mrf.mxu0
        %v1174 = vadd.f32 %v1044, %v1173
        %1175 = vdwg.mxu0
        %1200 = vrot.lane.b32.xlu0 %v732, 64
        %v1201 = vpop.permute.xlu0 %1200
        %1202 = vrot.lane.b32.xlu0 %v734, 64
        %v1203 = vpop.permute.xlu0 %1202
        %1204 = vrot.lane.b32.xlu0 %v737, 64
        %v1205 = vpop.permute.xlu0 %1204
        %1206 = vrot.lane.b32.xlu0 %v739, 64
        %v1207 = vpop.permute.xlu0 %1206
        %1208 = vrot.lane.b32.xlu0 %v742, 64
        %v1209 = vpop.permute.xlu0 %1208
        %1210 = vrot.lane.b32.xlu0 %v744, 64
        %v1211 = vpop.permute.xlu0 %1210
        %1212 = vrot.lane.b32.xlu0 %v747, 64
        %v1213 = vpop.permute.xlu0 %1212
        %1214 = vrot.lane.b32.xlu0 %v749, 64
        %v1215 = vpop.permute.xlu0 %1214
        %1216 = vrot.lane.b32.xlu0 %v752, 64
        %v1217 = vpop.permute.xlu0 %1216
        %1218 = vrot.lane.b32.xlu0 %v754, 64
        %v1219 = vpop.permute.xlu0 %1218
        %1220 = vrot.lane.b32.xlu0 %v757, 64
        %v1221 = vpop.permute.xlu0 %1220
        %1222 = vrot.lane.b32.xlu0 %v759, 64
        %v1223 = vpop.permute.xlu0 %1222
        %1224 = vrot.lane.b32.xlu0 %v762, 64
        %v1225 = vpop.permute.xlu0 %1224
        %1226 = vrot.lane.b32.xlu0 %v764, 64
        %v1227 = vpop.permute.xlu0 %1226
        %1228 = vrot.lane.b32.xlu0 %v767, 64
        %v1229 = vpop.permute.xlu0 %1228
        %1230 = vrot.lane.b32.xlu0 %v769, 64
        %v1231 = vpop.permute.xlu0 %1230
        %1232 = vrot.lane.b32.xlu0 %v772, 64
        %v1233 = vpop.permute.xlu0 %1232
        %1234 = vrot.lane.b32.xlu0 %v774, 64
        %v1235 = vpop.permute.xlu0 %1234
        %1236 = vrot.lane.b32.xlu0 %v777, 64
        %v1237 = vpop.permute.xlu0 %1236
        %1238 = vrot.lane.b32.xlu0 %v779, 64
        %v1239 = vpop.permute.xlu0 %1238
        %1240 = vrot.lane.b32.xlu0 %v782, 64
        %v1241 = vpop.permute.xlu0 %1240
        %1242 = vrot.lane.b32.xlu0 %v784, 64
        %v1243 = vpop.permute.xlu0 %1242
        %1244 = vrot.lane.b32.xlu0 %v787, 64
        %v1245 = vpop.permute.xlu0 %1244
        %1246 = vrot.lane.b32.xlu0 %v789, 64
        %v1247 = vpop.permute.xlu0 %1246
        %v1272 = vadd.f32 %v1117, %v1201
        %v1273 = vadd.f32 %v1119, %v1203
        %v1274 = vadd.f32 %v1122, %v1205
        %v1275 = vadd.f32 %v1124, %v1207
        %v1276 = vadd.f32 %v1127, %v1209
        %v1277 = vadd.f32 %v1129, %v1211
        %v1278 = vadd.f32 %v1132, %v1213
        %v1279 = vadd.f32 %v1134, %v1215
        %v1280 = vadd.f32 %v1137, %v1217
        %v1281 = vadd.f32 %v1139, %v1219
        %v1282 = vadd.f32 %v1142, %v1221
        %v1283 = vadd.f32 %v1144, %v1223
        %v1284 = vadd.f32 %v1147, %v1225
        %v1285 = vadd.f32 %v1149, %v1227
        %v1286 = vadd.f32 %v1152, %v1229
        %v1287 = vadd.f32 %v1154, %v1231
        %v1288 = vadd.f32 %v1157, %v1233
        %v1289 = vadd.f32 %v1159, %v1235
        %v1290 = vadd.f32 %v1162, %v1237
        %v1291 = vadd.f32 %v1164, %v1239
        %v1292 = vadd.f32 %v1167, %v1241
        %v1293 = vadd.f32 %v1169, %v1243
        %v1294 = vadd.f32 %v1172, %v1245
        %v1295 = vadd.f32 %v1174, %v1247
        %v1296 = vld [vmem:[%s9] sm:$0xf]
        %v1297 = vld [vmem:[%s9 + $0x4] sm:$0xf]
        %v1298 = vld [vmem:[%s9 + $0x8] sm:$0xf]
        %v1299 = vld [vmem:[%s9 + $0xc] sm:$0xf]
        %v1300 = vld [vmem:[%s9 + $0x10] sm:$0xf]
        %v1301 = vld [vmem:[%s9 + $0x14] sm:$0xf]
        %v1302 = vld [vmem:[%s9 + $0x18] sm:$0xf]
        %v1303 = vld [vmem:[%s9 + $0x1c] sm:$0xf]
        %v1304 = vpack.c.bf16 %v1273, %v1272
        %v1305 = vpack.c.bf16 %v1275, %v1274
        %v1306 = vpack.c.bf16 %v1277, %v1276
        %v1307 = vpack.c.bf16 %v1279, %v1278
        %v1308 = vpack.c.bf16 %v1281, %v1280
        %v1309 = vpack.c.bf16 %v1283, %v1282
        %v1310 = vpack.c.bf16 %v1285, %v1284
        %v1311 = vpack.c.bf16 %v1287, %v1286
        %v1312 = vpack.c.bf16 %v1289, %v1288
        %v1313 = vpack.c.bf16 %v1291, %v1290
        %v1314 = vpack.c.bf16 %v1293, %v1292
        %v1315 = vpack.c.bf16 %v1295, %v1294
        %v1324 = vunpack.c.l.b16 %v1296
        %v1325 = vunpack.c.l.b16 %v1297
        %v1326 = vunpack.c.l.b16 %v1298
        %v1327 = vunpack.c.l.b16 %v1299
        %v1328 = vunpack.c.l.b16 %v1300
        %v1329 = vunpack.c.l.b16 %v1301
        %v1330 = vunpack.c.l.b16 %v1302
        %v1331 = vunpack.c.l.b16 %v1303
        %v1332 = vpack.c.b16 %v1325, %v1324
        %v1333 = vpack.c.b16 %v1327, %v1326
        %v1334 = vpack.c.b16 %v1329, %v1328
        %v1335 = vpack.c.b16 %v1331, %v1330
        %v1341 = vsel %vm1070, %v1304, 0
        %v1344 = vsel %vm1070, %v1305, 0
        %v1347 = vsel %vm1070, %v1306, 0
        %v1350 = vsel %vm1070, %v1307, 0
        %v1353 = vsel %vm1070, %v1308, 0
        %v1356 = vsel %vm1070, %v1309, 0
        %v1359 = vsel %vm1070, %v1310, 0
        %v1362 = vsel %vm1070, %v1311, 0
        %v1365 = vsel %vm1070, %v1312, 0
        %v1368 = vsel %vm1070, %v1313, 0
        %v1371 = vsel %vm1070, %v1314, 0
        %v1374 = vsel %vm1070, %v1315, 0
        %1376 = vmatpush.bf16.msra.mxu0 0
        %1377 = vmatpush.bf16.msra.mxu0 0
        %1378 = vmatpush.bf16.msra.mxu0 0
        %1379 = vmatpush.bf16.msra.mxu0 0
        %1380 = vmatpush.bf16.msra.mxu0 %v1335
        %1381 = vmatpush.bf16.msra.mxu0 %v1334
        %1382 = vmatpush.bf16.msra.mxu0 %v1333
        %1383 = vmatpush.bf16.msra.mxu0 %v1332
        %1384 = vmatmul.bf16.gmra.mxu0 %v1341
        %v1385 = vpop.f32.mrf.mxu0
        %v1386 = vadd.f32 0.0, %v1385
        %v1387 = vpop.f32.mrf.mxu0
        %v1388 = vadd.f32 0.0, %v1387
        %1389 = vmatmul.bf16.gmra.mxu0 %v1344
        %v1390 = vpop.f32.mrf.mxu0
        %v1391 = vadd.f32 0.0, %v1390
        %v1392 = vpop.f32.mrf.mxu0
        %v1393 = vadd.f32 0.0, %v1392
        %1394 = vmatmul.bf16.gmra.mxu0 %v1347
        %v1395 = vpop.f32.mrf.mxu0
        %v1396 = vadd.f32 0.0, %v1395
        %v1397 = vpop.f32.mrf.mxu0
        %v1398 = vadd.f32 0.0, %v1397
        %1399 = vmatmul.bf16.gmra.mxu0 %v1350
        %v1400 = vpop.f32.mrf.mxu0
        %v1401 = vadd.f32 0.0, %v1400
        %v1402 = vpop.f32.mrf.mxu0
        %v1403 = vadd.f32 0.0, %v1402
        %1404 = vmatmul.bf16.gmra.mxu0 %v1353
        %v1405 = vpop.f32.mrf.mxu0
        %v1406 = vadd.f32 0.0, %v1405
        %v1407 = vpop.f32.mrf.mxu0
        %v1408 = vadd.f32 0.0, %v1407
        %1409 = vmatmul.bf16.gmra.mxu0 %v1356
        %v1410 = vpop.f32.mrf.mxu0
        %v1411 = vadd.f32 0.0, %v1410
        %v1412 = vpop.f32.mrf.mxu0
        %v1413 = vadd.f32 0.0, %v1412
        %1414 = vmatmul.bf16.gmra.mxu0 %v1359
        %v1415 = vpop.f32.mrf.mxu0
        %v1416 = vadd.f32 0.0, %v1415
        %v1417 = vpop.f32.mrf.mxu0
        %v1418 = vadd.f32 0.0, %v1417
        %1419 = vmatmul.bf16.gmra.mxu0 %v1362
        %v1420 = vpop.f32.mrf.mxu0
        %v1421 = vadd.f32 0.0, %v1420
        %v1422 = vpop.f32.mrf.mxu0
        %v1423 = vadd.f32 0.0, %v1422
        %1424 = vmatmul.bf16.gmra.mxu0 %v1365
        %v1425 = vpop.f32.mrf.mxu0
        %v1426 = vadd.f32 0.0, %v1425
        %v1427 = vpop.f32.mrf.mxu0
        %v1428 = vadd.f32 0.0, %v1427
        %1429 = vmatmul.bf16.gmra.mxu0 %v1368
        %v1430 = vpop.f32.mrf.mxu0
        %v1431 = vadd.f32 0.0, %v1430
        %v1432 = vpop.f32.mrf.mxu0
        %v1433 = vadd.f32 0.0, %v1432
        %1434 = vmatmul.bf16.gmra.mxu0 %v1371
        %v1435 = vpop.f32.mrf.mxu0
        %v1436 = vadd.f32 0.0, %v1435
        %v1437 = vpop.f32.mrf.mxu0
        %v1438 = vadd.f32 0.0, %v1437
        %1439 = vmatmul.bf16.gmra.mxu0 %v1374
        %v1440 = vpop.f32.mrf.mxu0
        %v1441 = vadd.f32 0.0, %v1440
        %v1442 = vpop.f32.mrf.mxu0
        %v1443 = vadd.f32 0.0, %v1442
        %1444 = vdwg.mxu0
        %v1445 = vld [vmem:[%s8] sm:$0xf]
        %v1446 = vld [vmem:[%s8 + $0x4] sm:$0xf]
        %v1447 = vld [vmem:[%s8 + $0x8] sm:$0xf]
        %v1448 = vld [vmem:[%s8 + $0xc] sm:$0xf]
        %v1449 = vld [vmem:[%s8 + $0x10] sm:$0xf]
        %v1450 = vld [vmem:[%s8 + $0x14] sm:$0xf]
        %v1451 = vld [vmem:[%s8 + $0x18] sm:$0xf]
        %v1452 = vld [vmem:[%s8 + $0x1c] sm:$0xf]
        %v1453 = vld [vmem:[%s8 + $0x20] sm:$0xf]
        %v1454 = vld [vmem:[%s8 + $0x24] sm:$0xf]
        %v1455 = vld [vmem:[%s8 + $0x28] sm:$0xf]
        %v1456 = vld [vmem:[%s8 + $0x2c] sm:$0xf]
        %v1457 = vpack.c.bf16 %v1388, %v1386
        %v1458 = vpack.c.bf16 %v1393, %v1391
        %v1459 = vpack.c.bf16 %v1398, %v1396
        %v1460 = vpack.c.bf16 %v1403, %v1401
        %v1461 = vpack.c.bf16 %v1408, %v1406
        %v1462 = vpack.c.bf16 %v1413, %v1411
        %v1475 = vunpack.c.l.b16 %v1445
        %v1476 = vunpack.c.l.b16 %v1446
        %v1477 = vunpack.c.l.b16 %v1447
        %v1478 = vunpack.c.l.b16 %v1448
        %v1479 = vunpack.c.l.b16 %v1449
        %v1480 = vunpack.c.l.b16 %v1450
        %v1481 = vunpack.c.l.b16 %v1451
        %v1482 = vunpack.c.l.b16 %v1452
        %v1483 = vunpack.c.l.b16 %v1453
        %v1484 = vunpack.c.l.b16 %v1454
        %v1485 = vunpack.c.l.b16 %v1455
        %v1486 = vunpack.c.l.b16 %v1456
        %v1487 = vpack.c.b16 %v1476, %v1475
        %v1488 = vpack.c.b16 %v1478, %v1477
        %v1489 = vpack.c.b16 %v1480, %v1479
        %v1490 = vpack.c.b16 %v1482, %v1481
        %v1491 = vpack.c.b16 %v1484, %v1483
        %v1492 = vpack.c.b16 %v1486, %v1485
        %v1494 = vsel %vm839, %v1487, 0
        %v1497 = vsel %vm839, %v1488, 0
        %v1500 = vsel %vm839, %v1489, 0
        %v1503 = vsel %vm839, %v1490, 0
        %v1506 = vsel %vm839, %v1491, 0
        %v1509 = vsel %vm839, %v1492, 0
        %1511 = vmatpush.bf16.msra.mxu0 0
        %1512 = vmatpush.bf16.msra.mxu0 0
        %1513 = vmatpush.bf16.msra.mxu0 %v1462
        %1514 = vmatpush.bf16.msra.mxu0 %v1461
        %1515 = vmatpush.bf16.msra.mxu0 %v1460
        %1516 = vmatpush.bf16.msra.mxu0 %v1459
        %1517 = vmatpush.bf16.msra.mxu0 %v1458
        %1518 = vmatpush.bf16.msra.mxu0 %v1457
        %1519 = vmatmul.bf16.gmra.mxu0 %v1494
        %v1520 = vpop.f32.mrf.mxu0
        %v1521 = vadd.f32 0.0, %v1520
        %v1522 = vpop.f32.mrf.mxu0
        %v1523 = vadd.f32 0.0, %v1522
        %1524 = vmatmul.bf16.gmra.mxu0 %v1497
        %v1525 = vpop.f32.mrf.mxu0
        %v1526 = vadd.f32 0.0, %v1525
        %v1527 = vpop.f32.mrf.mxu0
        %v1528 = vadd.f32 0.0, %v1527
        %1529 = vmatmul.bf16.gmra.mxu0 %v1500
        %v1530 = vpop.f32.mrf.mxu0
        %v1531 = vadd.f32 0.0, %v1530
        %v1532 = vpop.f32.mrf.mxu0
        %v1533 = vadd.f32 0.0, %v1532
        %1534 = vmatmul.bf16.gmra.mxu0 %v1503
        %v1535 = vpop.f32.mrf.mxu0
        %v1536 = vadd.f32 0.0, %v1535
        %v1537 = vpop.f32.mrf.mxu0
        %v1538 = vadd.f32 0.0, %v1537
        %1539 = vmatmul.bf16.gmra.mxu0 %v1506
        %v1540 = vpop.f32.mrf.mxu0
        %v1541 = vadd.f32 0.0, %v1540
        %v1542 = vpop.f32.mrf.mxu0
        %v1543 = vadd.f32 0.0, %v1542
        %1544 = vmatmul.bf16.gmra.mxu0 %v1509
        %v1545 = vpop.f32.mrf.mxu0
        %v1546 = vadd.f32 0.0, %v1545
        %v1547 = vpop.f32.mrf.mxu0
        %v1548 = vadd.f32 0.0, %v1547
        %1549 = vdwg.mxu0
        %v1550 = vpack.c.bf16 %v1418, %v1416
        %v1551 = vpack.c.bf16 %v1423, %v1421
        %v1552 = vpack.c.bf16 %v1428, %v1426
        %v1553 = vpack.c.bf16 %v1433, %v1431
        %v1554 = vpack.c.bf16 %v1438, %v1436
        %v1555 = vpack.c.bf16 %v1443, %v1441
        %1556 = vmatpush.bf16.msra.mxu0 0
        %1557 = vmatpush.bf16.msra.mxu0 0
        %1558 = vmatpush.bf16.msra.mxu0 %v1555
        %1559 = vmatpush.bf16.msra.mxu0 %v1554
        %1560 = vmatpush.bf16.msra.mxu0 %v1553
        %1561 = vmatpush.bf16.msra.mxu0 %v1552
        %1562 = vmatpush.bf16.msra.mxu0 %v1551
        %1563 = vmatpush.bf16.msra.mxu0 %v1550
        %1564 = vmatmul.bf16.gmra.mxu0 %v1494
        %v1565 = vpop.f32.mrf.mxu0
        %v1566 = vadd.f32 0.0, %v1565
        %v1567 = vpop.f32.mrf.mxu0
        %v1568 = vadd.f32 0.0, %v1567
        %1569 = vmatmul.bf16.gmra.mxu0 %v1497
        %v1570 = vpop.f32.mrf.mxu0
        %v1571 = vadd.f32 0.0, %v1570
        %v1572 = vpop.f32.mrf.mxu0
        %v1573 = vadd.f32 0.0, %v1572
        %1574 = vmatmul.bf16.gmra.mxu0 %v1500
        %v1575 = vpop.f32.mrf.mxu0
        %v1576 = vadd.f32 0.0, %v1575
        %v1577 = vpop.f32.mrf.mxu0
        %v1578 = vadd.f32 0.0, %v1577
        %1579 = vmatmul.bf16.gmra.mxu0 %v1503
        %v1580 = vpop.f32.mrf.mxu0
        %v1581 = vadd.f32 0.0, %v1580
        %v1582 = vpop.f32.mrf.mxu0
        %v1583 = vadd.f32 0.0, %v1582
        %1584 = vmatmul.bf16.gmra.mxu0 %v1506
        %v1585 = vpop.f32.mrf.mxu0
        %v1586 = vadd.f32 0.0, %v1585
        %v1587 = vpop.f32.mrf.mxu0
        %v1588 = vadd.f32 0.0, %v1587
        %1589 = vmatmul.bf16.gmra.mxu0 %v1509
        %v1590 = vpop.f32.mrf.mxu0
        %v1591 = vadd.f32 0.0, %v1590
        %v1592 = vpop.f32.mrf.mxu0
        %v1593 = vadd.f32 0.0, %v1592
        %1594 = vdwg.mxu0
        %v1595 = vld [vmem:[%s10] sm:$0x1]
        %v1597 = vperm.slane %v1595, 0
        %v1599 = vmul.f32 %v1521, %v1597
        %v1600 = vmul.f32 %v1523, %v1597
        %v1601 = vmul.f32 %v1526, %v1597
        %v1602 = vmul.f32 %v1528, %v1597
        %v1603 = vmul.f32 %v1531, %v1597
        %v1604 = vmul.f32 %v1533, %v1597
        %v1605 = vmul.f32 %v1536, %v1597
        %v1606 = vmul.f32 %v1538, %v1597
        %v1607 = vmul.f32 %v1541, %v1597
        %v1608 = vmul.f32 %v1543, %v1597
        %v1609 = vmul.f32 %v1546, %v1597
        %v1610 = vmul.f32 %v1548, %v1597
        %v1611 = vmul.f32 %v1566, %v1597
        %v1612 = vmul.f32 %v1568, %v1597
        %v1613 = vmul.f32 %v1571, %v1597
        %v1614 = vmul.f32 %v1573, %v1597
        %v1615 = vmul.f32 %v1576, %v1597
        %v1616 = vmul.f32 %v1578, %v1597
        %v1617 = vmul.f32 %v1581, %v1597
        %v1618 = vmul.f32 %v1583, %v1597
        %v1619 = vmul.f32 %v1586, %v1597
        %v1620 = vmul.f32 %v1588, %v1597
        %v1621 = vmul.f32 %v1591, %v1597
        %v1622 = vmul.f32 %v1593, %v1597
        %v1623 = vld [vmem:[%s11] sm:$0x1]
        %v1625 = vperm.slane %v1623, 0
        %v1627 = vadd.f32 %v1599, %v1625
        %v1628 = vadd.f32 %v1600, %v1625
        %v1629 = vadd.f32 %v1601, %v1625
        %v1630 = vadd.f32 %v1602, %v1625
        %v1631 = vadd.f32 %v1603, %v1625
        %v1632 = vadd.f32 %v1604, %v1625
        %v1633 = vadd.f32 %v1605, %v1625
        %v1634 = vadd.f32 %v1606, %v1625
        %v1635 = vadd.f32 %v1607, %v1625
        %v1636 = vadd.f32 %v1608, %v1625
        %v1637 = vadd.f32 %v1609, %v1625
        %v1638 = vadd.f32 %v1610, %v1625
        %v1639 = vadd.f32 %v1611, %v1625
        %v1640 = vadd.f32 %v1612, %v1625
        %v1641 = vadd.f32 %v1613, %v1625
        %v1642 = vadd.f32 %v1614, %v1625
        %v1643 = vadd.f32 %v1615, %v1625
        %v1644 = vadd.f32 %v1616, %v1625
        %v1645 = vadd.f32 %v1617, %v1625
        %v1646 = vadd.f32 %v1618, %v1625
        %v1647 = vadd.f32 %v1619, %v1625
        %v1648 = vadd.f32 %v1620, %v1625
        %v1649 = vadd.f32 %v1621, %v1625
        %v1650 = vadd.f32 %v1622, %v1625
        %v1651 = vmax.f32 %v1627, 0.0
        %v1652 = vmax.f32 %v1628, 0.0
        %v1653 = vmax.f32 %v1629, 0.0
        %v1654 = vmax.f32 %v1630, 0.0
        %v1655 = vmax.f32 %v1631, 0.0
        %v1656 = vmax.f32 %v1632, 0.0
        %v1657 = vmax.f32 %v1633, 0.0
        %v1658 = vmax.f32 %v1634, 0.0
        %v1659 = vmax.f32 %v1635, 0.0
        %v1660 = vmax.f32 %v1636, 0.0
        %v1661 = vmax.f32 %v1637, 0.0
        %v1662 = vmax.f32 %v1638, 0.0
        %v1663 = vmax.f32 %v1639, 0.0
        %v1664 = vmax.f32 %v1640, 0.0
        %v1665 = vmax.f32 %v1641, 0.0
        %v1666 = vmax.f32 %v1642, 0.0
        %v1667 = vmax.f32 %v1643, 0.0
        %v1668 = vmax.f32 %v1644, 0.0
        %v1669 = vmax.f32 %v1645, 0.0
        %v1670 = vmax.f32 %v1646, 0.0
        %v1671 = vmax.f32 %v1647, 0.0
        %v1672 = vmax.f32 %v1648, 0.0
        %v1673 = vmax.f32 %v1649, 0.0
        %v1674 = vmax.f32 %v1650, 0.0
        %v1675 = vld [vmem:[%s12] sm:$0xf]
        %v1676 = vld [vmem:[%s12 + $0x4] sm:$0xf]
        %v1677 = vld [vmem:[%s12 + $0x8] sm:$0xf]
        %v1678 = vld [vmem:[%s12 + $0xc] sm:$0xf]
        %v1679 = vld [vmem:[%s12 + $0x10] sm:$0xf]
        %v1680 = vld [vmem:[%s12 + $0x14] sm:$0xf]
        %v1681 = vld [vmem:[%s12 + $0x18] sm:$0xf]
        %v1682 = vld [vmem:[%s12 + $0x1c] sm:$0xf]
        %v1683 = vpack.c.bf16 %v1652, %v1651
        %v1684 = vpack.c.bf16 %v1654, %v1653
        %v1685 = vpack.c.bf16 %v1656, %v1655
        %v1686 = vpack.c.bf16 %v1658, %v1657
        %v1687 = vpack.c.bf16 %v1660, %v1659
        %v1688 = vpack.c.bf16 %v1662, %v1661
        %v1689 = vpack.c.bf16 %v1664, %v1663
        %v1690 = vpack.c.bf16 %v1666, %v1665
        %v1691 = vpack.c.bf16 %v1668, %v1667
        %v1692 = vpack.c.bf16 %v1670, %v1669
        %v1693 = vpack.c.bf16 %v1672, %v1671
        %v1694 = vpack.c.bf16 %v1674, %v1673
        %v1695 = vld [vmem:[%s13] sm:$0x1]
        %v1697 = vperm.slane %v1695, 0
        %v1707 = vunpack.c.l.b16 %v1675
        %v1708 = vunpack.c.l.b16 %v1676
        %v1709 = vunpack.c.l.b16 %v1677
        %v1710 = vunpack.c.l.b16 %v1678
        %v1711 = vunpack.c.l.b16 %v1679
        %v1712 = vunpack.c.l.b16 %v1680
        %v1713 = vunpack.c.l.b16 %v1681
        %v1714 = vunpack.c.l.b16 %v1682
        %v1715 = vpack.c.b16 %v1708, %v1707
        %v1716 = vpack.c.b16 %v1710, %v1709
        %v1717 = vpack.c.b16 %v1712, %v1711
        %v1718 = vpack.c.b16 %v1714, %v1713
        %v1724 = vsel %vm1070, %v1683, 0
        %v1727 = vsel %vm1070, %v1684, 0
        %v1730 = vsel %vm1070, %v1685, 0
        %v1733 = vsel %vm1070, %v1686, 0
        %v1736 = vsel %vm1070, %v1687, 0
        %v1739 = vsel %vm1070, %v1688, 0
        %v1742 = vsel %vm1070, %v1689, 0
        %v1745 = vsel %vm1070, %v1690, 0
        %v1748 = vsel %vm1070, %v1691, 0
        %v1751 = vsel %vm1070, %v1692, 0
        %v1754 = vsel %vm1070, %v1693, 0
        %v1757 = vsel %vm1070, %v1694, 0
        %1759 = vmatpush.bf16.msra.mxu0 0
        %1760 = vmatpush.bf16.msra.mxu0 0
        %1761 = vmatpush.bf16.msra.mxu0 0
        %1762 = vmatpush.bf16.msra.mxu0 0
        %1763 = vmatpush.bf16.msra.mxu0 %v1718
        %1764 = vmatpush.bf16.msra.mxu0 %v1717
        %1765 = vmatpush.bf16.msra.mxu0 %v1716
        %1766 = vmatpush.bf16.msra.mxu0 %v1715
        %1767 = vmatmul.bf16.gmra.mxu0 %v1724
        %v1768 = vpop.f32.mrf.mxu0
        %v1769 = vadd.f32 %v1697, %v1768
        %v1770 = vpop.f32.mrf.mxu0
        %v1771 = vadd.f32 %v1697, %v1770
        %1772 = vmatmul.bf16.gmra.mxu0 %v1727
        %v1773 = vpop.f32.mrf.mxu0
        %v1774 = vadd.f32 %v1697, %v1773
        %v1775 = vpop.f32.mrf.mxu0
        %v1776 = vadd.f32 %v1697, %v1775
        %1777 = vmatmul.bf16.gmra.mxu0 %v1730
        %v1778 = vpop.f32.mrf.mxu0
        %v1779 = vadd.f32 %v1697, %v1778
        %v1780 = vpop.f32.mrf.mxu0
        %v1781 = vadd.f32 %v1697, %v1780
        %1782 = vmatmul.bf16.gmra.mxu0 %v1733
        %v1783 = vpop.f32.mrf.mxu0
        %v1784 = vadd.f32 %v1697, %v1783
        %v1785 = vpop.f32.mrf.mxu0
        %v1786 = vadd.f32 %v1697, %v1785
        %1787 = vmatmul.bf16.gmra.mxu0 %v1736
        %v1788 = vpop.f32.mrf.mxu0
        %v1789 = vadd.f32 %v1697, %v1788
        %v1790 = vpop.f32.mrf.mxu0
        %v1791 = vadd.f32 %v1697, %v1790
        %1792 = vmatmul.bf16.gmra.mxu0 %v1739
        %v1793 = vpop.f32.mrf.mxu0
        %v1794 = vadd.f32 %v1697, %v1793
        %v1795 = vpop.f32.mrf.mxu0
        %v1796 = vadd.f32 %v1697, %v1795
        %1797 = vmatmul.bf16.gmra.mxu0 %v1742
        %v1798 = vpop.f32.mrf.mxu0
        %v1799 = vadd.f32 %v1697, %v1798
        %v1800 = vpop.f32.mrf.mxu0
        %v1801 = vadd.f32 %v1697, %v1800
        %1802 = vmatmul.bf16.gmra.mxu0 %v1745
        %v1803 = vpop.f32.mrf.mxu0
        %v1804 = vadd.f32 %v1697, %v1803
        %v1805 = vpop.f32.mrf.mxu0
        %v1806 = vadd.f32 %v1697, %v1805
        %1807 = vmatmul.bf16.gmra.mxu0 %v1748
        %v1808 = vpop.f32.mrf.mxu0
        %v1809 = vadd.f32 %v1697, %v1808
        %v1810 = vpop.f32.mrf.mxu0
        %v1811 = vadd.f32 %v1697, %v1810
        %1812 = vmatmul.bf16.gmra.mxu0 %v1751
        %v1813 = vpop.f32.mrf.mxu0
        %v1814 = vadd.f32 %v1697, %v1813
        %v1815 = vpop.f32.mrf.mxu0
        %v1816 = vadd.f32 %v1697, %v1815
        %1817 = vmatmul.bf16.gmra.mxu0 %v1754
        %v1818 = vpop.f32.mrf.mxu0
        %v1819 = vadd.f32 %v1697, %v1818
        %v1820 = vpop.f32.mrf.mxu0
        %v1821 = vadd.f32 %v1697, %v1820
        %1822 = vmatmul.bf16.gmra.mxu0 %v1757
        %v1823 = vpop.f32.mrf.mxu0
        %v1824 = vadd.f32 %v1697, %v1823
        %v1825 = vpop.f32.mrf.mxu0
        %v1826 = vadd.f32 %v1697, %v1825
        %1827 = vdwg.mxu0
        %v1828 = vadd.f32 %v1769, %v1272
        %v1829 = vadd.f32 %v1771, %v1273
        %v1830 = vadd.f32 %v1774, %v1274
        %v1831 = vadd.f32 %v1776, %v1275
        %v1832 = vadd.f32 %v1779, %v1276
        %v1833 = vadd.f32 %v1781, %v1277
        %v1834 = vadd.f32 %v1784, %v1278
        %v1835 = vadd.f32 %v1786, %v1279
        %v1836 = vadd.f32 %v1789, %v1280
        %v1837 = vadd.f32 %v1791, %v1281
        %v1838 = vadd.f32 %v1794, %v1282
        %v1839 = vadd.f32 %v1796, %v1283
        %v1840 = vadd.f32 %v1799, %v1284
        %v1841 = vadd.f32 %v1801, %v1285
        %v1842 = vadd.f32 %v1804, %v1286
        %v1843 = vadd.f32 %v1806, %v1287
        %v1844 = vadd.f32 %v1809, %v1288
        %v1845 = vadd.f32 %v1811, %v1289
        %v1846 = vadd.f32 %v1814, %v1290
        %v1847 = vadd.f32 %v1816, %v1291
        %v1848 = vadd.f32 %v1819, %v1292
        %v1849 = vadd.f32 %v1821, %v1293
        %v1850 = vadd.f32 %v1824, %v1294
        %v1851 = vadd.f32 %v1826, %v1295
        %s1852 = scalar_lea.vmem %s9, 32
        %v1853 = vld [vmem:[%s1852] sm:$0xf]
        %v1854 = vld [vmem:[%s1852 + $0x4] sm:$0xf]
        %v1855 = vld [vmem:[%s1852 + $0x8] sm:$0xf]
        %v1856 = vld [vmem:[%s1852 + $0xc] sm:$0xf]
        %v1857 = vld [vmem:[%s1852 + $0x10] sm:$0xf]
        %v1858 = vld [vmem:[%s1852 + $0x14] sm:$0xf]
        %v1859 = vld [vmem:[%s1852 + $0x18] sm:$0xf]
        %v1860 = vld [vmem:[%s1852 + $0x1c] sm:$0xf]
        %v1861 = vpack.c.bf16 %v1829, %v1828
        %v1862 = vpack.c.bf16 %v1831, %v1830
        %v1863 = vpack.c.bf16 %v1833, %v1832
        %v1864 = vpack.c.bf16 %v1835, %v1834
        %v1865 = vpack.c.bf16 %v1837, %v1836
        %v1866 = vpack.c.bf16 %v1839, %v1838
        %v1867 = vpack.c.bf16 %v1841, %v1840
        %v1868 = vpack.c.bf16 %v1843, %v1842
        %v1869 = vpack.c.bf16 %v1845, %v1844
        %v1870 = vpack.c.bf16 %v1847, %v1846
        %v1871 = vpack.c.bf16 %v1849, %v1848
        %v1872 = vpack.c.bf16 %v1851, %v1850
        %v1881 = vunpack.c.l.b16 %v1853
        %v1882 = vunpack.c.l.b16 %v1854
        %v1883 = vunpack.c.l.b16 %v1855
        %v1884 = vunpack.c.l.b16 %v1856
        %v1885 = vunpack.c.l.b16 %v1857
        %v1886 = vunpack.c.l.b16 %v1858
        %v1887 = vunpack.c.l.b16 %v1859
        %v1888 = vunpack.c.l.b16 %v1860
        %v1889 = vpack.c.b16 %v1882, %v1881
        %v1890 = vpack.c.b16 %v1884, %v1883
        %v1891 = vpack.c.b16 %v1886, %v1885
        %v1892 = vpack.c.b16 %v1888, %v1887
        %v1898 = vsel %vm1070, %v1861, 0
        %v1901 = vsel %vm1070, %v1862, 0
        %v1904 = vsel %vm1070, %v1863, 0
        %v1907 = vsel %vm1070, %v1864, 0
        %v1910 = vsel %vm1070, %v1865, 0
        %v1913 = vsel %vm1070, %v1866, 0
        %v1916 = vsel %vm1070, %v1867, 0
        %v1919 = vsel %vm1070, %v1868, 0
        %v1922 = vsel %vm1070, %v1869, 0
        %v1925 = vsel %vm1070, %v1870, 0
        %v1928 = vsel %vm1070, %v1871, 0
        %v1931 = vsel %vm1070, %v1872, 0
        %1933 = vmatpush.bf16.msra.mxu0 0
        %1934 = vmatpush.bf16.msra.mxu0 0
        %1935 = vmatpush.bf16.msra.mxu0 0
        %1936 = vmatpush.bf16.msra.mxu0 0
        %1937 = vmatpush.bf16.msra.mxu0 %v1892
        %1938 = vmatpush.bf16.msra.mxu0 %v1891
        %1939 = vmatpush.bf16.msra.mxu0 %v1890
        %1940 = vmatpush.bf16.msra.mxu0 %v1889
        %1941 = vmatmul.bf16.gmra.mxu0 %v1898
        %v1942 = vpop.f32.mrf.mxu0
        %v1943 = vadd.f32 0.0, %v1942
        %v1944 = vpop.f32.mrf.mxu0
        %v1945 = vadd.f32 0.0, %v1944
        %1946 = vmatmul.bf16.gmra.mxu0 %v1901
        %v1947 = vpop.f32.mrf.mxu0
        %v1948 = vadd.f32 0.0, %v1947
        %v1949 = vpop.f32.mrf.mxu0
        %v1950 = vadd.f32 0.0, %v1949
        %1951 = vmatmul.bf16.gmra.mxu0 %v1904
        %v1952 = vpop.f32.mrf.mxu0
        %v1953 = vadd.f32 0.0, %v1952
        %v1954 = vpop.f32.mrf.mxu0
        %v1955 = vadd.f32 0.0, %v1954
        %1956 = vmatmul.bf16.gmra.mxu0 %v1907
        %v1957 = vpop.f32.mrf.mxu0
        %v1958 = vadd.f32 0.0, %v1957
        %v1959 = vpop.f32.mrf.mxu0
        %v1960 = vadd.f32 0.0, %v1959
        %1961 = vmatmul.bf16.gmra.mxu0 %v1910
        %v1962 = vpop.f32.mrf.mxu0
        %v1963 = vadd.f32 0.0, %v1962
        %v1964 = vpop.f32.mrf.mxu0
        %v1965 = vadd.f32 0.0, %v1964
        %1966 = vmatmul.bf16.gmra.mxu0 %v1913
        %v1967 = vpop.f32.mrf.mxu0
        %v1968 = vadd.f32 0.0, %v1967
        %v1969 = vpop.f32.mrf.mxu0
        %v1970 = vadd.f32 0.0, %v1969
        %1971 = vmatmul.bf16.gmra.mxu0 %v1916
        %v1972 = vpop.f32.mrf.mxu0
        %v1973 = vadd.f32 0.0, %v1972
        %v1974 = vpop.f32.mrf.mxu0
        %v1975 = vadd.f32 0.0, %v1974
        %1976 = vmatmul.bf16.gmra.mxu0 %v1919
        %v1977 = vpop.f32.mrf.mxu0
        %v1978 = vadd.f32 0.0, %v1977
        %v1979 = vpop.f32.mrf.mxu0
        %v1980 = vadd.f32 0.0, %v1979
        %1981 = vmatmul.bf16.gmra.mxu0 %v1922
        %v1982 = vpop.f32.mrf.mxu0
        %v1983 = vadd.f32 0.0, %v1982
        %v1984 = vpop.f32.mrf.mxu0
        %v1985 = vadd.f32 0.0, %v1984
        %1986 = vmatmul.bf16.gmra.mxu0 %v1925
        %v1987 = vpop.f32.mrf.mxu0
        %v1988 = vadd.f32 0.0, %v1987
        %v1989 = vpop.f32.mrf.mxu0
        %v1990 = vadd.f32 0.0, %v1989
        %1991 = vmatmul.bf16.gmra.mxu0 %v1928
        %v1992 = vpop.f32.mrf.mxu0
        %v1993 = vadd.f32 0.0, %v1992
        %v1994 = vpop.f32.mrf.mxu0
        %v1995 = vadd.f32 0.0, %v1994
        %1996 = vmatmul.bf16.gmra.mxu0 %v1931
        %v1997 = vpop.f32.mrf.mxu0
        %v1998 = vadd.f32 0.0, %v1997
        %v1999 = vpop.f32.mrf.mxu0
        %v2000 = vadd.f32 0.0, %v1999
        %2001 = vdwg.mxu0
        %s2002 = scalar_lea.vmem %s8, 48
        %v2003 = vld [vmem:[%s2002] sm:$0xf]
        %v2004 = vld [vmem:[%s2002 + $0x4] sm:$0xf]
        %v2005 = vld [vmem:[%s2002 + $0x8] sm:$0xf]
        %v2006 = vld [vmem:[%s2002 + $0xc] sm:$0xf]
        %v2007 = vld [vmem:[%s2002 + $0x10] sm:$0xf]
        %v2008 = vld [vmem:[%s2002 + $0x14] sm:$0xf]
        %v2009 = vld [vmem:[%s2002 + $0x18] sm:$0xf]
        %v2010 = vld [vmem:[%s2002 + $0x1c] sm:$0xf]
        %v2011 = vld [vmem:[%s2002 + $0x20] sm:$0xf]
        %v2012 = vld [vmem:[%s2002 + $0x24] sm:$0xf]
        %v2013 = vld [vmem:[%s2002 + $0x28] sm:$0xf]
        %v2014 = vld [vmem:[%s2002 + $0x2c] sm:$0xf]
        %v2015 = vpack.c.bf16 %v1945, %v1943
        %v2016 = vpack.c.bf16 %v1950, %v1948
        %v2017 = vpack.c.bf16 %v1955, %v1953
        %v2018 = vpack.c.bf16 %v1960, %v1958
        %v2019 = vpack.c.bf16 %v1965, %v1963
        %v2020 = vpack.c.bf16 %v1970, %v1968
        %v2033 = vunpack.c.l.b16 %v2003
        %v2034 = vunpack.c.l.b16 %v2004
        %v2035 = vunpack.c.l.b16 %v2005
        %v2036 = vunpack.c.l.b16 %v2006
        %v2037 = vunpack.c.l.b16 %v2007
        %v2038 = vunpack.c.l.b16 %v2008
        %v2039 = vunpack.c.l.b16 %v2009
        %v2040 = vunpack.c.l.b16 %v2010
        %v2041 = vunpack.c.l.b16 %v2011
        %v2042 = vunpack.c.l.b16 %v2012
        %v2043 = vunpack.c.l.b16 %v2013
        %v2044 = vunpack.c.l.b16 %v2014
        %v2045 = vpack.c.b16 %v2034, %v2033
        %v2046 = vpack.c.b16 %v2036, %v2035
        %v2047 = vpack.c.b16 %v2038, %v2037
        %v2048 = vpack.c.b16 %v2040, %v2039
        %v2049 = vpack.c.b16 %v2042, %v2041
        %v2050 = vpack.c.b16 %v2044, %v2043
        %v2052 = vsel %vm839, %v2045, 0
        %v2055 = vsel %vm839, %v2046, 0
        %v2058 = vsel %vm839, %v2047, 0
        %v2061 = vsel %vm839, %v2048, 0
        %v2064 = vsel %vm839, %v2049, 0
        %v2067 = vsel %vm839, %v2050, 0
        %2069 = vmatpush.bf16.msra.mxu0 0
        %2070 = vmatpush.bf16.msra.mxu0 0
        %2071 = vmatpush.bf16.msra.mxu0 %v2020
        %2072 = vmatpush.bf16.msra.mxu0 %v2019
        %2073 = vmatpush.bf16.msra.mxu0 %v2018
        %2074 = vmatpush.bf16.msra.mxu0 %v2017
        %2075 = vmatpush.bf16.msra.mxu0 %v2016
        %2076 = vmatpush.bf16.msra.mxu0 %v2015
        %2077 = vmatmul.bf16.gmra.mxu0 %v2052
        %v2078 = vpop.f32.mrf.mxu0
        %v2079 = vadd.f32 0.0, %v2078
        %v2080 = vpop.f32.mrf.mxu0
        %v2081 = vadd.f32 0.0, %v2080
        %2082 = vmatmul.bf16.gmra.mxu0 %v2055
        %v2083 = vpop.f32.mrf.mxu0
        %v2084 = vadd.f32 0.0, %v2083
        %v2085 = vpop.f32.mrf.mxu0
        %v2086 = vadd.f32 0.0, %v2085
        %2087 = vmatmul.bf16.gmra.mxu0 %v2058
        %v2088 = vpop.f32.mrf.mxu0
        %v2089 = vadd.f32 0.0, %v2088
        %v2090 = vpop.f32.mrf.mxu0
        %v2091 = vadd.f32 0.0, %v2090
        %2092 = vmatmul.bf16.gmra.mxu0 %v2061
        %v2093 = vpop.f32.mrf.mxu0
        %v2094 = vadd.f32 0.0, %v2093
        %v2095 = vpop.f32.mrf.mxu0
        %v2096 = vadd.f32 0.0, %v2095
        %2097 = vmatmul.bf16.gmra.mxu0 %v2064
        %v2098 = vpop.f32.mrf.mxu0
        %v2099 = vadd.f32 0.0, %v2098
        %v2100 = vpop.f32.mrf.mxu0
        %v2101 = vadd.f32 0.0, %v2100
        %2102 = vmatmul.bf16.gmra.mxu0 %v2067
        %v2103 = vpop.f32.mrf.mxu0
        %v2104 = vadd.f32 0.0, %v2103
        %v2105 = vpop.f32.mrf.mxu0
        %v2106 = vadd.f32 0.0, %v2105
        %2107 = vdwg.mxu0
        %v2108 = vpack.c.bf16 %v1975, %v1973
        %v2109 = vpack.c.bf16 %v1980, %v1978
        %v2110 = vpack.c.bf16 %v1985, %v1983
        %v2111 = vpack.c.bf16 %v1990, %v1988
        %v2112 = vpack.c.bf16 %v1995, %v1993
        %v2113 = vpack.c.bf16 %v2000, %v1998
        %2114 = vmatpush.bf16.msra.mxu0 0
        %2115 = vmatpush.bf16.msra.mxu0 0
        %2116 = vmatpush.bf16.msra.mxu0 %v2113
        %2117 = vmatpush.bf16.msra.mxu0 %v2112
        %2118 = vmatpush.bf16.msra.mxu0 %v2111
        %2119 = vmatpush.bf16.msra.mxu0 %v2110
        %2120 = vmatpush.bf16.msra.mxu0 %v2109
        %2121 = vmatpush.bf16.msra.mxu0 %v2108
        %2122 = vmatmul.bf16.gmra.mxu0 %v2052
        %v2123 = vpop.f32.mrf.mxu0
        %v2124 = vadd.f32 0.0, %v2123
        %v2125 = vpop.f32.mrf.mxu0
        %v2126 = vadd.f32 0.0, %v2125
        %2127 = vmatmul.bf16.gmra.mxu0 %v2055
        %v2128 = vpop.f32.mrf.mxu0
        %v2129 = vadd.f32 0.0, %v2128
        %v2130 = vpop.f32.mrf.mxu0
        %v2131 = vadd.f32 0.0, %v2130
        %2132 = vmatmul.bf16.gmra.mxu0 %v2058
        %v2133 = vpop.f32.mrf.mxu0
        %v2134 = vadd.f32 0.0, %v2133
        %v2135 = vpop.f32.mrf.mxu0
        %v2136 = vadd.f32 0.0, %v2135
        %2137 = vmatmul.bf16.gmra.mxu0 %v2061
        %v2138 = vpop.f32.mrf.mxu0
        %v2139 = vadd.f32 0.0, %v2138
        %v2140 = vpop.f32.mrf.mxu0
        %v2141 = vadd.f32 0.0, %v2140
        %2142 = vmatmul.bf16.gmra.mxu0 %v2064
        %v2143 = vpop.f32.mrf.mxu0
        %v2144 = vadd.f32 0.0, %v2143
        %v2145 = vpop.f32.mrf.mxu0
        %v2146 = vadd.f32 0.0, %v2145
        %2147 = vmatmul.bf16.gmra.mxu0 %v2067
        %v2148 = vpop.f32.mrf.mxu0
        %v2149 = vadd.f32 0.0, %v2148
        %v2150 = vpop.f32.mrf.mxu0
        %v2151 = vadd.f32 0.0, %v2150
        %2152 = vdwg.mxu0
        %s2153 = scalar_lea.vmem %s10, 1
        %v2154 = vld [vmem:[%s2153] sm:$0x1]
        %v2156 = vperm.slane %v2154, 0
        %v2158 = vmul.f32 %v2079, %v2156
        %v2159 = vmul.f32 %v2081, %v2156
        %v2160 = vmul.f32 %v2084, %v2156
        %v2161 = vmul.f32 %v2086, %v2156
        %v2162 = vmul.f32 %v2089, %v2156
        %v2163 = vmul.f32 %v2091, %v2156
        %v2164 = vmul.f32 %v2094, %v2156
        %v2165 = vmul.f32 %v2096, %v2156
        %v2166 = vmul.f32 %v2099, %v2156
        %v2167 = vmul.f32 %v2101, %v2156
        %v2168 = vmul.f32 %v2104, %v2156
        %v2169 = vmul.f32 %v2106, %v2156
        %v2170 = vmul.f32 %v2124, %v2156
        %v2171 = vmul.f32 %v2126, %v2156
        %v2172 = vmul.f32 %v2129, %v2156
        %v2173 = vmul.f32 %v2131, %v2156
        %v2174 = vmul.f32 %v2134, %v2156
        %v2175 = vmul.f32 %v2136, %v2156
        %v2176 = vmul.f32 %v2139, %v2156
        %v2177 = vmul.f32 %v2141, %v2156
        %v2178 = vmul.f32 %v2144, %v2156
        %v2179 = vmul.f32 %v2146, %v2156
        %v2180 = vmul.f32 %v2149, %v2156
        %v2181 = vmul.f32 %v2151, %v2156
        %s2182 = scalar_lea.vmem %s11, 1
        %v2183 = vld [vmem:[%s2182] sm:$0x1]
        %v2185 = vperm.slane %v2183, 0
        %v2187 = vadd.f32 %v2158, %v2185
        %v2188 = vadd.f32 %v2159, %v2185
        %v2189 = vadd.f32 %v2160, %v2185
        %v2190 = vadd.f32 %v2161, %v2185
        %v2191 = vadd.f32 %v2162, %v2185
        %v2192 = vadd.f32 %v2163, %v2185
        %v2193 = vadd.f32 %v2164, %v2185
        %v2194 = vadd.f32 %v2165, %v2185
        %v2195 = vadd.f32 %v2166, %v2185
        %v2196 = vadd.f32 %v2167, %v2185
        %v2197 = vadd.f32 %v2168, %v2185
        %v2198 = vadd.f32 %v2169, %v2185
        %v2199 = vadd.f32 %v2170, %v2185
        %v2200 = vadd.f32 %v2171, %v2185
        %v2201 = vadd.f32 %v2172, %v2185
        %v2202 = vadd.f32 %v2173, %v2185
        %v2203 = vadd.f32 %v2174, %v2185
        %v2204 = vadd.f32 %v2175, %v2185
        %v2205 = vadd.f32 %v2176, %v2185
        %v2206 = vadd.f32 %v2177, %v2185
        %v2207 = vadd.f32 %v2178, %v2185
        %v2208 = vadd.f32 %v2179, %v2185
        %v2209 = vadd.f32 %v2180, %v2185
        %v2210 = vadd.f32 %v2181, %v2185
        %v2211 = vmax.f32 %v2187, 0.0
        %v2212 = vmax.f32 %v2188, 0.0
        %v2213 = vmax.f32 %v2189, 0.0
        %v2214 = vmax.f32 %v2190, 0.0
        %v2215 = vmax.f32 %v2191, 0.0
        %v2216 = vmax.f32 %v2192, 0.0
        %v2217 = vmax.f32 %v2193, 0.0
        %v2218 = vmax.f32 %v2194, 0.0
        %v2219 = vmax.f32 %v2195, 0.0
        %v2220 = vmax.f32 %v2196, 0.0
        %v2221 = vmax.f32 %v2197, 0.0
        %v2222 = vmax.f32 %v2198, 0.0
        %v2223 = vmax.f32 %v2199, 0.0
        %v2224 = vmax.f32 %v2200, 0.0
        %v2225 = vmax.f32 %v2201, 0.0
        %v2226 = vmax.f32 %v2202, 0.0
        %v2227 = vmax.f32 %v2203, 0.0
        %v2228 = vmax.f32 %v2204, 0.0
        %v2229 = vmax.f32 %v2205, 0.0
        %v2230 = vmax.f32 %v2206, 0.0
        %v2231 = vmax.f32 %v2207, 0.0
        %v2232 = vmax.f32 %v2208, 0.0
        %v2233 = vmax.f32 %v2209, 0.0
        %v2234 = vmax.f32 %v2210, 0.0
        %s2235 = scalar_lea.vmem %s12, 32
        %v2236 = vld [vmem:[%s2235] sm:$0xf]
        %v2237 = vld [vmem:[%s2235 + $0x4] sm:$0xf]
        %v2238 = vld [vmem:[%s2235 + $0x8] sm:$0xf]
        %v2239 = vld [vmem:[%s2235 + $0xc] sm:$0xf]
        %v2240 = vld [vmem:[%s2235 + $0x10] sm:$0xf]
        %v2241 = vld [vmem:[%s2235 + $0x14] sm:$0xf]
        %v2242 = vld [vmem:[%s2235 + $0x18] sm:$0xf]
        %v2243 = vld [vmem:[%s2235 + $0x1c] sm:$0xf]
        %v2244 = vpack.c.bf16 %v2212, %v2211
        %v2245 = vpack.c.bf16 %v2214, %v2213
        %v2246 = vpack.c.bf16 %v2216, %v2215
        %v2247 = vpack.c.bf16 %v2218, %v2217
        %v2248 = vpack.c.bf16 %v2220, %v2219
        %v2249 = vpack.c.bf16 %v2222, %v2221
        %v2250 = vpack.c.bf16 %v2224, %v2223
        %v2251 = vpack.c.bf16 %v2226, %v2225
        %v2252 = vpack.c.bf16 %v2228, %v2227
        %v2253 = vpack.c.bf16 %v2230, %v2229
        %v2254 = vpack.c.bf16 %v2232, %v2231
        %v2255 = vpack.c.bf16 %v2234, %v2233
        %s2256 = scalar_lea.vmem %s13, 1
        %v2257 = vld [vmem:[%s2256] sm:$0x1]
        %v2259 = vperm.slane %v2257, 0
        %v2269 = vunpack.c.l.b16 %v2236
        %v2270 = vunpack.c.l.b16 %v2237
        %v2271 = vunpack.c.l.b16 %v2238
        %v2272 = vunpack.c.l.b16 %v2239
        %v2273 = vunpack.c.l.b16 %v2240
        %v2274 = vunpack.c.l.b16 %v2241
        %v2275 = vunpack.c.l.b16 %v2242
        %v2276 = vunpack.c.l.b16 %v2243
        %v2277 = vpack.c.b16 %v2270, %v2269
        %v2278 = vpack.c.b16 %v2272, %v2271
        %v2279 = vpack.c.b16 %v2274, %v2273
        %v2280 = vpack.c.b16 %v2276, %v2275
        %v2286 = vsel %vm1070, %v2244, 0
        %v2289 = vsel %vm1070, %v2245, 0
        %v2292 = vsel %vm1070, %v2246, 0
        %v2295 = vsel %vm1070, %v2247, 0
        %v2298 = vsel %vm1070, %v2248, 0
        %v2301 = vsel %vm1070, %v2249, 0
        %v2304 = vsel %vm1070, %v2250, 0
        %v2307 = vsel %vm1070, %v2251, 0
        %v2310 = vsel %vm1070, %v2252, 0
        %v2313 = vsel %vm1070, %v2253, 0
        %v2316 = vsel %vm1070, %v2254, 0
        %v2319 = vsel %vm1070, %v2255, 0
        %2321 = vmatpush.bf16.msra.mxu0 0
        %2322 = vmatpush.bf16.msra.mxu0 0
        %2323 = vmatpush.bf16.msra.mxu0 0
        %2324 = vmatpush.bf16.msra.mxu0 0
        %2325 = vmatpush.bf16.msra.mxu0 %v2280
        %2326 = vmatpush.bf16.msra.mxu0 %v2279
        %2327 = vmatpush.bf16.msra.mxu0 %v2278
        %2328 = vmatpush.bf16.msra.mxu0 %v2277
        %2329 = vmatmul.bf16.gmra.mxu0 %v2286
        %v2330 = vpop.f32.mrf.mxu0
        %v2331 = vadd.f32 %v2259, %v2330
        %v2332 = vpop.f32.mrf.mxu0
        %v2333 = vadd.f32 %v2259, %v2332
        %2334 = vmatmul.bf16.gmra.mxu0 %v2289
        %v2335 = vpop.f32.mrf.mxu0
        %v2336 = vadd.f32 %v2259, %v2335
        %v2337 = vpop.f32.mrf.mxu0
        %v2338 = vadd.f32 %v2259, %v2337
        %2339 = vmatmul.bf16.gmra.mxu0 %v2292
        %v2340 = vpop.f32.mrf.mxu0
        %v2341 = vadd.f32 %v2259, %v2340
        %v2342 = vpop.f32.mrf.mxu0
        %v2343 = vadd.f32 %v2259, %v2342
        %2344 = vmatmul.bf16.gmra.mxu0 %v2295
        %v2345 = vpop.f32.mrf.mxu0
        %v2346 = vadd.f32 %v2259, %v2345
        %v2347 = vpop.f32.mrf.mxu0
        %v2348 = vadd.f32 %v2259, %v2347
        %2349 = vmatmul.bf16.gmra.mxu0 %v2298
        %v2350 = vpop.f32.mrf.mxu0
        %v2351 = vadd.f32 %v2259, %v2350
        %v2352 = vpop.f32.mrf.mxu0
        %v2353 = vadd.f32 %v2259, %v2352
        %2354 = vmatmul.bf16.gmra.mxu0 %v2301
        %v2355 = vpop.f32.mrf.mxu0
        %v2356 = vadd.f32 %v2259, %v2355
        %v2357 = vpop.f32.mrf.mxu0
        %v2358 = vadd.f32 %v2259, %v2357
        %2359 = vmatmul.bf16.gmra.mxu0 %v2304
        %v2360 = vpop.f32.mrf.mxu0
        %v2361 = vadd.f32 %v2259, %v2360
        %v2362 = vpop.f32.mrf.mxu0
        %v2363 = vadd.f32 %v2259, %v2362
        %2364 = vmatmul.bf16.gmra.mxu0 %v2307
        %v2365 = vpop.f32.mrf.mxu0
        %v2366 = vadd.f32 %v2259, %v2365
        %v2367 = vpop.f32.mrf.mxu0
        %v2368 = vadd.f32 %v2259, %v2367
        %2369 = vmatmul.bf16.gmra.mxu0 %v2310
        %v2370 = vpop.f32.mrf.mxu0
        %v2371 = vadd.f32 %v2259, %v2370
        %v2372 = vpop.f32.mrf.mxu0
        %v2373 = vadd.f32 %v2259, %v2372
        %2374 = vmatmul.bf16.gmra.mxu0 %v2313
        %v2375 = vpop.f32.mrf.mxu0
        %v2376 = vadd.f32 %v2259, %v2375
        %v2377 = vpop.f32.mrf.mxu0
        %v2378 = vadd.f32 %v2259, %v2377
        %2379 = vmatmul.bf16.gmra.mxu0 %v2316
        %v2380 = vpop.f32.mrf.mxu0
        %v2381 = vadd.f32 %v2259, %v2380
        %v2382 = vpop.f32.mrf.mxu0
        %v2383 = vadd.f32 %v2259, %v2382
        %2384 = vmatmul.bf16.gmra.mxu0 %v2319
        %v2385 = vpop.f32.mrf.mxu0
        %v2386 = vadd.f32 %v2259, %v2385
        %v2387 = vpop.f32.mrf.mxu0
        %v2388 = vadd.f32 %v2259, %v2387
        %2389 = vdwg.mxu0
        %v2390 = vadd.f32 %v2331, %v1828
        %v2391 = vadd.f32 %v2333, %v1829
        %v2392 = vadd.f32 %v2336, %v1830
        %v2393 = vadd.f32 %v2338, %v1831
        %v2394 = vadd.f32 %v2341, %v1832
        %v2395 = vadd.f32 %v2343, %v1833
        %v2396 = vadd.f32 %v2346, %v1834
        %v2397 = vadd.f32 %v2348, %v1835
        %v2398 = vadd.f32 %v2351, %v1836
        %v2399 = vadd.f32 %v2353, %v1837
        %v2400 = vadd.f32 %v2356, %v1838
        %v2401 = vadd.f32 %v2358, %v1839
        %v2402 = vadd.f32 %v2361, %v1840
        %v2403 = vadd.f32 %v2363, %v1841
        %v2404 = vadd.f32 %v2366, %v1842
        %v2405 = vadd.f32 %v2368, %v1843
        %v2406 = vadd.f32 %v2371, %v1844
        %v2407 = vadd.f32 %v2373, %v1845
        %v2408 = vadd.f32 %v2376, %v1846
        %v2409 = vadd.f32 %v2378, %v1847
        %v2410 = vadd.f32 %v2381, %v1848
        %v2411 = vadd.f32 %v2383, %v1849
        %v2412 = vadd.f32 %v2386, %v1850
        %v2413 = vadd.f32 %v2388, %v1851
        %s2414 = scalar_lea.vmem %s9, 64
        %v2415 = vld [vmem:[%s2414] sm:$0xf]
        %v2416 = vld [vmem:[%s2414 + $0x4] sm:$0xf]
        %v2417 = vld [vmem:[%s2414 + $0x8] sm:$0xf]
        %v2418 = vld [vmem:[%s2414 + $0xc] sm:$0xf]
        %v2419 = vld [vmem:[%s2414 + $0x10] sm:$0xf]
        %v2420 = vld [vmem:[%s2414 + $0x14] sm:$0xf]
        %v2421 = vld [vmem:[%s2414 + $0x18] sm:$0xf]
        %v2422 = vld [vmem:[%s2414 + $0x1c] sm:$0xf]
        %v2423 = vpack.c.bf16 %v2391, %v2390
        %v2424 = vpack.c.bf16 %v2393, %v2392
        %v2425 = vpack.c.bf16 %v2395, %v2394
        %v2426 = vpack.c.bf16 %v2397, %v2396
        %v2427 = vpack.c.bf16 %v2399, %v2398
        %v2428 = vpack.c.bf16 %v2401, %v2400
        %v2429 = vpack.c.bf16 %v2403, %v2402
        %v2430 = vpack.c.bf16 %v2405, %v2404
        %v2431 = vpack.c.bf16 %v2407, %v2406
        %v2432 = vpack.c.bf16 %v2409, %v2408
        %v2433 = vpack.c.bf16 %v2411, %v2410
        %v2434 = vpack.c.bf16 %v2413, %v2412
        %v2443 = vunpack.c.l.b16 %v2415
        %v2444 = vunpack.c.l.b16 %v2416
        %v2445 = vunpack.c.l.b16 %v2417
        %v2446 = vunpack.c.l.b16 %v2418
        %v2447 = vunpack.c.l.b16 %v2419
        %v2448 = vunpack.c.l.b16 %v2420
        %v2449 = vunpack.c.l.b16 %v2421
        %v2450 = vunpack.c.l.b16 %v2422
        %v2451 = vpack.c.b16 %v2444, %v2443
        %v2452 = vpack.c.b16 %v2446, %v2445
        %v2453 = vpack.c.b16 %v2448, %v2447
        %v2454 = vpack.c.b16 %v2450, %v2449
        %v2460 = vsel %vm1070, %v2423, 0
        %v2463 = vsel %vm1070, %v2424, 0
        %v2466 = vsel %vm1070, %v2425, 0
        %v2469 = vsel %vm1070, %v2426, 0
        %v2472 = vsel %vm1070, %v2427, 0
        %v2475 = vsel %vm1070, %v2428, 0
        %v2478 = vsel %vm1070, %v2429, 0
        %v2481 = vsel %vm1070, %v2430, 0
        %v2484 = vsel %vm1070, %v2431, 0
        %v2487 = vsel %vm1070, %v2432, 0
        %v2490 = vsel %vm1070, %v2433, 0
        %v2493 = vsel %vm1070, %v2434, 0
        %2495 = vmatpush.bf16.msra.mxu0 0
        %2496 = vmatpush.bf16.msra.mxu0 0
        %2497 = vmatpush.bf16.msra.mxu0 0
        %2498 = vmatpush.bf16.msra.mxu0 0
        %2499 = vmatpush.bf16.msra.mxu0 %v2454
        %2500 = vmatpush.bf16.msra.mxu0 %v2453
        %2501 = vmatpush.bf16.msra.mxu0 %v2452
        %2502 = vmatpush.bf16.msra.mxu0 %v2451
        %2503 = vmatmul.bf16.gmra.mxu0 %v2460
        %v2504 = vpop.f32.mrf.mxu0
        %v2505 = vadd.f32 0.0, %v2504
        %v2506 = vpop.f32.mrf.mxu0
        %v2507 = vadd.f32 0.0, %v2506
        %2508 = vmatmul.bf16.gmra.mxu0 %v2463
        %v2509 = vpop.f32.mrf.mxu0
        %v2510 = vadd.f32 0.0, %v2509
        %v2511 = vpop.f32.mrf.mxu0
        %v2512 = vadd.f32 0.0, %v2511
        %2513 = vmatmul.bf16.gmra.mxu0 %v2466
        %v2514 = vpop.f32.mrf.mxu0
        %v2515 = vadd.f32 0.0, %v2514
        %v2516 = vpop.f32.mrf.mxu0
        %v2517 = vadd.f32 0.0, %v2516
        %2518 = vmatmul.bf16.gmra.mxu0 %v2469
        %v2519 = vpop.f32.mrf.mxu0
        %v2520 = vadd.f32 0.0, %v2519
        %v2521 = vpop.f32.mrf.mxu0
        %v2522 = vadd.f32 0.0, %v2521
        %2523 = vmatmul.bf16.gmra.mxu0 %v2472
        %v2524 = vpop.f32.mrf.mxu0
        %v2525 = vadd.f32 0.0, %v2524
        %v2526 = vpop.f32.mrf.mxu0
        %v2527 = vadd.f32 0.0, %v2526
        %2528 = vmatmul.bf16.gmra.mxu0 %v2475
        %v2529 = vpop.f32.mrf.mxu0
        %v2530 = vadd.f32 0.0, %v2529
        %v2531 = vpop.f32.mrf.mxu0
        %v2532 = vadd.f32 0.0, %v2531
        %2533 = vmatmul.bf16.gmra.mxu0 %v2478
        %v2534 = vpop.f32.mrf.mxu0
        %v2535 = vadd.f32 0.0, %v2534
        %v2536 = vpop.f32.mrf.mxu0
        %v2537 = vadd.f32 0.0, %v2536
        %2538 = vmatmul.bf16.gmra.mxu0 %v2481
        %v2539 = vpop.f32.mrf.mxu0
        %v2540 = vadd.f32 0.0, %v2539
        %v2541 = vpop.f32.mrf.mxu0
        %v2542 = vadd.f32 0.0, %v2541
        %2543 = vmatmul.bf16.gmra.mxu0 %v2484
        %v2544 = vpop.f32.mrf.mxu0
        %v2545 = vadd.f32 0.0, %v2544
        %v2546 = vpop.f32.mrf.mxu0
        %v2547 = vadd.f32 0.0, %v2546
        %2548 = vmatmul.bf16.gmra.mxu0 %v2487
        %v2549 = vpop.f32.mrf.mxu0
        %v2550 = vadd.f32 0.0, %v2549
        %v2551 = vpop.f32.mrf.mxu0
        %v2552 = vadd.f32 0.0, %v2551
        %2553 = vmatmul.bf16.gmra.mxu0 %v2490
        %v2554 = vpop.f32.mrf.mxu0
        %v2555 = vadd.f32 0.0, %v2554
        %v2556 = vpop.f32.mrf.mxu0
        %v2557 = vadd.f32 0.0, %v2556
        %2558 = vmatmul.bf16.gmra.mxu0 %v2493
        %v2559 = vpop.f32.mrf.mxu0
        %v2560 = vadd.f32 0.0, %v2559
        %v2561 = vpop.f32.mrf.mxu0
        %v2562 = vadd.f32 0.0, %v2561
        %2563 = vdwg.mxu0
        %s2564 = scalar_lea.vmem %s8, 96
        %v2565 = vld [vmem:[%s2564] sm:$0xf]
        %v2566 = vld [vmem:[%s2564 + $0x4] sm:$0xf]
        %v2567 = vld [vmem:[%s2564 + $0x8] sm:$0xf]
        %v2568 = vld [vmem:[%s2564 + $0xc] sm:$0xf]
        %v2569 = vld [vmem:[%s2564 + $0x10] sm:$0xf]
        %v2570 = vld [vmem:[%s2564 + $0x14] sm:$0xf]
        %v2571 = vld [vmem:[%s2564 + $0x18] sm:$0xf]
        %v2572 = vld [vmem:[%s2564 + $0x1c] sm:$0xf]
        %v2573 = vld [vmem:[%s2564 + $0x20] sm:$0xf]
        %v2574 = vld [vmem:[%s2564 + $0x24] sm:$0xf]
        %v2575 = vld [vmem:[%s2564 + $0x28] sm:$0xf]
        %v2576 = vld [vmem:[%s2564 + $0x2c] sm:$0xf]
        %v2577 = vpack.c.bf16 %v2507, %v2505
        %v2578 = vpack.c.bf16 %v2512, %v2510
        %v2579 = vpack.c.bf16 %v2517, %v2515
        %v2580 = vpack.c.bf16 %v2522, %v2520
        %v2581 = vpack.c.bf16 %v2527, %v2525
        %v2582 = vpack.c.bf16 %v2532, %v2530
        %v2595 = vunpack.c.l.b16 %v2565
        %v2596 = vunpack.c.l.b16 %v2566
        %v2597 = vunpack.c.l.b16 %v2567
        %v2598 = vunpack.c.l.b16 %v2568
        %v2599 = vunpack.c.l.b16 %v2569
        %v2600 = vunpack.c.l.b16 %v2570
        %v2601 = vunpack.c.l.b16 %v2571
        %v2602 = vunpack.c.l.b16 %v2572
        %v2603 = vunpack.c.l.b16 %v2573
        %v2604 = vunpack.c.l.b16 %v2574
        %v2605 = vunpack.c.l.b16 %v2575
        %v2606 = vunpack.c.l.b16 %v2576
        %v2607 = vpack.c.b16 %v2596, %v2595
        %v2608 = vpack.c.b16 %v2598, %v2597
        %v2609 = vpack.c.b16 %v2600, %v2599
        %v2610 = vpack.c.b16 %v2602, %v2601
        %v2611 = vpack.c.b16 %v2604, %v2603
        %v2612 = vpack.c.b16 %v2606, %v2605
        %v2614 = vsel %vm839, %v2607, 0
        %v2617 = vsel %vm839, %v2608, 0
        %v2620 = vsel %vm839, %v2609, 0
        %v2623 = vsel %vm839, %v2610, 0
        %v2626 = vsel %vm839, %v2611, 0
        %v2629 = vsel %vm839, %v2612, 0
        %2631 = vmatpush.bf16.msra.mxu0 0
        %2632 = vmatpush.bf16.msra.mxu0 0
        %2633 = vmatpush.bf16.msra.mxu0 %v2582
        %2634 = vmatpush.bf16.msra.mxu0 %v2581
        %2635 = vmatpush.bf16.msra.mxu0 %v2580
        %2636 = vmatpush.bf16.msra.mxu0 %v2579
        %2637 = vmatpush.bf16.msra.mxu0 %v2578
        %2638 = vmatpush.bf16.msra.mxu0 %v2577
        %2639 = vmatmul.bf16.gmra.mxu0 %v2614
        %v2640 = vpop.f32.mrf.mxu0
        %v2641 = vadd.f32 0.0, %v2640
        %v2642 = vpop.f32.mrf.mxu0
        %v2643 = vadd.f32 0.0, %v2642
        %2644 = vmatmul.bf16.gmra.mxu0 %v2617
        %v2645 = vpop.f32.mrf.mxu0
        %v2646 = vadd.f32 0.0, %v2645
        %v2647 = vpop.f32.mrf.mxu0
        %v2648 = vadd.f32 0.0, %v2647
        %2649 = vmatmul.bf16.gmra.mxu0 %v2620
        %v2650 = vpop.f32.mrf.mxu0
        %v2651 = vadd.f32 0.0, %v2650
        %v2652 = vpop.f32.mrf.mxu0
        %v2653 = vadd.f32 0.0, %v2652
        %2654 = vmatmul.bf16.gmra.mxu0 %v2623
        %v2655 = vpop.f32.mrf.mxu0
        %v2656 = vadd.f32 0.0, %v2655
        %v2657 = vpop.f32.mrf.mxu0
        %v2658 = vadd.f32 0.0, %v2657
        %2659 = vmatmul.bf16.gmra.mxu0 %v2626
        %v2660 = vpop.f32.mrf.mxu0
        %v2661 = vadd.f32 0.0, %v2660
        %v2662 = vpop.f32.mrf.mxu0
        %v2663 = vadd.f32 0.0, %v2662
        %2664 = vmatmul.bf16.gmra.mxu0 %v2629
        %v2665 = vpop.f32.mrf.mxu0
        %v2666 = vadd.f32 0.0, %v2665
        %v2667 = vpop.f32.mrf.mxu0
        %v2668 = vadd.f32 0.0, %v2667
        %2669 = vdwg.mxu0
        %v2670 = vpack.c.bf16 %v2537, %v2535
        %v2671 = vpack.c.bf16 %v2542, %v2540
        %v2672 = vpack.c.bf16 %v2547, %v2545
        %v2673 = vpack.c.bf16 %v2552, %v2550
        %v2674 = vpack.c.bf16 %v2557, %v2555
        %v2675 = vpack.c.bf16 %v2562, %v2560
        %2676 = vmatpush.bf16.msra.mxu0 0
        %2677 = vmatpush.bf16.msra.mxu0 0
        %2678 = vmatpush.bf16.msra.mxu0 %v2675
        %2679 = vmatpush.bf16.msra.mxu0 %v2674
        %2680 = vmatpush.bf16.msra.mxu0 %v2673
        %2681 = vmatpush.bf16.msra.mxu0 %v2672
        %2682 = vmatpush.bf16.msra.mxu0 %v2671
        %2683 = vmatpush.bf16.msra.mxu0 %v2670
        %2684 = vmatmul.bf16.gmra.mxu0 %v2614
        %v2685 = vpop.f32.mrf.mxu0
        %v2686 = vadd.f32 0.0, %v2685
        %v2687 = vpop.f32.mrf.mxu0
        %v2688 = vadd.f32 0.0, %v2687
        %2689 = vmatmul.bf16.gmra.mxu0 %v2617
        %v2690 = vpop.f32.mrf.mxu0
        %v2691 = vadd.f32 0.0, %v2690
        %v2692 = vpop.f32.mrf.mxu0
        %v2693 = vadd.f32 0.0, %v2692
        %2694 = vmatmul.bf16.gmra.mxu0 %v2620
        %v2695 = vpop.f32.mrf.mxu0
        %v2696 = vadd.f32 0.0, %v2695
        %v2697 = vpop.f32.mrf.mxu0
        %v2698 = vadd.f32 0.0, %v2697
        %2699 = vmatmul.bf16.gmra.mxu0 %v2623
        %v2700 = vpop.f32.mrf.mxu0
        %v2701 = vadd.f32 0.0, %v2700
        %v2702 = vpop.f32.mrf.mxu0
        %v2703 = vadd.f32 0.0, %v2702
        %2704 = vmatmul.bf16.gmra.mxu0 %v2626
        %v2705 = vpop.f32.mrf.mxu0
        %v2706 = vadd.f32 0.0, %v2705
        %v2707 = vpop.f32.mrf.mxu0
        %v2708 = vadd.f32 0.0, %v2707
        %2709 = vmatmul.bf16.gmra.mxu0 %v2629
        %v2710 = vpop.f32.mrf.mxu0
        %v2711 = vadd.f32 0.0, %v2710
        %v2712 = vpop.f32.mrf.mxu0
        %v2713 = vadd.f32 0.0, %v2712
        %2714 = vdwg.mxu0
        %s2715 = scalar_lea.vmem %s10, 2
        %v2716 = vld [vmem:[%s2715] sm:$0x1]
        %v2718 = vperm.slane %v2716, 0
        %v2720 = vmul.f32 %v2641, %v2718
        %v2721 = vmul.f32 %v2643, %v2718
        %v2722 = vmul.f32 %v2646, %v2718
        %v2723 = vmul.f32 %v2648, %v2718
        %v2724 = vmul.f32 %v2651, %v2718
        %v2725 = vmul.f32 %v2653, %v2718
        %v2726 = vmul.f32 %v2656, %v2718
        %v2727 = vmul.f32 %v2658, %v2718
        %v2728 = vmul.f32 %v2661, %v2718
        %v2729 = vmul.f32 %v2663, %v2718
        %v2730 = vmul.f32 %v2666, %v2718
        %v2731 = vmul.f32 %v2668, %v2718
        %v2732 = vmul.f32 %v2686, %v2718
        %v2733 = vmul.f32 %v2688, %v2718
        %v2734 = vmul.f32 %v2691, %v2718
        %v2735 = vmul.f32 %v2693, %v2718
        %v2736 = vmul.f32 %v2696, %v2718
        %v2737 = vmul.f32 %v2698, %v2718
        %v2738 = vmul.f32 %v2701, %v2718
        %v2739 = vmul.f32 %v2703, %v2718
        %v2740 = vmul.f32 %v2706, %v2718
        %v2741 = vmul.f32 %v2708, %v2718
        %v2742 = vmul.f32 %v2711, %v2718
        %v2743 = vmul.f32 %v2713, %v2718
        %s2744 = scalar_lea.vmem %s11, 2
        %v2745 = vld [vmem:[%s2744] sm:$0x1]
        %v2747 = vperm.slane %v2745, 0
        %v2749 = vadd.f32 %v2720, %v2747
        %v2750 = vadd.f32 %v2721, %v2747
        %v2751 = vadd.f32 %v2722, %v2747
        %v2752 = vadd.f32 %v2723, %v2747
        %v2753 = vadd.f32 %v2724, %v2747
        %v2754 = vadd.f32 %v2725, %v2747
        %v2755 = vadd.f32 %v2726, %v2747
        %v2756 = vadd.f32 %v2727, %v2747
        %v2757 = vadd.f32 %v2728, %v2747
        %v2758 = vadd.f32 %v2729, %v2747
        %v2759 = vadd.f32 %v2730, %v2747
        %v2760 = vadd.f32 %v2731, %v2747
        %v2761 = vadd.f32 %v2732, %v2747
        %v2762 = vadd.f32 %v2733, %v2747
        %v2763 = vadd.f32 %v2734, %v2747
        %v2764 = vadd.f32 %v2735, %v2747
        %v2765 = vadd.f32 %v2736, %v2747
        %v2766 = vadd.f32 %v2737, %v2747
        %v2767 = vadd.f32 %v2738, %v2747
        %v2768 = vadd.f32 %v2739, %v2747
        %v2769 = vadd.f32 %v2740, %v2747
        %v2770 = vadd.f32 %v2741, %v2747
        %v2771 = vadd.f32 %v2742, %v2747
        %v2772 = vadd.f32 %v2743, %v2747
        %v2773 = vmax.f32 %v2749, 0.0
        %v2774 = vmax.f32 %v2750, 0.0
        %v2775 = vmax.f32 %v2751, 0.0
        %v2776 = vmax.f32 %v2752, 0.0
        %v2777 = vmax.f32 %v2753, 0.0
        %v2778 = vmax.f32 %v2754, 0.0
        %v2779 = vmax.f32 %v2755, 0.0
        %v2780 = vmax.f32 %v2756, 0.0
        %v2781 = vmax.f32 %v2757, 0.0
        %v2782 = vmax.f32 %v2758, 0.0
        %v2783 = vmax.f32 %v2759, 0.0
        %v2784 = vmax.f32 %v2760, 0.0
        %v2785 = vmax.f32 %v2761, 0.0
        %v2786 = vmax.f32 %v2762, 0.0
        %v2787 = vmax.f32 %v2763, 0.0
        %v2788 = vmax.f32 %v2764, 0.0
        %v2789 = vmax.f32 %v2765, 0.0
        %v2790 = vmax.f32 %v2766, 0.0
        %v2791 = vmax.f32 %v2767, 0.0
        %v2792 = vmax.f32 %v2768, 0.0
        %v2793 = vmax.f32 %v2769, 0.0
        %v2794 = vmax.f32 %v2770, 0.0
        %v2795 = vmax.f32 %v2771, 0.0
        %v2796 = vmax.f32 %v2772, 0.0
        %s2797 = scalar_lea.vmem %s12, 64
        %v2798 = vld [vmem:[%s2797] sm:$0xf]
        %v2799 = vld [vmem:[%s2797 + $0x4] sm:$0xf]
        %v2800 = vld [vmem:[%s2797 + $0x8] sm:$0xf]
        %v2801 = vld [vmem:[%s2797 + $0xc] sm:$0xf]
        %v2802 = vld [vmem:[%s2797 + $0x10] sm:$0xf]
        %v2803 = vld [vmem:[%s2797 + $0x14] sm:$0xf]
        %v2804 = vld [vmem:[%s2797 + $0x18] sm:$0xf]
        %v2805 = vld [vmem:[%s2797 + $0x1c] sm:$0xf]
        %v2806 = vpack.c.bf16 %v2774, %v2773
        %v2807 = vpack.c.bf16 %v2776, %v2775
        %v2808 = vpack.c.bf16 %v2778, %v2777
        %v2809 = vpack.c.bf16 %v2780, %v2779
        %v2810 = vpack.c.bf16 %v2782, %v2781
        %v2811 = vpack.c.bf16 %v2784, %v2783
        %v2812 = vpack.c.bf16 %v2786, %v2785
        %v2813 = vpack.c.bf16 %v2788, %v2787
        %v2814 = vpack.c.bf16 %v2790, %v2789
        %v2815 = vpack.c.bf16 %v2792, %v2791
        %v2816 = vpack.c.bf16 %v2794, %v2793
        %v2817 = vpack.c.bf16 %v2796, %v2795
        %s2818 = scalar_lea.vmem %s13, 2
        %v2819 = vld [vmem:[%s2818] sm:$0x1]
        %v2821 = vperm.slane %v2819, 0
        %v2831 = vunpack.c.l.b16 %v2798
        %v2832 = vunpack.c.l.b16 %v2799
        %v2833 = vunpack.c.l.b16 %v2800
        %v2834 = vunpack.c.l.b16 %v2801
        %v2835 = vunpack.c.l.b16 %v2802
        %v2836 = vunpack.c.l.b16 %v2803
        %v2837 = vunpack.c.l.b16 %v2804
        %v2838 = vunpack.c.l.b16 %v2805
        %v2839 = vpack.c.b16 %v2832, %v2831
        %v2840 = vpack.c.b16 %v2834, %v2833
        %v2841 = vpack.c.b16 %v2836, %v2835
        %v2842 = vpack.c.b16 %v2838, %v2837
        %v2848 = vsel %vm1070, %v2806, 0
        %v2851 = vsel %vm1070, %v2807, 0
        %v2854 = vsel %vm1070, %v2808, 0
        %v2857 = vsel %vm1070, %v2809, 0
        %v2860 = vsel %vm1070, %v2810, 0
        %v2863 = vsel %vm1070, %v2811, 0
        %v2866 = vsel %vm1070, %v2812, 0
        %v2869 = vsel %vm1070, %v2813, 0
        %v2872 = vsel %vm1070, %v2814, 0
        %v2875 = vsel %vm1070, %v2815, 0
        %v2878 = vsel %vm1070, %v2816, 0
        %v2881 = vsel %vm1070, %v2817, 0
        %2883 = vmatpush.bf16.msra.mxu0 0
        %2884 = vmatpush.bf16.msra.mxu0 0
        %2885 = vmatpush.bf16.msra.mxu0 0
        %2886 = vmatpush.bf16.msra.mxu0 0
        %2887 = vmatpush.bf16.msra.mxu0 %v2842
        %2888 = vmatpush.bf16.msra.mxu0 %v2841
        %2889 = vmatpush.bf16.msra.mxu0 %v2840
        %2890 = vmatpush.bf16.msra.mxu0 %v2839
        %2891 = vmatmul.bf16.gmra.mxu0 %v2848
        %v2892 = vpop.f32.mrf.mxu0
        %v2893 = vadd.f32 %v2821, %v2892
        %v2894 = vpop.f32.mrf.mxu0
        %v2895 = vadd.f32 %v2821, %v2894
        %2896 = vmatmul.bf16.gmra.mxu0 %v2851
        %v2897 = vpop.f32.mrf.mxu0
        %v2898 = vadd.f32 %v2821, %v2897
        %v2899 = vpop.f32.mrf.mxu0
        %v2900 = vadd.f32 %v2821, %v2899
        %2901 = vmatmul.bf16.gmra.mxu0 %v2854
        %v2902 = vpop.f32.mrf.mxu0
        %v2903 = vadd.f32 %v2821, %v2902
        %v2904 = vpop.f32.mrf.mxu0
        %v2905 = vadd.f32 %v2821, %v2904
        %2906 = vmatmul.bf16.gmra.mxu0 %v2857
        %v2907 = vpop.f32.mrf.mxu0
        %v2908 = vadd.f32 %v2821, %v2907
        %v2909 = vpop.f32.mrf.mxu0
        %v2910 = vadd.f32 %v2821, %v2909
        %2911 = vmatmul.bf16.gmra.mxu0 %v2860
        %v2912 = vpop.f32.mrf.mxu0
        %v2913 = vadd.f32 %v2821, %v2912
        %v2914 = vpop.f32.mrf.mxu0
        %v2915 = vadd.f32 %v2821, %v2914
        %2916 = vmatmul.bf16.gmra.mxu0 %v2863
        %v2917 = vpop.f32.mrf.mxu0
        %v2918 = vadd.f32 %v2821, %v2917
        %v2919 = vpop.f32.mrf.mxu0
        %v2920 = vadd.f32 %v2821, %v2919
        %2921 = vmatmul.bf16.gmra.mxu0 %v2866
        %v2922 = vpop.f32.mrf.mxu0
        %v2923 = vadd.f32 %v2821, %v2922
        %v2924 = vpop.f32.mrf.mxu0
        %v2925 = vadd.f32 %v2821, %v2924
        %2926 = vmatmul.bf16.gmra.mxu0 %v2869
        %v2927 = vpop.f32.mrf.mxu0
        %v2928 = vadd.f32 %v2821, %v2927
        %v2929 = vpop.f32.mrf.mxu0
        %v2930 = vadd.f32 %v2821, %v2929
        %2931 = vmatmul.bf16.gmra.mxu0 %v2872
        %v2932 = vpop.f32.mrf.mxu0
        %v2933 = vadd.f32 %v2821, %v2932
        %v2934 = vpop.f32.mrf.mxu0
        %v2935 = vadd.f32 %v2821, %v2934
        %2936 = vmatmul.bf16.gmra.mxu0 %v2875
        %v2937 = vpop.f32.mrf.mxu0
        %v2938 = vadd.f32 %v2821, %v2937
        %v2939 = vpop.f32.mrf.mxu0
        %v2940 = vadd.f32 %v2821, %v2939
        %2941 = vmatmul.bf16.gmra.mxu0 %v2878
        %v2942 = vpop.f32.mrf.mxu0
        %v2943 = vadd.f32 %v2821, %v2942
        %v2944 = vpop.f32.mrf.mxu0
        %v2945 = vadd.f32 %v2821, %v2944
        %2946 = vmatmul.bf16.gmra.mxu0 %v2881
        %v2947 = vpop.f32.mrf.mxu0
        %v2948 = vadd.f32 %v2821, %v2947
        %v2949 = vpop.f32.mrf.mxu0
        %v2950 = vadd.f32 %v2821, %v2949
        %2951 = vdwg.mxu0
        %v2952 = vadd.f32 %v2893, %v2390
        %v2953 = vadd.f32 %v2895, %v2391
        %v2954 = vadd.f32 %v2898, %v2392
        %v2955 = vadd.f32 %v2900, %v2393
        %v2956 = vadd.f32 %v2903, %v2394
        %v2957 = vadd.f32 %v2905, %v2395
        %v2958 = vadd.f32 %v2908, %v2396
        %v2959 = vadd.f32 %v2910, %v2397
        %v2960 = vadd.f32 %v2913, %v2398
        %v2961 = vadd.f32 %v2915, %v2399
        %v2962 = vadd.f32 %v2918, %v2400
        %v2963 = vadd.f32 %v2920, %v2401
        %v2964 = vadd.f32 %v2923, %v2402
        %v2965 = vadd.f32 %v2925, %v2403
        %v2966 = vadd.f32 %v2928, %v2404
        %v2967 = vadd.f32 %v2930, %v2405
        %v2968 = vadd.f32 %v2933, %v2406
        %v2969 = vadd.f32 %v2935, %v2407
        %v2970 = vadd.f32 %v2938, %v2408
        %v2971 = vadd.f32 %v2940, %v2409
        %v2972 = vadd.f32 %v2943, %v2410
        %v2973 = vadd.f32 %v2945, %v2411
        %v2974 = vadd.f32 %v2948, %v2412
        %v2975 = vadd.f32 %v2950, %v2413
        %s2976 = scalar_lea.vmem %s9, 96
        %v2977 = vld [vmem:[%s2976] sm:$0xf]
        %v2978 = vld [vmem:[%s2976 + $0x4] sm:$0xf]
        %v2979 = vld [vmem:[%s2976 + $0x8] sm:$0xf]
        %v2980 = vld [vmem:[%s2976 + $0xc] sm:$0xf]
        %v2981 = vld [vmem:[%s2976 + $0x10] sm:$0xf]
        %v2982 = vld [vmem:[%s2976 + $0x14] sm:$0xf]
        %v2983 = vld [vmem:[%s2976 + $0x18] sm:$0xf]
        %v2984 = vld [vmem:[%s2976 + $0x1c] sm:$0xf]
        %v2985 = vpack.c.bf16 %v2953, %v2952
        %v2986 = vpack.c.bf16 %v2955, %v2954
        %v2987 = vpack.c.bf16 %v2957, %v2956
        %v2988 = vpack.c.bf16 %v2959, %v2958
        %v2989 = vpack.c.bf16 %v2961, %v2960
        %v2990 = vpack.c.bf16 %v2963, %v2962
        %v2991 = vpack.c.bf16 %v2965, %v2964
        %v2992 = vpack.c.bf16 %v2967, %v2966
        %v2993 = vpack.c.bf16 %v2969, %v2968
        %v2994 = vpack.c.bf16 %v2971, %v2970
        %v2995 = vpack.c.bf16 %v2973, %v2972
        %v2996 = vpack.c.bf16 %v2975, %v2974
        %v3005 = vunpack.c.l.b16 %v2977
        %v3006 = vunpack.c.l.b16 %v2978
        %v3007 = vunpack.c.l.b16 %v2979
        %v3008 = vunpack.c.l.b16 %v2980
        %v3009 = vunpack.c.l.b16 %v2981
        %v3010 = vunpack.c.l.b16 %v2982
        %v3011 = vunpack.c.l.b16 %v2983
        %v3012 = vunpack.c.l.b16 %v2984
        %v3013 = vpack.c.b16 %v3006, %v3005
        %v3014 = vpack.c.b16 %v3008, %v3007
        %v3015 = vpack.c.b16 %v3010, %v3009
        %v3016 = vpack.c.b16 %v3012, %v3011
        %v3022 = vsel %vm1070, %v2985, 0
        %v3025 = vsel %vm1070, %v2986, 0
        %v3028 = vsel %vm1070, %v2987, 0
        %v3031 = vsel %vm1070, %v2988, 0
        %v3034 = vsel %vm1070, %v2989, 0
        %v3037 = vsel %vm1070, %v2990, 0
        %v3040 = vsel %vm1070, %v2991, 0
        %v3043 = vsel %vm1070, %v2992, 0
        %v3046 = vsel %vm1070, %v2993, 0
        %v3049 = vsel %vm1070, %v2994, 0
        %v3052 = vsel %vm1070, %v2995, 0
        %v3055 = vsel %vm1070, %v2996, 0
        %3057 = vmatpush.bf16.msra.mxu0 0
        %3058 = vmatpush.bf16.msra.mxu0 0
        %3059 = vmatpush.bf16.msra.mxu0 0
        %3060 = vmatpush.bf16.msra.mxu0 0
        %3061 = vmatpush.bf16.msra.mxu0 %v3016
        %3062 = vmatpush.bf16.msra.mxu0 %v3015
        %3063 = vmatpush.bf16.msra.mxu0 %v3014
        %3064 = vmatpush.bf16.msra.mxu0 %v3013
        %3065 = vmatmul.bf16.gmra.mxu0 %v3022
        %v3066 = vpop.f32.mrf.mxu0
        %v3067 = vadd.f32 0.0, %v3066
        %v3068 = vpop.f32.mrf.mxu0
        %v3069 = vadd.f32 0.0, %v3068
        %3070 = vmatmul.bf16.gmra.mxu0 %v3025
        %v3071 = vpop.f32.mrf.mxu0
        %v3072 = vadd.f32 0.0, %v3071
        %v3073 = vpop.f32.mrf.mxu0
        %v3074 = vadd.f32 0.0, %v3073
        %3075 = vmatmul.bf16.gmra.mxu0 %v3028
        %v3076 = vpop.f32.mrf.mxu0
        %v3077 = vadd.f32 0.0, %v3076
        %v3078 = vpop.f32.mrf.mxu0
        %v3079 = vadd.f32 0.0, %v3078
        %3080 = vmatmul.bf16.gmra.mxu0 %v3031
        %v3081 = vpop.f32.mrf.mxu0
        %v3082 = vadd.f32 0.0, %v3081
        %v3083 = vpop.f32.mrf.mxu0
        %v3084 = vadd.f32 0.0, %v3083
        %3085 = vmatmul.bf16.gmra.mxu0 %v3034
        %v3086 = vpop.f32.mrf.mxu0
        %v3087 = vadd.f32 0.0, %v3086
        %v3088 = vpop.f32.mrf.mxu0
        %v3089 = vadd.f32 0.0, %v3088
        %3090 = vmatmul.bf16.gmra.mxu0 %v3037
        %v3091 = vpop.f32.mrf.mxu0
        %v3092 = vadd.f32 0.0, %v3091
        %v3093 = vpop.f32.mrf.mxu0
        %v3094 = vadd.f32 0.0, %v3093
        %3095 = vmatmul.bf16.gmra.mxu0 %v3040
        %v3096 = vpop.f32.mrf.mxu0
        %v3097 = vadd.f32 0.0, %v3096
        %v3098 = vpop.f32.mrf.mxu0
        %v3099 = vadd.f32 0.0, %v3098
        %3100 = vmatmul.bf16.gmra.mxu0 %v3043
        %v3101 = vpop.f32.mrf.mxu0
        %v3102 = vadd.f32 0.0, %v3101
        %v3103 = vpop.f32.mrf.mxu0
        %v3104 = vadd.f32 0.0, %v3103
        %3105 = vmatmul.bf16.gmra.mxu0 %v3046
        %v3106 = vpop.f32.mrf.mxu0
        %v3107 = vadd.f32 0.0, %v3106
        %v3108 = vpop.f32.mrf.mxu0
        %v3109 = vadd.f32 0.0, %v3108
        %3110 = vmatmul.bf16.gmra.mxu0 %v3049
        %v3111 = vpop.f32.mrf.mxu0
        %v3112 = vadd.f32 0.0, %v3111
        %v3113 = vpop.f32.mrf.mxu0
        %v3114 = vadd.f32 0.0, %v3113
        %3115 = vmatmul.bf16.gmra.mxu0 %v3052
        %v3116 = vpop.f32.mrf.mxu0
        %v3117 = vadd.f32 0.0, %v3116
        %v3118 = vpop.f32.mrf.mxu0
        %v3119 = vadd.f32 0.0, %v3118
        %3120 = vmatmul.bf16.gmra.mxu0 %v3055
        %v3121 = vpop.f32.mrf.mxu0
        %v3122 = vadd.f32 0.0, %v3121
        %v3123 = vpop.f32.mrf.mxu0
        %v3124 = vadd.f32 0.0, %v3123
        %3125 = vdwg.mxu0
        %s3126 = scalar_lea.vmem %s8, 144
        %v3127 = vld [vmem:[%s3126] sm:$0xf]
        %v3128 = vld [vmem:[%s3126 + $0x4] sm:$0xf]
        %v3129 = vld [vmem:[%s3126 + $0x8] sm:$0xf]
        %v3130 = vld [vmem:[%s3126 + $0xc] sm:$0xf]
        %v3131 = vld [vmem:[%s3126 + $0x10] sm:$0xf]
        %v3132 = vld [vmem:[%s3126 + $0x14] sm:$0xf]
        %v3133 = vld [vmem:[%s3126 + $0x18] sm:$0xf]
        %v3134 = vld [vmem:[%s3126 + $0x1c] sm:$0xf]
        %v3135 = vld [vmem:[%s3126 + $0x20] sm:$0xf]
        %v3136 = vld [vmem:[%s3126 + $0x24] sm:$0xf]
        %v3137 = vld [vmem:[%s3126 + $0x28] sm:$0xf]
        %v3138 = vld [vmem:[%s3126 + $0x2c] sm:$0xf]
        %v3139 = vpack.c.bf16 %v3069, %v3067
        %v3140 = vpack.c.bf16 %v3074, %v3072
        %v3141 = vpack.c.bf16 %v3079, %v3077
        %v3142 = vpack.c.bf16 %v3084, %v3082
        %v3143 = vpack.c.bf16 %v3089, %v3087
        %v3144 = vpack.c.bf16 %v3094, %v3092
        %v3157 = vunpack.c.l.b16 %v3127
        %v3158 = vunpack.c.l.b16 %v3128
        %v3159 = vunpack.c.l.b16 %v3129
        %v3160 = vunpack.c.l.b16 %v3130
        %v3161 = vunpack.c.l.b16 %v3131
        %v3162 = vunpack.c.l.b16 %v3132
        %v3163 = vunpack.c.l.b16 %v3133
        %v3164 = vunpack.c.l.b16 %v3134
        %v3165 = vunpack.c.l.b16 %v3135
        %v3166 = vunpack.c.l.b16 %v3136
        %v3167 = vunpack.c.l.b16 %v3137
        %v3168 = vunpack.c.l.b16 %v3138
        %v3169 = vpack.c.b16 %v3158, %v3157
        %v3170 = vpack.c.b16 %v3160, %v3159
        %v3171 = vpack.c.b16 %v3162, %v3161
        %v3172 = vpack.c.b16 %v3164, %v3163
        %v3173 = vpack.c.b16 %v3166, %v3165
        %v3174 = vpack.c.b16 %v3168, %v3167
        %v3176 = vsel %vm839, %v3169, 0
        %v3179 = vsel %vm839, %v3170, 0
        %v3182 = vsel %vm839, %v3171, 0
        %v3185 = vsel %vm839, %v3172, 0
        %v3188 = vsel %vm839, %v3173, 0
        %v3191 = vsel %vm839, %v3174, 0
        %3193 = vmatpush.bf16.msra.mxu0 0
        %3194 = vmatpush.bf16.msra.mxu0 0
        %3195 = vmatpush.bf16.msra.mxu0 %v3144
        %3196 = vmatpush.bf16.msra.mxu0 %v3143
        %3197 = vmatpush.bf16.msra.mxu0 %v3142
        %3198 = vmatpush.bf16.msra.mxu0 %v3141
        %3199 = vmatpush.bf16.msra.mxu0 %v3140
        %3200 = vmatpush.bf16.msra.mxu0 %v3139
        %3201 = vmatmul.bf16.gmra.mxu0 %v3176
        %v3202 = vpop.f32.mrf.mxu0
        %v3203 = vadd.f32 0.0, %v3202
        %v3204 = vpop.f32.mrf.mxu0
        %v3205 = vadd.f32 0.0, %v3204
        %3206 = vmatmul.bf16.gmra.mxu0 %v3179
        %v3207 = vpop.f32.mrf.mxu0
        %v3208 = vadd.f32 0.0, %v3207
        %v3209 = vpop.f32.mrf.mxu0
        %v3210 = vadd.f32 0.0, %v3209
        %3211 = vmatmul.bf16.gmra.mxu0 %v3182
        %v3212 = vpop.f32.mrf.mxu0
        %v3213 = vadd.f32 0.0, %v3212
        %v3214 = vpop.f32.mrf.mxu0
        %v3215 = vadd.f32 0.0, %v3214
        %3216 = vmatmul.bf16.gmra.mxu0 %v3185
        %v3217 = vpop.f32.mrf.mxu0
        %v3218 = vadd.f32 0.0, %v3217
        %v3219 = vpop.f32.mrf.mxu0
        %v3220 = vadd.f32 0.0, %v3219
        %3221 = vmatmul.bf16.gmra.mxu0 %v3188
        %v3222 = vpop.f32.mrf.mxu0
        %v3223 = vadd.f32 0.0, %v3222
        %v3224 = vpop.f32.mrf.mxu0
        %v3225 = vadd.f32 0.0, %v3224
        %3226 = vmatmul.bf16.gmra.mxu0 %v3191
        %v3227 = vpop.f32.mrf.mxu0
        %v3228 = vadd.f32 0.0, %v3227
        %v3229 = vpop.f32.mrf.mxu0
        %v3230 = vadd.f32 0.0, %v3229
        %3231 = vdwg.mxu0
        %v3232 = vpack.c.bf16 %v3099, %v3097
        %v3233 = vpack.c.bf16 %v3104, %v3102
        %v3234 = vpack.c.bf16 %v3109, %v3107
        %v3235 = vpack.c.bf16 %v3114, %v3112
        %v3236 = vpack.c.bf16 %v3119, %v3117
        %v3237 = vpack.c.bf16 %v3124, %v3122
        %3238 = vmatpush.bf16.msra.mxu0 0
        %3239 = vmatpush.bf16.msra.mxu0 0
        %3240 = vmatpush.bf16.msra.mxu0 %v3237
        %3241 = vmatpush.bf16.msra.mxu0 %v3236
        %3242 = vmatpush.bf16.msra.mxu0 %v3235
        %3243 = vmatpush.bf16.msra.mxu0 %v3234
        %3244 = vmatpush.bf16.msra.mxu0 %v3233
        %3245 = vmatpush.bf16.msra.mxu0 %v3232
        %3246 = vmatmul.bf16.gmra.mxu0 %v3176
        %v3247 = vpop.f32.mrf.mxu0
        %v3248 = vadd.f32 0.0, %v3247
        %v3249 = vpop.f32.mrf.mxu0
        %v3250 = vadd.f32 0.0, %v3249
        %3251 = vmatmul.bf16.gmra.mxu0 %v3179
        %v3252 = vpop.f32.mrf.mxu0
        %v3253 = vadd.f32 0.0, %v3252
        %v3254 = vpop.f32.mrf.mxu0
        %v3255 = vadd.f32 0.0, %v3254
        %3256 = vmatmul.bf16.gmra.mxu0 %v3182
        %v3257 = vpop.f32.mrf.mxu0
        %v3258 = vadd.f32 0.0, %v3257
        %v3259 = vpop.f32.mrf.mxu0
        %v3260 = vadd.f32 0.0, %v3259
        %3261 = vmatmul.bf16.gmra.mxu0 %v3185
        %v3262 = vpop.f32.mrf.mxu0
        %v3263 = vadd.f32 0.0, %v3262
        %v3264 = vpop.f32.mrf.mxu0
        %v3265 = vadd.f32 0.0, %v3264
        %3266 = vmatmul.bf16.gmra.mxu0 %v3188
        %v3267 = vpop.f32.mrf.mxu0
        %v3268 = vadd.f32 0.0, %v3267
        %v3269 = vpop.f32.mrf.mxu0
        %v3270 = vadd.f32 0.0, %v3269
        %3271 = vmatmul.bf16.gmra.mxu0 %v3191
        %v3272 = vpop.f32.mrf.mxu0
        %v3273 = vadd.f32 0.0, %v3272
        %v3274 = vpop.f32.mrf.mxu0
        %v3275 = vadd.f32 0.0, %v3274
        %3276 = vdwg.mxu0
        %s3277 = scalar_lea.vmem %s10, 3
        %v3278 = vld [vmem:[%s3277] sm:$0x1]
        %v3280 = vperm.slane %v3278, 0
        %v3282 = vmul.f32 %v3203, %v3280
        %v3283 = vmul.f32 %v3205, %v3280
        %v3284 = vmul.f32 %v3208, %v3280
        %v3285 = vmul.f32 %v3210, %v3280
        %v3286 = vmul.f32 %v3213, %v3280
        %v3287 = vmul.f32 %v3215, %v3280
        %v3288 = vmul.f32 %v3218, %v3280
        %v3289 = vmul.f32 %v3220, %v3280
        %v3290 = vmul.f32 %v3223, %v3280
        %v3291 = vmul.f32 %v3225, %v3280
        %v3292 = vmul.f32 %v3228, %v3280
        %v3293 = vmul.f32 %v3230, %v3280
        %v3294 = vmul.f32 %v3248, %v3280
        %v3295 = vmul.f32 %v3250, %v3280
        %v3296 = vmul.f32 %v3253, %v3280
        %v3297 = vmul.f32 %v3255, %v3280
        %v3298 = vmul.f32 %v3258, %v3280
        %v3299 = vmul.f32 %v3260, %v3280
        %v3300 = vmul.f32 %v3263, %v3280
        %v3301 = vmul.f32 %v3265, %v3280
        %v3302 = vmul.f32 %v3268, %v3280
        %v3303 = vmul.f32 %v3270, %v3280
        %v3304 = vmul.f32 %v3273, %v3280
        %v3305 = vmul.f32 %v3275, %v3280
        %s3306 = scalar_lea.vmem %s11, 3
        %v3307 = vld [vmem:[%s3306] sm:$0x1]
        %v3309 = vperm.slane %v3307, 0
        %v3311 = vadd.f32 %v3282, %v3309
        %v3312 = vadd.f32 %v3283, %v3309
        %v3313 = vadd.f32 %v3284, %v3309
        %v3314 = vadd.f32 %v3285, %v3309
        %v3315 = vadd.f32 %v3286, %v3309
        %v3316 = vadd.f32 %v3287, %v3309
        %v3317 = vadd.f32 %v3288, %v3309
        %v3318 = vadd.f32 %v3289, %v3309
        %v3319 = vadd.f32 %v3290, %v3309
        %v3320 = vadd.f32 %v3291, %v3309
        %v3321 = vadd.f32 %v3292, %v3309
        %v3322 = vadd.f32 %v3293, %v3309
        %v3323 = vadd.f32 %v3294, %v3309
        %v3324 = vadd.f32 %v3295, %v3309
        %v3325 = vadd.f32 %v3296, %v3309
        %v3326 = vadd.f32 %v3297, %v3309
        %v3327 = vadd.f32 %v3298, %v3309
        %v3328 = vadd.f32 %v3299, %v3309
        %v3329 = vadd.f32 %v3300, %v3309
        %v3330 = vadd.f32 %v3301, %v3309
        %v3331 = vadd.f32 %v3302, %v3309
        %v3332 = vadd.f32 %v3303, %v3309
        %v3333 = vadd.f32 %v3304, %v3309
        %v3334 = vadd.f32 %v3305, %v3309
        %v3335 = vmax.f32 %v3311, 0.0
        %v3336 = vmax.f32 %v3312, 0.0
        %v3337 = vmax.f32 %v3313, 0.0
        %v3338 = vmax.f32 %v3314, 0.0
        %v3339 = vmax.f32 %v3315, 0.0
        %v3340 = vmax.f32 %v3316, 0.0
        %v3341 = vmax.f32 %v3317, 0.0
        %v3342 = vmax.f32 %v3318, 0.0
        %v3343 = vmax.f32 %v3319, 0.0
        %v3344 = vmax.f32 %v3320, 0.0
        %v3345 = vmax.f32 %v3321, 0.0
        %v3346 = vmax.f32 %v3322, 0.0
        %v3347 = vmax.f32 %v3323, 0.0
        %v3348 = vmax.f32 %v3324, 0.0
        %v3349 = vmax.f32 %v3325, 0.0
        %v3350 = vmax.f32 %v3326, 0.0
        %v3351 = vmax.f32 %v3327, 0.0
        %v3352 = vmax.f32 %v3328, 0.0
        %v3353 = vmax.f32 %v3329, 0.0
        %v3354 = vmax.f32 %v3330, 0.0
        %v3355 = vmax.f32 %v3331, 0.0
        %v3356 = vmax.f32 %v3332, 0.0
        %v3357 = vmax.f32 %v3333, 0.0
        %v3358 = vmax.f32 %v3334, 0.0
        %s3359 = scalar_lea.vmem %s12, 96
        %v3360 = vld [vmem:[%s3359] sm:$0xf]
        %v3361 = vld [vmem:[%s3359 + $0x4] sm:$0xf]
        %v3362 = vld [vmem:[%s3359 + $0x8] sm:$0xf]
        %v3363 = vld [vmem:[%s3359 + $0xc] sm:$0xf]
        %v3364 = vld [vmem:[%s3359 + $0x10] sm:$0xf]
        %v3365 = vld [vmem:[%s3359 + $0x14] sm:$0xf]
        %v3366 = vld [vmem:[%s3359 + $0x18] sm:$0xf]
        %v3367 = vld [vmem:[%s3359 + $0x1c] sm:$0xf]
        %v3368 = vpack.c.bf16 %v3336, %v3335
        %v3369 = vpack.c.bf16 %v3338, %v3337
        %v3370 = vpack.c.bf16 %v3340, %v3339
        %v3371 = vpack.c.bf16 %v3342, %v3341
        %v3372 = vpack.c.bf16 %v3344, %v3343
        %v3373 = vpack.c.bf16 %v3346, %v3345
        %v3374 = vpack.c.bf16 %v3348, %v3347
        %v3375 = vpack.c.bf16 %v3350, %v3349
        %v3376 = vpack.c.bf16 %v3352, %v3351
        %v3377 = vpack.c.bf16 %v3354, %v3353
        %v3378 = vpack.c.bf16 %v3356, %v3355
        %v3379 = vpack.c.bf16 %v3358, %v3357
        %s3380 = scalar_lea.vmem %s13, 3
        %v3381 = vld [vmem:[%s3380] sm:$0x1]
        %v3383 = vperm.slane %v3381, 0
        %v3393 = vunpack.c.l.b16 %v3360
        %v3394 = vunpack.c.l.b16 %v3361
        %v3395 = vunpack.c.l.b16 %v3362
        %v3396 = vunpack.c.l.b16 %v3363
        %v3397 = vunpack.c.l.b16 %v3364
        %v3398 = vunpack.c.l.b16 %v3365
        %v3399 = vunpack.c.l.b16 %v3366
        %v3400 = vunpack.c.l.b16 %v3367
        %v3401 = vpack.c.b16 %v3394, %v3393
        %v3402 = vpack.c.b16 %v3396, %v3395
        %v3403 = vpack.c.b16 %v3398, %v3397
        %v3404 = vpack.c.b16 %v3400, %v3399
        %v3410 = vsel %vm1070, %v3368, 0
        %v3413 = vsel %vm1070, %v3369, 0
        %v3416 = vsel %vm1070, %v3370, 0
        %v3419 = vsel %vm1070, %v3371, 0
        %v3422 = vsel %vm1070, %v3372, 0
        %v3425 = vsel %vm1070, %v3373, 0
        %v3428 = vsel %vm1070, %v3374, 0
        %v3431 = vsel %vm1070, %v3375, 0
        %v3434 = vsel %vm1070, %v3376, 0
        %v3437 = vsel %vm1070, %v3377, 0
        %v3440 = vsel %vm1070, %v3378, 0
        %v3443 = vsel %vm1070, %v3379, 0
        %3445 = vmatpush.bf16.msra.mxu0 0
        %3446 = vmatpush.bf16.msra.mxu0 0
        %3447 = vmatpush.bf16.msra.mxu0 0
        %3448 = vmatpush.bf16.msra.mxu0 0
        %3449 = vmatpush.bf16.msra.mxu0 %v3404
        %3450 = vmatpush.bf16.msra.mxu0 %v3403
        %3451 = vmatpush.bf16.msra.mxu0 %v3402
        %3452 = vmatpush.bf16.msra.mxu0 %v3401
        %3453 = vmatmul.bf16.gmra.mxu0 %v3410
        %v3454 = vpop.f32.mrf.mxu0
        %v3455 = vadd.f32 %v3383, %v3454
        %v3456 = vpop.f32.mrf.mxu0
        %v3457 = vadd.f32 %v3383, %v3456
        %3458 = vmatmul.bf16.gmra.mxu0 %v3413
        %v3459 = vpop.f32.mrf.mxu0
        %v3460 = vadd.f32 %v3383, %v3459
        %v3461 = vpop.f32.mrf.mxu0
        %v3462 = vadd.f32 %v3383, %v3461
        %3463 = vmatmul.bf16.gmra.mxu0 %v3416
        %v3464 = vpop.f32.mrf.mxu0
        %v3465 = vadd.f32 %v3383, %v3464
        %v3466 = vpop.f32.mrf.mxu0
        %v3467 = vadd.f32 %v3383, %v3466
        %3468 = vmatmul.bf16.gmra.mxu0 %v3419
        %v3469 = vpop.f32.mrf.mxu0
        %v3470 = vadd.f32 %v3383, %v3469
        %v3471 = vpop.f32.mrf.mxu0
        %v3472 = vadd.f32 %v3383, %v3471
        %3473 = vmatmul.bf16.gmra.mxu0 %v3422
        %v3474 = vpop.f32.mrf.mxu0
        %v3475 = vadd.f32 %v3383, %v3474
        %v3476 = vpop.f32.mrf.mxu0
        %v3477 = vadd.f32 %v3383, %v3476
        %3478 = vmatmul.bf16.gmra.mxu0 %v3425
        %v3479 = vpop.f32.mrf.mxu0
        %v3480 = vadd.f32 %v3383, %v3479
        %v3481 = vpop.f32.mrf.mxu0
        %v3482 = vadd.f32 %v3383, %v3481
        %3483 = vmatmul.bf16.gmra.mxu0 %v3428
        %v3484 = vpop.f32.mrf.mxu0
        %v3485 = vadd.f32 %v3383, %v3484
        %v3486 = vpop.f32.mrf.mxu0
        %v3487 = vadd.f32 %v3383, %v3486
        %3488 = vmatmul.bf16.gmra.mxu0 %v3431
        %v3489 = vpop.f32.mrf.mxu0
        %v3490 = vadd.f32 %v3383, %v3489
        %v3491 = vpop.f32.mrf.mxu0
        %v3492 = vadd.f32 %v3383, %v3491
        %3493 = vmatmul.bf16.gmra.mxu0 %v3434
        %v3494 = vpop.f32.mrf.mxu0
        %v3495 = vadd.f32 %v3383, %v3494
        %v3496 = vpop.f32.mrf.mxu0
        %v3497 = vadd.f32 %v3383, %v3496
        %3498 = vmatmul.bf16.gmra.mxu0 %v3437
        %v3499 = vpop.f32.mrf.mxu0
        %v3500 = vadd.f32 %v3383, %v3499
        %v3501 = vpop.f32.mrf.mxu0
        %v3502 = vadd.f32 %v3383, %v3501
        %3503 = vmatmul.bf16.gmra.mxu0 %v3440
        %v3504 = vpop.f32.mrf.mxu0
        %v3505 = vadd.f32 %v3383, %v3504
        %v3506 = vpop.f32.mrf.mxu0
        %v3507 = vadd.f32 %v3383, %v3506
        %3508 = vmatmul.bf16.gmra.mxu0 %v3443
        %v3509 = vpop.f32.mrf.mxu0
        %v3510 = vadd.f32 %v3383, %v3509
        %v3511 = vpop.f32.mrf.mxu0
        %v3512 = vadd.f32 %v3383, %v3511
        %3513 = vdwg.mxu0
        %v3514 = vadd.f32 %v3455, %v2952
        %v3515 = vadd.f32 %v3457, %v2953
        %v3516 = vadd.f32 %v3460, %v2954
        %v3517 = vadd.f32 %v3462, %v2955
        %v3518 = vadd.f32 %v3465, %v2956
        %v3519 = vadd.f32 %v3467, %v2957
        %v3520 = vadd.f32 %v3470, %v2958
        %v3521 = vadd.f32 %v3472, %v2959
        %v3522 = vadd.f32 %v3475, %v2960
        %v3523 = vadd.f32 %v3477, %v2961
        %v3524 = vadd.f32 %v3480, %v2962
        %v3525 = vadd.f32 %v3482, %v2963
        %v3526 = vadd.f32 %v3485, %v2964
        %v3527 = vadd.f32 %v3487, %v2965
        %v3528 = vadd.f32 %v3490, %v2966
        %v3529 = vadd.f32 %v3492, %v2967
        %v3530 = vadd.f32 %v3495, %v2968
        %v3531 = vadd.f32 %v3497, %v2969
        %v3532 = vadd.f32 %v3500, %v2970
        %v3533 = vadd.f32 %v3502, %v2971
        %v3534 = vadd.f32 %v3505, %v2972
        %v3535 = vadd.f32 %v3507, %v2973
        %v3536 = vadd.f32 %v3510, %v2974
        %v3537 = vadd.f32 %v3512, %v2975
        %s3538 = scalar_lea.vmem %s9, 128
        %v3539 = vld [vmem:[%s3538] sm:$0xf]
        %v3540 = vld [vmem:[%s3538 + $0x4] sm:$0xf]
        %v3541 = vld [vmem:[%s3538 + $0x8] sm:$0xf]
        %v3542 = vld [vmem:[%s3538 + $0xc] sm:$0xf]
        %v3543 = vld [vmem:[%s3538 + $0x10] sm:$0xf]
        %v3544 = vld [vmem:[%s3538 + $0x14] sm:$0xf]
        %v3545 = vld [vmem:[%s3538 + $0x18] sm:$0xf]
        %v3546 = vld [vmem:[%s3538 + $0x1c] sm:$0xf]
        %v3547 = vpack.c.bf16 %v3515, %v3514
        %v3548 = vpack.c.bf16 %v3517, %v3516
        %v3549 = vpack.c.bf16 %v3519, %v3518
        %v3550 = vpack.c.bf16 %v3521, %v3520
        %v3551 = vpack.c.bf16 %v3523, %v3522
        %v3552 = vpack.c.bf16 %v3525, %v3524
        %v3553 = vpack.c.bf16 %v3527, %v3526
        %v3554 = vpack.c.bf16 %v3529, %v3528
        %v3555 = vpack.c.bf16 %v3531, %v3530
        %v3556 = vpack.c.bf16 %v3533, %v3532
        %v3557 = vpack.c.bf16 %v3535, %v3534
        %v3558 = vpack.c.bf16 %v3537, %v3536
        %v3567 = vunpack.c.l.b16 %v3539
        %v3568 = vunpack.c.l.b16 %v3540
        %v3569 = vunpack.c.l.b16 %v3541
        %v3570 = vunpack.c.l.b16 %v3542
        %v3571 = vunpack.c.l.b16 %v3543
        %v3572 = vunpack.c.l.b16 %v3544
        %v3573 = vunpack.c.l.b16 %v3545
        %v3574 = vunpack.c.l.b16 %v3546
        %v3575 = vpack.c.b16 %v3568, %v3567
        %v3576 = vpack.c.b16 %v3570, %v3569
        %v3577 = vpack.c.b16 %v3572, %v3571
        %v3578 = vpack.c.b16 %v3574, %v3573
        %v3584 = vsel %vm1070, %v3547, 0
        %v3587 = vsel %vm1070, %v3548, 0
        %v3590 = vsel %vm1070, %v3549, 0
        %v3593 = vsel %vm1070, %v3550, 0
        %v3596 = vsel %vm1070, %v3551, 0
        %v3599 = vsel %vm1070, %v3552, 0
        %v3602 = vsel %vm1070, %v3553, 0
        %v3605 = vsel %vm1070, %v3554, 0
        %v3608 = vsel %vm1070, %v3555, 0
        %v3611 = vsel %vm1070, %v3556, 0
        %v3614 = vsel %vm1070, %v3557, 0
        %v3617 = vsel %vm1070, %v3558, 0
        %3619 = vmatpush.bf16.msra.mxu0 0
        %3620 = vmatpush.bf16.msra.mxu0 0
        %3621 = vmatpush.bf16.msra.mxu0 0
        %3622 = vmatpush.bf16.msra.mxu0 0
        %3623 = vmatpush.bf16.msra.mxu0 %v3578
        %3624 = vmatpush.bf16.msra.mxu0 %v3577
        %3625 = vmatpush.bf16.msra.mxu0 %v3576
        %3626 = vmatpush.bf16.msra.mxu0 %v3575
        %3627 = vmatmul.bf16.gmra.mxu0 %v3584
        %v3628 = vpop.f32.mrf.mxu0
        %v3629 = vadd.f32 0.0, %v3628
        %v3630 = vpop.f32.mrf.mxu0
        %v3631 = vadd.f32 0.0, %v3630
        %3632 = vmatmul.bf16.gmra.mxu0 %v3587
        %v3633 = vpop.f32.mrf.mxu0
        %v3634 = vadd.f32 0.0, %v3633
        %v3635 = vpop.f32.mrf.mxu0
        %v3636 = vadd.f32 0.0, %v3635
        %3637 = vmatmul.bf16.gmra.mxu0 %v3590
        %v3638 = vpop.f32.mrf.mxu0
        %v3639 = vadd.f32 0.0, %v3638
        %v3640 = vpop.f32.mrf.mxu0
        %v3641 = vadd.f32 0.0, %v3640
        %3642 = vmatmul.bf16.gmra.mxu0 %v3593
        %v3643 = vpop.f32.mrf.mxu0
        %v3644 = vadd.f32 0.0, %v3643
        %v3645 = vpop.f32.mrf.mxu0
        %v3646 = vadd.f32 0.0, %v3645
        %3647 = vmatmul.bf16.gmra.mxu0 %v3596
        %v3648 = vpop.f32.mrf.mxu0
        %v3649 = vadd.f32 0.0, %v3648
        %v3650 = vpop.f32.mrf.mxu0
        %v3651 = vadd.f32 0.0, %v3650
        %3652 = vmatmul.bf16.gmra.mxu0 %v3599
        %v3653 = vpop.f32.mrf.mxu0
        %v3654 = vadd.f32 0.0, %v3653
        %v3655 = vpop.f32.mrf.mxu0
        %v3656 = vadd.f32 0.0, %v3655
        %3657 = vmatmul.bf16.gmra.mxu0 %v3602
        %v3658 = vpop.f32.mrf.mxu0
        %v3659 = vadd.f32 0.0, %v3658
        %v3660 = vpop.f32.mrf.mxu0
        %v3661 = vadd.f32 0.0, %v3660
        %3662 = vmatmul.bf16.gmra.mxu0 %v3605
        %v3663 = vpop.f32.mrf.mxu0
        %v3664 = vadd.f32 0.0, %v3663
        %v3665 = vpop.f32.mrf.mxu0
        %v3666 = vadd.f32 0.0, %v3665
        %3667 = vmatmul.bf16.gmra.mxu0 %v3608
        %v3668 = vpop.f32.mrf.mxu0
        %v3669 = vadd.f32 0.0, %v3668
        %v3670 = vpop.f32.mrf.mxu0
        %v3671 = vadd.f32 0.0, %v3670
        %3672 = vmatmul.bf16.gmra.mxu0 %v3611
        %v3673 = vpop.f32.mrf.mxu0
        %v3674 = vadd.f32 0.0, %v3673
        %v3675 = vpop.f32.mrf.mxu0
        %v3676 = vadd.f32 0.0, %v3675
        %3677 = vmatmul.bf16.gmra.mxu0 %v3614
        %v3678 = vpop.f32.mrf.mxu0
        %v3679 = vadd.f32 0.0, %v3678
        %v3680 = vpop.f32.mrf.mxu0
        %v3681 = vadd.f32 0.0, %v3680
        %3682 = vmatmul.bf16.gmra.mxu0 %v3617
        %v3683 = vpop.f32.mrf.mxu0
        %v3684 = vadd.f32 0.0, %v3683
        %v3685 = vpop.f32.mrf.mxu0
        %v3686 = vadd.f32 0.0, %v3685
        %3687 = vdwg.mxu0
        %s3688 = scalar_lea.vmem %s8, 192
        %v3689 = vld [vmem:[%s3688] sm:$0xf]
        %v3690 = vld [vmem:[%s3688 + $0x4] sm:$0xf]
        %v3691 = vld [vmem:[%s3688 + $0x8] sm:$0xf]
        %v3692 = vld [vmem:[%s3688 + $0xc] sm:$0xf]
        %v3693 = vld [vmem:[%s3688 + $0x10] sm:$0xf]
        %v3694 = vld [vmem:[%s3688 + $0x14] sm:$0xf]
        %v3695 = vld [vmem:[%s3688 + $0x18] sm:$0xf]
        %v3696 = vld [vmem:[%s3688 + $0x1c] sm:$0xf]
        %v3697 = vld [vmem:[%s3688 + $0x20] sm:$0xf]
        %v3698 = vld [vmem:[%s3688 + $0x24] sm:$0xf]
        %v3699 = vld [vmem:[%s3688 + $0x28] sm:$0xf]
        %v3700 = vld [vmem:[%s3688 + $0x2c] sm:$0xf]
        %v3701 = vpack.c.bf16 %v3631, %v3629
        %v3702 = vpack.c.bf16 %v3636, %v3634
        %v3703 = vpack.c.bf16 %v3641, %v3639
        %v3704 = vpack.c.bf16 %v3646, %v3644
        %v3705 = vpack.c.bf16 %v3651, %v3649
        %v3706 = vpack.c.bf16 %v3656, %v3654
        %v3719 = vunpack.c.l.b16 %v3689
        %v3720 = vunpack.c.l.b16 %v3690
        %v3721 = vunpack.c.l.b16 %v3691
        %v3722 = vunpack.c.l.b16 %v3692
        %v3723 = vunpack.c.l.b16 %v3693
        %v3724 = vunpack.c.l.b16 %v3694
        %v3725 = vunpack.c.l.b16 %v3695
        %v3726 = vunpack.c.l.b16 %v3696
        %v3727 = vunpack.c.l.b16 %v3697
        %v3728 = vunpack.c.l.b16 %v3698
        %v3729 = vunpack.c.l.b16 %v3699
        %v3730 = vunpack.c.l.b16 %v3700
        %v3731 = vpack.c.b16 %v3720, %v3719
        %v3732 = vpack.c.b16 %v3722, %v3721
        %v3733 = vpack.c.b16 %v3724, %v3723
        %v3734 = vpack.c.b16 %v3726, %v3725
        %v3735 = vpack.c.b16 %v3728, %v3727
        %v3736 = vpack.c.b16 %v3730, %v3729
        %v3738 = vsel %vm839, %v3731, 0
        %v3741 = vsel %vm839, %v3732, 0
        %v3744 = vsel %vm839, %v3733, 0
        %v3747 = vsel %vm839, %v3734, 0
        %v3750 = vsel %vm839, %v3735, 0
        %v3753 = vsel %vm839, %v3736, 0
        %3755 = vmatpush.bf16.msra.mxu0 0
        %3756 = vmatpush.bf16.msra.mxu0 0
        %3757 = vmatpush.bf16.msra.mxu0 %v3706
        %3758 = vmatpush.bf16.msra.mxu0 %v3705
        %3759 = vmatpush.bf16.msra.mxu0 %v3704
        %3760 = vmatpush.bf16.msra.mxu0 %v3703
        %3761 = vmatpush.bf16.msra.mxu0 %v3702
        %3762 = vmatpush.bf16.msra.mxu0 %v3701
        %3763 = vmatmul.bf16.gmra.mxu0 %v3738
        %v3764 = vpop.f32.mrf.mxu0
        %v3765 = vadd.f32 0.0, %v3764
        %v3766 = vpop.f32.mrf.mxu0
        %v3767 = vadd.f32 0.0, %v3766
        %3768 = vmatmul.bf16.gmra.mxu0 %v3741
        %v3769 = vpop.f32.mrf.mxu0
        %v3770 = vadd.f32 0.0, %v3769
        %v3771 = vpop.f32.mrf.mxu0
        %v3772 = vadd.f32 0.0, %v3771
        %3773 = vmatmul.bf16.gmra.mxu0 %v3744
        %v3774 = vpop.f32.mrf.mxu0
        %v3775 = vadd.f32 0.0, %v3774
        %v3776 = vpop.f32.mrf.mxu0
        %v3777 = vadd.f32 0.0, %v3776
        %3778 = vmatmul.bf16.gmra.mxu0 %v3747
        %v3779 = vpop.f32.mrf.mxu0
        %v3780 = vadd.f32 0.0, %v3779
        %v3781 = vpop.f32.mrf.mxu0
        %v3782 = vadd.f32 0.0, %v3781
        %3783 = vmatmul.bf16.gmra.mxu0 %v3750
        %v3784 = vpop.f32.mrf.mxu0
        %v3785 = vadd.f32 0.0, %v3784
        %v3786 = vpop.f32.mrf.mxu0
        %v3787 = vadd.f32 0.0, %v3786
        %3788 = vmatmul.bf16.gmra.mxu0 %v3753
        %v3789 = vpop.f32.mrf.mxu0
        %v3790 = vadd.f32 0.0, %v3789
        %v3791 = vpop.f32.mrf.mxu0
        %v3792 = vadd.f32 0.0, %v3791
        %3793 = vdwg.mxu0
        %v3794 = vpack.c.bf16 %v3661, %v3659
        %v3795 = vpack.c.bf16 %v3666, %v3664
        %v3796 = vpack.c.bf16 %v3671, %v3669
        %v3797 = vpack.c.bf16 %v3676, %v3674
        %v3798 = vpack.c.bf16 %v3681, %v3679
        %v3799 = vpack.c.bf16 %v3686, %v3684
        %3800 = vmatpush.bf16.msra.mxu0 0
        %3801 = vmatpush.bf16.msra.mxu0 0
        %3802 = vmatpush.bf16.msra.mxu0 %v3799
        %3803 = vmatpush.bf16.msra.mxu0 %v3798
        %3804 = vmatpush.bf16.msra.mxu0 %v3797
        %3805 = vmatpush.bf16.msra.mxu0 %v3796
        %3806 = vmatpush.bf16.msra.mxu0 %v3795
        %3807 = vmatpush.bf16.msra.mxu0 %v3794
        %3808 = vmatmul.bf16.gmra.mxu0 %v3738
        %v3809 = vpop.f32.mrf.mxu0
        %v3810 = vadd.f32 0.0, %v3809
        %v3811 = vpop.f32.mrf.mxu0
        %v3812 = vadd.f32 0.0, %v3811
        %3813 = vmatmul.bf16.gmra.mxu0 %v3741
        %v3814 = vpop.f32.mrf.mxu0
        %v3815 = vadd.f32 0.0, %v3814
        %v3816 = vpop.f32.mrf.mxu0
        %v3817 = vadd.f32 0.0, %v3816
        %3818 = vmatmul.bf16.gmra.mxu0 %v3744
        %v3819 = vpop.f32.mrf.mxu0
        %v3820 = vadd.f32 0.0, %v3819
        %v3821 = vpop.f32.mrf.mxu0
        %v3822 = vadd.f32 0.0, %v3821
        %3823 = vmatmul.bf16.gmra.mxu0 %v3747
        %v3824 = vpop.f32.mrf.mxu0
        %v3825 = vadd.f32 0.0, %v3824
        %v3826 = vpop.f32.mrf.mxu0
        %v3827 = vadd.f32 0.0, %v3826
        %3828 = vmatmul.bf16.gmra.mxu0 %v3750
        %v3829 = vpop.f32.mrf.mxu0
        %v3830 = vadd.f32 0.0, %v3829
        %v3831 = vpop.f32.mrf.mxu0
        %v3832 = vadd.f32 0.0, %v3831
        %3833 = vmatmul.bf16.gmra.mxu0 %v3753
        %v3834 = vpop.f32.mrf.mxu0
        %v3835 = vadd.f32 0.0, %v3834
        %v3836 = vpop.f32.mrf.mxu0
        %v3837 = vadd.f32 0.0, %v3836
        %3838 = vdwg.mxu0
        %s3839 = scalar_lea.vmem %s10, 4
        %v3840 = vld [vmem:[%s3839] sm:$0x1]
        %v3842 = vperm.slane %v3840, 0
        %v3844 = vmul.f32 %v3765, %v3842
        %v3845 = vmul.f32 %v3767, %v3842
        %v3846 = vmul.f32 %v3770, %v3842
        %v3847 = vmul.f32 %v3772, %v3842
        %v3848 = vmul.f32 %v3775, %v3842
        %v3849 = vmul.f32 %v3777, %v3842
        %v3850 = vmul.f32 %v3780, %v3842
        %v3851 = vmul.f32 %v3782, %v3842
        %v3852 = vmul.f32 %v3785, %v3842
        %v3853 = vmul.f32 %v3787, %v3842
        %v3854 = vmul.f32 %v3790, %v3842
        %v3855 = vmul.f32 %v3792, %v3842
        %v3856 = vmul.f32 %v3810, %v3842
        %v3857 = vmul.f32 %v3812, %v3842
        %v3858 = vmul.f32 %v3815, %v3842
        %v3859 = vmul.f32 %v3817, %v3842
        %v3860 = vmul.f32 %v3820, %v3842
        %v3861 = vmul.f32 %v3822, %v3842
        %v3862 = vmul.f32 %v3825, %v3842
        %v3863 = vmul.f32 %v3827, %v3842
        %v3864 = vmul.f32 %v3830, %v3842
        %v3865 = vmul.f32 %v3832, %v3842
        %v3866 = vmul.f32 %v3835, %v3842
        %v3867 = vmul.f32 %v3837, %v3842
        %s3868 = scalar_lea.vmem %s11, 4
        %v3869 = vld [vmem:[%s3868] sm:$0x1]
        %v3871 = vperm.slane %v3869, 0
        %v3873 = vadd.f32 %v3844, %v3871
        %v3874 = vadd.f32 %v3845, %v3871
        %v3875 = vadd.f32 %v3846, %v3871
        %v3876 = vadd.f32 %v3847, %v3871
        %v3877 = vadd.f32 %v3848, %v3871
        %v3878 = vadd.f32 %v3849, %v3871
        %v3879 = vadd.f32 %v3850, %v3871
        %v3880 = vadd.f32 %v3851, %v3871
        %v3881 = vadd.f32 %v3852, %v3871
        %v3882 = vadd.f32 %v3853, %v3871
        %v3883 = vadd.f32 %v3854, %v3871
        %v3884 = vadd.f32 %v3855, %v3871
        %v3885 = vadd.f32 %v3856, %v3871
        %v3886 = vadd.f32 %v3857, %v3871
        %v3887 = vadd.f32 %v3858, %v3871
        %v3888 = vadd.f32 %v3859, %v3871
        %v3889 = vadd.f32 %v3860, %v3871
        %v3890 = vadd.f32 %v3861, %v3871
        %v3891 = vadd.f32 %v3862, %v3871
        %v3892 = vadd.f32 %v3863, %v3871
        %v3893 = vadd.f32 %v3864, %v3871
        %v3894 = vadd.f32 %v3865, %v3871
        %v3895 = vadd.f32 %v3866, %v3871
        %v3896 = vadd.f32 %v3867, %v3871
        %v3897 = vmax.f32 %v3873, 0.0
        %v3898 = vmax.f32 %v3874, 0.0
        %v3899 = vmax.f32 %v3875, 0.0
        %v3900 = vmax.f32 %v3876, 0.0
        %v3901 = vmax.f32 %v3877, 0.0
        %v3902 = vmax.f32 %v3878, 0.0
        %v3903 = vmax.f32 %v3879, 0.0
        %v3904 = vmax.f32 %v3880, 0.0
        %v3905 = vmax.f32 %v3881, 0.0
        %v3906 = vmax.f32 %v3882, 0.0
        %v3907 = vmax.f32 %v3883, 0.0
        %v3908 = vmax.f32 %v3884, 0.0
        %v3909 = vmax.f32 %v3885, 0.0
        %v3910 = vmax.f32 %v3886, 0.0
        %v3911 = vmax.f32 %v3887, 0.0
        %v3912 = vmax.f32 %v3888, 0.0
        %v3913 = vmax.f32 %v3889, 0.0
        %v3914 = vmax.f32 %v3890, 0.0
        %v3915 = vmax.f32 %v3891, 0.0
        %v3916 = vmax.f32 %v3892, 0.0
        %v3917 = vmax.f32 %v3893, 0.0
        %v3918 = vmax.f32 %v3894, 0.0
        %v3919 = vmax.f32 %v3895, 0.0
        %v3920 = vmax.f32 %v3896, 0.0
        %s3921 = scalar_lea.vmem %s12, 128
        %v3922 = vld [vmem:[%s3921] sm:$0xf]
        %v3923 = vld [vmem:[%s3921 + $0x4] sm:$0xf]
        %v3924 = vld [vmem:[%s3921 + $0x8] sm:$0xf]
        %v3925 = vld [vmem:[%s3921 + $0xc] sm:$0xf]
        %v3926 = vld [vmem:[%s3921 + $0x10] sm:$0xf]
        %v3927 = vld [vmem:[%s3921 + $0x14] sm:$0xf]
        %v3928 = vld [vmem:[%s3921 + $0x18] sm:$0xf]
        %v3929 = vld [vmem:[%s3921 + $0x1c] sm:$0xf]
        %v3930 = vpack.c.bf16 %v3898, %v3897
        %v3931 = vpack.c.bf16 %v3900, %v3899
        %v3932 = vpack.c.bf16 %v3902, %v3901
        %v3933 = vpack.c.bf16 %v3904, %v3903
        %v3934 = vpack.c.bf16 %v3906, %v3905
        %v3935 = vpack.c.bf16 %v3908, %v3907
        %v3936 = vpack.c.bf16 %v3910, %v3909
        %v3937 = vpack.c.bf16 %v3912, %v3911
        %v3938 = vpack.c.bf16 %v3914, %v3913
        %v3939 = vpack.c.bf16 %v3916, %v3915
        %v3940 = vpack.c.bf16 %v3918, %v3917
        %v3941 = vpack.c.bf16 %v3920, %v3919
        %s3942 = scalar_lea.vmem %s13, 4
        %v3943 = vld [vmem:[%s3942] sm:$0x1]
        %v3945 = vperm.slane %v3943, 0
        %v3955 = vunpack.c.l.b16 %v3922
        %v3956 = vunpack.c.l.b16 %v3923
        %v3957 = vunpack.c.l.b16 %v3924
        %v3958 = vunpack.c.l.b16 %v3925
        %v3959 = vunpack.c.l.b16 %v3926
        %v3960 = vunpack.c.l.b16 %v3927
        %v3961 = vunpack.c.l.b16 %v3928
        %v3962 = vunpack.c.l.b16 %v3929
        %v3963 = vpack.c.b16 %v3956, %v3955
        %v3964 = vpack.c.b16 %v3958, %v3957
        %v3965 = vpack.c.b16 %v3960, %v3959
        %v3966 = vpack.c.b16 %v3962, %v3961
        %v3972 = vsel %vm1070, %v3930, 0
        %v3975 = vsel %vm1070, %v3931, 0
        %v3978 = vsel %vm1070, %v3932, 0
        %v3981 = vsel %vm1070, %v3933, 0
        %v3984 = vsel %vm1070, %v3934, 0
        %v3987 = vsel %vm1070, %v3935, 0
        %v3990 = vsel %vm1070, %v3936, 0
        %v3993 = vsel %vm1070, %v3937, 0
        %v3996 = vsel %vm1070, %v3938, 0
        %v3999 = vsel %vm1070, %v3939, 0
        %v4002 = vsel %vm1070, %v3940, 0
        %v4005 = vsel %vm1070, %v3941, 0
        %4007 = vmatpush.bf16.msra.mxu0 0
        %4008 = vmatpush.bf16.msra.mxu0 0
        %4009 = vmatpush.bf16.msra.mxu0 0
        %4010 = vmatpush.bf16.msra.mxu0 0
        %4011 = vmatpush.bf16.msra.mxu0 %v3966
        %4012 = vmatpush.bf16.msra.mxu0 %v3965
        %4013 = vmatpush.bf16.msra.mxu0 %v3964
        %4014 = vmatpush.bf16.msra.mxu0 %v3963
        %4015 = vmatmul.bf16.gmra.mxu0 %v3972
        %v4016 = vpop.f32.mrf.mxu0
        %v4017 = vadd.f32 %v3945, %v4016
        %v4018 = vpop.f32.mrf.mxu0
        %v4019 = vadd.f32 %v3945, %v4018
        %4020 = vmatmul.bf16.gmra.mxu0 %v3975
        %v4021 = vpop.f32.mrf.mxu0
        %v4022 = vadd.f32 %v3945, %v4021
        %v4023 = vpop.f32.mrf.mxu0
        %v4024 = vadd.f32 %v3945, %v4023
        %4025 = vmatmul.bf16.gmra.mxu0 %v3978
        %v4026 = vpop.f32.mrf.mxu0
        %v4027 = vadd.f32 %v3945, %v4026
        %v4028 = vpop.f32.mrf.mxu0
        %v4029 = vadd.f32 %v3945, %v4028
        %4030 = vmatmul.bf16.gmra.mxu0 %v3981
        %v4031 = vpop.f32.mrf.mxu0
        %v4032 = vadd.f32 %v3945, %v4031
        %v4033 = vpop.f32.mrf.mxu0
        %v4034 = vadd.f32 %v3945, %v4033
        %4035 = vmatmul.bf16.gmra.mxu0 %v3984
        %v4036 = vpop.f32.mrf.mxu0
        %v4037 = vadd.f32 %v3945, %v4036
        %v4038 = vpop.f32.mrf.mxu0
        %v4039 = vadd.f32 %v3945, %v4038
        %4040 = vmatmul.bf16.gmra.mxu0 %v3987
        %v4041 = vpop.f32.mrf.mxu0
        %v4042 = vadd.f32 %v3945, %v4041
        %v4043 = vpop.f32.mrf.mxu0
        %v4044 = vadd.f32 %v3945, %v4043
        %4045 = vmatmul.bf16.gmra.mxu0 %v3990
        %v4046 = vpop.f32.mrf.mxu0
        %v4047 = vadd.f32 %v3945, %v4046
        %v4048 = vpop.f32.mrf.mxu0
        %v4049 = vadd.f32 %v3945, %v4048
        %4050 = vmatmul.bf16.gmra.mxu0 %v3993
        %v4051 = vpop.f32.mrf.mxu0
        %v4052 = vadd.f32 %v3945, %v4051
        %v4053 = vpop.f32.mrf.mxu0
        %v4054 = vadd.f32 %v3945, %v4053
        %4055 = vmatmul.bf16.gmra.mxu0 %v3996
        %v4056 = vpop.f32.mrf.mxu0
        %v4057 = vadd.f32 %v3945, %v4056
        %v4058 = vpop.f32.mrf.mxu0
        %v4059 = vadd.f32 %v3945, %v4058
        %4060 = vmatmul.bf16.gmra.mxu0 %v3999
        %v4061 = vpop.f32.mrf.mxu0
        %v4062 = vadd.f32 %v3945, %v4061
        %v4063 = vpop.f32.mrf.mxu0
        %v4064 = vadd.f32 %v3945, %v4063
        %4065 = vmatmul.bf16.gmra.mxu0 %v4002
        %v4066 = vpop.f32.mrf.mxu0
        %v4067 = vadd.f32 %v3945, %v4066
        %v4068 = vpop.f32.mrf.mxu0
        %v4069 = vadd.f32 %v3945, %v4068
        %4070 = vmatmul.bf16.gmra.mxu0 %v4005
        %v4071 = vpop.f32.mrf.mxu0
        %v4072 = vadd.f32 %v3945, %v4071
        %v4073 = vpop.f32.mrf.mxu0
        %v4074 = vadd.f32 %v3945, %v4073
        %4075 = vdwg.mxu0
        %v4076 = vadd.f32 %v4017, %v3514
        %v4077 = vadd.f32 %v4019, %v3515
        %v4078 = vadd.f32 %v4022, %v3516
        %v4079 = vadd.f32 %v4024, %v3517
        %v4080 = vadd.f32 %v4027, %v3518
        %v4081 = vadd.f32 %v4029, %v3519
        %v4082 = vadd.f32 %v4032, %v3520
        %v4083 = vadd.f32 %v4034, %v3521
        %v4084 = vadd.f32 %v4037, %v3522
        %v4085 = vadd.f32 %v4039, %v3523
        %v4086 = vadd.f32 %v4042, %v3524
        %v4087 = vadd.f32 %v4044, %v3525
        %v4088 = vadd.f32 %v4047, %v3526
        %v4089 = vadd.f32 %v4049, %v3527
        %v4090 = vadd.f32 %v4052, %v3528
        %v4091 = vadd.f32 %v4054, %v3529
        %v4092 = vadd.f32 %v4057, %v3530
        %v4093 = vadd.f32 %v4059, %v3531
        %v4094 = vadd.f32 %v4062, %v3532
        %v4095 = vadd.f32 %v4064, %v3533
        %v4096 = vadd.f32 %v4067, %v3534
        %v4097 = vadd.f32 %v4069, %v3535
        %v4098 = vadd.f32 %v4072, %v3536
        %v4099 = vadd.f32 %v4074, %v3537
        %v4100 = vsel %vm1070, %v4076, 0.0
        %v4101 = vsel %vm1070, %v4077, 0.0
        %v4102 = vadd.f32 %v4100, %v4101
        %v4103 = vsel %vm1070, %v4078, 0.0
        %v4104 = vadd.f32 %v4102, %v4103
        %v4105 = vrot.slane %v4104, 4
        %v4106 = vadd.f32 %v4104, %v4105
        %v4107 = vrot.slane %v4106, 2
        %v4108 = vadd.f32 %v4106, %v4107
        %v4109 = vrot.slane %v4108, 1
        %v4110 = vadd.f32 %v4108, %v4109
        %v4111 = vsel %vm1070, %v4079, 0.0
        %v4112 = vsel %vm1070, %v4080, 0.0
        %v4113 = vadd.f32 %v4111, %v4112
        %v4114 = vsel %vm1070, %v4081, 0.0
        %v4115 = vadd.f32 %v4113, %v4114
        %v4116 = vrot.slane %v4115, 4
        %v4117 = vadd.f32 %v4115, %v4116
        %v4118 = vrot.slane %v4117, 2
        %v4119 = vadd.f32 %v4117, %v4118
        %v4120 = vrot.slane %v4119, 1
        %v4121 = vadd.f32 %v4119, %v4120
        %v4122 = vsel %vm1070, %v4082, 0.0
        %v4123 = vsel %vm1070, %v4083, 0.0
        %v4124 = vadd.f32 %v4122, %v4123
        %v4125 = vsel %vm1070, %v4084, 0.0
        %v4126 = vadd.f32 %v4124, %v4125
        %v4127 = vrot.slane %v4126, 4
        %v4128 = vadd.f32 %v4126, %v4127
        %v4129 = vrot.slane %v4128, 2
        %v4130 = vadd.f32 %v4128, %v4129
        %v4131 = vrot.slane %v4130, 1
        %v4132 = vadd.f32 %v4130, %v4131
        %v4133 = vsel %vm1070, %v4085, 0.0
        %v4134 = vsel %vm1070, %v4086, 0.0
        %v4135 = vadd.f32 %v4133, %v4134
        %v4136 = vsel %vm1070, %v4087, 0.0
        %v4137 = vadd.f32 %v4135, %v4136
        %v4138 = vrot.slane %v4137, 4
        %v4139 = vadd.f32 %v4137, %v4138
        %v4140 = vrot.slane %v4139, 2
        %v4141 = vadd.f32 %v4139, %v4140
        %v4142 = vrot.slane %v4141, 1
        %v4143 = vadd.f32 %v4141, %v4142
        %v4144 = vsel %vm1070, %v4088, 0.0
        %v4145 = vsel %vm1070, %v4089, 0.0
        %v4146 = vadd.f32 %v4144, %v4145
        %v4147 = vsel %vm1070, %v4090, 0.0
        %v4148 = vadd.f32 %v4146, %v4147
        %v4149 = vrot.slane %v4148, 4
        %v4150 = vadd.f32 %v4148, %v4149
        %v4151 = vrot.slane %v4150, 2
        %v4152 = vadd.f32 %v4150, %v4151
        %v4153 = vrot.slane %v4152, 1
        %v4154 = vadd.f32 %v4152, %v4153
        %v4155 = vsel %vm1070, %v4091, 0.0
        %v4156 = vsel %vm1070, %v4092, 0.0
        %v4157 = vadd.f32 %v4155, %v4156
        %v4158 = vsel %vm1070, %v4093, 0.0
        %v4159 = vadd.f32 %v4157, %v4158
        %v4160 = vrot.slane %v4159, 4
        %v4161 = vadd.f32 %v4159, %v4160
        %v4162 = vrot.slane %v4161, 2
        %v4163 = vadd.f32 %v4161, %v4162
        %v4164 = vrot.slane %v4163, 1
        %v4165 = vadd.f32 %v4163, %v4164
        %v4166 = vsel %vm1070, %v4094, 0.0
        %v4167 = vsel %vm1070, %v4095, 0.0
        %v4168 = vadd.f32 %v4166, %v4167
        %v4169 = vsel %vm1070, %v4096, 0.0
        %v4170 = vadd.f32 %v4168, %v4169
        %v4171 = vrot.slane %v4170, 4
        %v4172 = vadd.f32 %v4170, %v4171
        %v4173 = vrot.slane %v4172, 2
        %v4174 = vadd.f32 %v4172, %v4173
        %v4175 = vrot.slane %v4174, 1
        %v4176 = vadd.f32 %v4174, %v4175
        %v4177 = vsel %vm1070, %v4097, 0.0
        %v4178 = vsel %vm1070, %v4098, 0.0
        %v4179 = vadd.f32 %v4177, %v4178
        %v4180 = vsel %vm1070, %v4099, 0.0
        %v4181 = vadd.f32 %v4179, %v4180
        %v4182 = vrot.slane %v4181, 4
        %v4183 = vadd.f32 %v4181, %v4182
        %v4184 = vrot.slane %v4183, 2
        %v4185 = vadd.f32 %v4183, %v4184
        %v4186 = vrot.slane %v4185, 1
        %v4187 = vadd.f32 %v4185, %v4186
        %v4188 = vrcp.pop 24.0
        %v4189 = vmul.f32 24.0, %v4188
        %v4190 = vsub.f32 1.0, %v4189
        %v4191 = vmul.f32 %v4188, %v4190
        %v4192 = vadd.f32 %v4188, %v4191
        %vm4193 = vweird.f32 %v4188
        %v4194 = vsel %vm4193, %v4188, %v4192
        %v4195 = vmul.f32 %v4110, %v4194
        %v4196 = vmul.f32 %v4121, %v4194
        %v4197 = vmul.f32 %v4132, %v4194
        %v4198 = vmul.f32 %v4143, %v4194
        %v4199 = vmul.f32 %v4154, %v4194
        %v4200 = vmul.f32 %v4165, %v4194
        %v4201 = vmul.f32 %v4176, %v4194
        %v4202 = vmul.f32 %v4187, %v4194
        %vm4210 = vcmask 1042434
        %v4211 = vsel %vm4210, %v4196, %v4195
        %vm4212 = vcmask 1043459
        %v4213 = vsel %vm4212, %v4197, %v4211
        %vm4214 = vcmask 1044484
        %v4215 = vsel %vm4214, %v4198, %v4213
        %vm4216 = vcmask 1045509
        %v4217 = vsel %vm4216, %v4199, %v4215
        %vm4218 = vcmask 1046534
        %v4219 = vsel %vm4218, %v4200, %v4217
        %vm4220 = vcmask 1047559
        %v4221 = vsel %vm4220, %v4201, %v4219
        %v4223 = vsel %vm715, 0.0, %v4221
        %vm4225 = vcmask 1041409
        %v4226 = vsel %vm4225, %v4197, %v4196
        %v4227 = vsel %vm4210, %v4198, %v4226
        %v4228 = vsel %vm4212, %v4199, %v4227
        %v4229 = vsel %vm4214, %v4200, %v4228
        %v4230 = vsel %vm4216, %v4201, %v4229
        %v4231 = vsel %vm4218, %v4202, %v4230
        %vm4233 = vcmask 1046528
        %v4234 = vsel %vm4233, %v4231, 0.0
        %v4235 = vsel %vm4225, %v4196, %v4195
        %v4236 = vsel %vm4210, %v4197, %v4235
        %v4237 = vsel %vm4212, %v4198, %v4236
        %v4238 = vsel %vm4214, %v4199, %v4237
        %v4239 = vsel %vm4216, %v4200, %v4238
        %v4240 = vsel %vm4218, %v4201, %v4239
        %v4241 = vsel %vm4220, %v4202, %v4240
        %4242 = vrot.lane.b32.xlu0 %v4241, 64
        %v4243 = vpop.permute.xlu0 %4242
        %v4245 = vsel %vm1070, %v4223, %v4243
        %v4246 = vld [vmem:[%s14] sm:$0xf]
        %v4247 = vld [vmem:[%s14 + $0x4] sm:$0xf]
        %v4248 = vld [vmem:[%s14 + $0x8] sm:$0xf]
        %v4249 = vld [vmem:[%s14 + $0xc] sm:$0xf]
        %v4250 = vld [vmem:[%s14 + $0x10] sm:$0xf]
        %v4251 = vld [vmem:[%s14 + $0x14] sm:$0xf]
        %v4252 = vld [vmem:[%s14 + $0x18] sm:$0xf]
        %v4253 = vld [vmem:[%s14 + $0x1c] sm:$0xf]
        %v4254 = vld [vmem:[%s14 + $0x20] sm:$0xf]
        %v4255 = vld [vmem:[%s14 + $0x24] sm:$0xf]
        %v4256 = vld [vmem:[%s14 + $0x28] sm:$0xf]
        %v4257 = vld [vmem:[%s14 + $0x2c] sm:$0xf]
        %v4258 = vld [vmem:[%s14 + $0x30] sm:$0xf]
        %v4259 = vld [vmem:[%s14 + $0x34] sm:$0xf]
        %v4260 = vld [vmem:[%s14 + $0x38] sm:$0xf]
        %v4261 = vld [vmem:[%s14 + $0x3c] sm:$0xf]
        %v4262 = vld [vmem:[%s14 + $0x40] sm:$0xf]
        %v4263 = vld [vmem:[%s14 + $0x44] sm:$0xf]
        %v4264 = vld [vmem:[%s14 + $0x48] sm:$0xf]
        %v4265 = vld [vmem:[%s14 + $0x4c] sm:$0xf]
        %v4266 = vld [vmem:[%s14 + $0x50] sm:$0xf]
        %v4267 = vld [vmem:[%s14 + $0x54] sm:$0xf]
        %v4268 = vld [vmem:[%s14 + $0x58] sm:$0xf]
        %v4269 = vld [vmem:[%s14 + $0x5c] sm:$0xf]
        %v4270 = vpack.c.bf16 %v4245, %v4245
        %v4271 = vpack.c.bf16 %v4234, %v4234
        %v4296 = vunpack.c.l.b16 %v4246
        %v4297 = vunpack.c.l.b16 %v4247
        %v4298 = vunpack.c.l.b16 %v4248
        %v4299 = vunpack.c.l.b16 %v4249
        %v4300 = vunpack.c.l.b16 %v4250
        %v4301 = vunpack.c.l.b16 %v4251
        %v4302 = vunpack.c.l.b16 %v4252
        %v4303 = vunpack.c.l.b16 %v4253
        %v4304 = vunpack.c.l.b16 %v4254
        %v4305 = vunpack.c.l.b16 %v4255
        %v4306 = vunpack.c.l.b16 %v4256
        %v4307 = vunpack.c.l.b16 %v4257
        %v4308 = vunpack.c.l.b16 %v4258
        %v4309 = vunpack.c.l.b16 %v4259
        %v4310 = vunpack.c.l.b16 %v4260
        %v4311 = vunpack.c.l.b16 %v4261
        %v4312 = vunpack.c.l.b16 %v4262
        %v4313 = vunpack.c.l.b16 %v4263
        %v4314 = vunpack.c.l.b16 %v4264
        %v4315 = vunpack.c.l.b16 %v4265
        %v4316 = vunpack.c.l.b16 %v4266
        %v4317 = vunpack.c.l.b16 %v4267
        %v4318 = vunpack.c.l.b16 %v4268
        %v4319 = vunpack.c.l.b16 %v4269
        %v4320 = vpack.c.b16 %v4297, %v4296
        %v4321 = vpack.c.b16 %v4299, %v4298
        %v4322 = vpack.c.b16 %v4301, %v4300
        %v4323 = vpack.c.b16 %v4303, %v4302
        %v4324 = vpack.c.b16 %v4305, %v4304
        %v4325 = vpack.c.b16 %v4307, %v4306
        %v4326 = vpack.c.b16 %v4309, %v4308
        %v4327 = vpack.c.b16 %v4311, %v4310
        %v4328 = vpack.c.b16 %v4313, %v4312
        %v4329 = vpack.c.b16 %v4315, %v4314
        %v4330 = vpack.c.b16 %v4317, %v4316
        %v4331 = vpack.c.b16 %v4319, %v4318
        %v4345 = vsel %vm1070, %v4271, 0
        %4347 = vmatpush.bf16.msra.mxu0 %v4327
        %4348 = vmatpush.bf16.msra.mxu0 %v4326
        %4349 = vmatpush.bf16.msra.mxu0 %v4325
        %4350 = vmatpush.bf16.msra.mxu0 %v4324
        %4351 = vmatpush.bf16.msra.mxu0 %v4323
        %4352 = vmatpush.bf16.msra.mxu0 %v4322
        %4353 = vmatpush.bf16.msra.mxu0 %v4321
        %4354 = vmatpush.bf16.msra.mxu0 %v4320
        %4355 = vmatmul.bf16.gmra.mxu0 %v4270
        %v4356 = vpop.f32.mrf.mxu0
        %v4357 = vadd.f32 0.0, %v4356
        %v4358 = vpop.f32.mrf.mxu0
        %4359 = vdwg.mxu0
        %4360 = vmatpush.bf16.msra.mxu0 0
        %4361 = vmatpush.bf16.msra.mxu0 0
        %4362 = vmatpush.bf16.msra.mxu0 0
        %4363 = vmatpush.bf16.msra.mxu0 0
        %4364 = vmatpush.bf16.msra.mxu0 %v4331
        %4365 = vmatpush.bf16.msra.mxu0 %v4330
        %4366 = vmatpush.bf16.msra.mxu0 %v4329
        %4367 = vmatpush.bf16.msra.mxu0 %v4328
        %4368 = vmatmul.bf16.gmra.mxu0 %v4345
        %v4369 = vpop.f32.mrf.mxu0
        %v4370 = vadd.f32 %v4357, %v4369
        %v4371 = vpop.f32.mrf.mxu0
        %4372 = vdwg.mxu0
        %v4373 = vld [vmem:[%s15] sm:$0x1]
        %v4375 = vperm.slane %v4373, 0
        %v4377 = vmul.f32 %v4370, %v4375
        %v4378 = vld [vmem:[%s16] sm:$0x1]
        %v4380 = vperm.slane %v4378, 0
        %v4382 = vadd.f32 %v4377, %v4380
        %v4383 = vmax.f32 %v4382, 0.0
        %v4384 = vsel %vm1070, %v4383, 0.0
        %v4385 = vrot.slane %v4384, 4
        %v4386 = vadd.f32 %v4384, %v4385
        %v4387 = vrot.slane %v4386, 2
        %v4388 = vadd.f32 %v4386, %v4387
        %v4389 = vrot.slane %v4388, 1
        %v4390 = vadd.f32 %v4388, %v4389
        %v4391 = vrcp.pop 8.0
        %v4392 = vmul.f32 8.0, %v4391
        %v4393 = vsub.f32 1.0, %v4392
        %v4394 = vmul.f32 %v4391, %v4393
        %v4395 = vadd.f32 %v4391, %v4394
        %vm4396 = vweird.f32 %v4391
        %v4397 = vsel %vm4396, %v4391, %v4395
        %v4398 = vmul.f32 %v4390, %v4397
        %v4399 = vld [vmem:[%s17] sm:$0xf]
        %v4400 = vld [vmem:[%s17 + $0x4] sm:$0xf]
        %v4401 = vld [vmem:[%s17 + $0x8] sm:$0xf]
        %v4402 = vld [vmem:[%s17 + $0xc] sm:$0xf]
        %v4403 = vld [vmem:[%s17 + $0x10] sm:$0xf]
        %v4404 = vld [vmem:[%s17 + $0x14] sm:$0xf]
        %v4405 = vld [vmem:[%s17 + $0x18] sm:$0xf]
        %v4406 = vld [vmem:[%s17 + $0x1c] sm:$0xf]
        %v4407 = vpack.c.bf16 %v4398, %v4398
        %v4408 = vld [vmem:[%s18] sm:$0x1]
        %v4417 = vunpack.c.l.b16 %v4399
        %v4418 = vunpack.c.l.b16 %v4400
        %v4419 = vunpack.c.l.b16 %v4401
        %v4420 = vunpack.c.l.b16 %v4402
        %v4421 = vunpack.c.l.b16 %v4403
        %v4422 = vunpack.c.l.b16 %v4404
        %v4423 = vunpack.c.l.b16 %v4405
        %v4424 = vunpack.c.l.b16 %v4406
        %v4425 = vpack.c.b16 %v4418, %v4417
        %v4426 = vpack.c.b16 %v4420, %v4419
        %v4427 = vpack.c.b16 %v4422, %v4421
        %v4428 = vpack.c.b16 %v4424, %v4423
        %v4434 = vsel %vm1070, %v4407, 0
        %4436 = vmatpush.bf16.msra.mxu0 0
        %4437 = vmatpush.bf16.msra.mxu0 0
        %4438 = vmatpush.bf16.msra.mxu0 0
        %4439 = vmatpush.bf16.msra.mxu0 0
        %4440 = vmatpush.bf16.msra.mxu0 %v4428
        %4441 = vmatpush.bf16.msra.mxu0 %v4427
        %4442 = vmatpush.bf16.msra.mxu0 %v4426
        %4443 = vmatpush.bf16.msra.mxu0 %v4425
        %4444 = vmatmul.bf16.gmra.mxu0 %v4434
        %v4445 = vpop.f32.mrf.mxu0
        %v4446 = vadd.f32 %v4408, %v4445
        %v4447 = vpop.f32.mrf.mxu0
        %4448 = vdwg.mxu0
        %vm4449 = vcmask 49152
        %4450 = vst.msk [vmem:[%s629] sm:$0x1] %vm4449, %v4446
        %s4451 = sand.u32 %s447, 1
        %s4452 = scalar_lea.sflag [#allocation4], %s4451
        %s4453 = sand.u32 %s447, 1
        %s4454 = scalar_lea.vmem [#allocation7], %s4453
        // Predicated region
        $region105: #{tpu_custom_call.1} parent=95 // pred_check
          %p4455 = pneg %p457
        $region106: #{tpu_custom_call.1} parent=95 // pred_check_branch
          %4457 = sbr.rel (%p4455) target = $region108
        $region107: #{tpu_custom_call.1} parent=95 // pred_region
          %4459 = vsyncadd %s4452, 0
          %s4460 = scalar_lea.hbm %s19, %s35
          %s4462 = sshll.u32 %s4454, 4
          %s4463 = int_to_ptr.vmem [resolvable:$true] %s4462
          %s4464 = sshll.u32 %s4460, 4
          %s4465 = int_to_ptr.hbm [resolvable:$true] %s4464
          %4467 = dma.vmem_to_hbm [thread:$0]  %s4463, 16, %s4465, %s4452
        $region108: #{tpu_custom_call.1} parent=95 // pred_fallthru
          _
      $region96: #{tpu_custom_call.1} parent=5 // pred_fallthru
        _
      %p4468 = scmp.le.s32.totalorder 2, %s30
      // Predicated region
      $region109: #{tpu_custom_call.1} parent=5 // pred_check
        %p4469 = pneg %p4468
      $region110: #{tpu_custom_call.1} parent=5 // pred_check_branch
        %4471 = sbr.rel (%p4469) target = $region112
      $region111: #{tpu_custom_call.1} parent=5 // pred_region
        %s4472 = ssub.s32 %s30, 2
        // Predicated region
        $region113: #{tpu_custom_call.1} parent=111 // pred_check
          %p4473 = pneg %p463
        $region114: #{tpu_custom_call.1} parent=111 // pred_check_branch
          %4475 = sbr.rel (%p4473) target = $region116
        $region115: #{tpu_custom_call.1} parent=111 // pred_region
          %s4476 = sand.u32 %s448, 1
          %s4477 = scalar_lea.sflag [#allocation4], %s4476
          %s4478 = sand.u32 %s448, 1
          %s4479 = scalar_lea.vmem [#allocation7], %s4478
          %4481 = dma.done %s4477, 16
        $region116: #{tpu_custom_call.1} parent=111 // pred_fallthru
          _
      $region112: #{tpu_custom_call.1} parent=5 // pred_fallthru
        _
    $region6: #{tpu_custom_call.1} parent=1 // loop_footer
      %s34 = sadd.s32 1, %s30
    $region7: #{tpu_custom_call.1} parent=1 // loop_footer_branch
      %29 = sbr.rel target = $region3
    $region8: #{tpu_custom_call.1} parent=1 // loop_exit
      _
    %4482 = vsyncpa [#allocation3], 1
    %s4483 = scalar_lea.sflag [#allocation3], 1
    %4484 = vsyncpa %s4483, 1
    %4485 = vsyncpa [#allocation6], 1
    %4486 = vsyncpa [#allocation4], 1
    %s4487 = scalar_lea.sflag [#allocation4], 1
    %4488 = vsyncpa %s4487, 1

</llo_original>
